<compile_context>
chip_gen: v7x
topology: tpu7x:2x2x1
jax: 0.10.0
libtpu: 0.0.40
codegen_flags: <defaults>
</compile_context>

<pallas_src>
import functools

import jax
import jax.numpy as jnp
from jax.experimental import pallas as pl
from jax.experimental.pallas import tpu as pltpu


# ----------------------------------------------------------------------------
# Fused kernel: BN images per grid step, all tensors lane-dense (rows, W*C)
# ----------------------------------------------------------------------------
def _inverted_residual_kernel(x_ref, w1_ref, b1_ref, tap_ref, b2_ref,
                              fc1w_ref, fc1b_ref, fc2w_ref, fc2b_ref,
                              pbcast_ref, w3_ref, b3_ref, o_ref,
                              *, ks, pd, H, hidden, use_shortcut, re, se):
    f32 = jnp.float32
    bf16 = jnp.bfloat16
    BN, _, wcin = x_ref.shape
    wc = w1_ref.shape[1]            # W * hidden
    wcout = w3_ref.shape[1]         # W * cout
    R = BN * H

    def act(v):                     # re==0 -> ReLU, else Hardsigmoid
        if re == 0:
            return jnp.maximum(v, 0.0)
        return jnp.clip(v * (1.0 / 6.0) + 0.5, 0.0, 1.0)

    x = x_ref[...].reshape(R, wcin)                             # (R, W*Cin) f32

    # 1) 1x1 expand conv (BN scale folded into w1) + bias + activation (MXU)
    y = jnp.dot(x.astype(bf16), w1_ref[...], preferred_element_type=f32)
    y = act(y + b1_ref[...])                                    # (R, W*hidden)

    # 2) depthwise ks x ks conv, stride 1: rolls + masks, VPU/XLU only
    row = jax.lax.broadcasted_iota(jnp.int32, (R, 1), 0) % H
    taps = tap_ref[...]                                         # (ks*ks, W*hid)
    acc = None
    for ky in range(ks):
        dy = ky - pd
        yr = y if dy == 0 else pltpu.roll(y, shift=(-dy) % R, axis=0)
        if dy != 0:                   # per-image top/bottom zero padding
            valid = jnp.logical_and(row + dy >= 0, row + dy < H)
            yr = jnp.where(valid, yr, 0.0)
        for kx in range(ks):
            dx = kx - pd
            yc = yr if dx == 0 else pltpu.roll(
                yr, shift=(-dx * hidden) % wc, axis=1)
            i = ky * ks + kx          # left/right padding is folded into taps
            term = yc * taps[i:i + 1, :]
            acc = term if acc is None else acc + term
    dw = act(acc + b2_ref[...])                                 # (R, W*hidden)

    # 3) SqueezeExcitation (per image); the W-average is folded into fc1w
    if se:
        dw3 = dw.reshape(BN, H, wc)
        m = jnp.mean(dw3, axis=1)                               # (BN, W*hidden)
        s = jnp.dot(m, fc1w_ref[...], preferred_element_type=f32) + fc1b_ref[...]
        s = jnp.maximum(s, 0.0)
        s = jnp.dot(s, fc2w_ref[...], preferred_element_type=f32) + fc2b_ref[...]
        s = jnp.clip(s * (1.0 / 6.0) + 0.5, 0.0, 1.0)           # hardsigmoid
        s_ld = jnp.dot(s, pbcast_ref[...], preferred_element_type=f32)
        dw = (dw3 * s_ld[:, None, :]).reshape(R, wc)

    # 4) 1x1 project conv (BN scale folded into w3) + bias (+ residual)
    z = jnp.dot(dw.astype(bf16), w3_ref[...], preferred_element_type=f32)
    z = z + b3_ref[...]
    if use_shortcut:
        z = z + x                                               # Cin == Cout
    o_ref[...] = z.reshape(BN, H, wcout).astype(o_ref.dtype)


# ----------------------------------------------------------------------------
# Wrapper: NHWC (lane-dense) in / NHWC out; folds BN, builds constants
# ----------------------------------------------------------------------------
def inverted_residual1_pallas(x, p, *, ks=3, pd=1, stride=1, re=0, se=1,
                              use_shortcut=True, block_n=None,
                              data_format="NHWC"):
    assert stride == 1, "only stride=1 implemented (demo config)"
    if data_format == "NCHW":
        x = jnp.transpose(x, (0, 2, 3, 1))
    x = x.astype(jnp.float32)
    N, H, W, Cin = x.shape
    hidden = p["w1"].shape[1]
    cout = p["w3"].shape[1]
    csq = p["fc1w"].shape[1]
    wcin, wc, wcout = W * Cin, W * hidden, W * cout

    # Lane-dense layout requirement (full-vreg, unmasked stores).
    assert wcin % 128 == 0 and wc % 128 == 0 and wcout % 128 == 0, \
        "W*C must be a multiple of 128 for the lane-dense layout"
    assert H % 8 == 0, "H must be a multiple of 8 for free (BN,H,*) merges"

    if block_n is None:
        block_n = max(1, N // 2) if N > 1 else 1   # >=2 steps for v7x megacore
        while N % block_n != 0:
            block_n -= 1
    assert N % block_n == 0
    grid_n = N // block_n

    # ---- fold eval-mode BN scale into conv weights ----
    w1f = p["w1"] * p["s1"]                                 # (Cin, hidden)
    w3f = p["w3"] * p["s3"]                                 # (hidden, cout)
    wdf = p["wd"] * p["s2"].reshape(1, 1, hidden)           # (ks, ks, hidden)

    # ---- constants (built once per forward, tiny) ----
    eyeW = jnp.eye(W, dtype=jnp.float32)
    w1_blk = jnp.kron(eyeW, w1f).astype(jnp.bfloat16)       # (W*Cin, W*hidden)
    w3_blk = jnp.kron(eyeW, w3f).astype(jnp.bfloat16)       # (W*hidden, W*cout)
    b1_ld = jnp.tile(p["b1"], (1, W))                       # (1, W*hidden)
    b2_ld = jnp.tile(p["b2"], (1, W))                       # (1, W*hidden)
    b3_ld = jnp.tile(p["b3"], (1, W))                       # (1, W*cout)

    # depthwise per-tap weights tiled over W, with the left/right border
    # (zero padding) mask folded in
    wgrp = jnp.arange(wc) // hidden                         # lane -> w index
    taps = []
    for ky in range(ks):
        for kx in range(ks):
            dx = kx - pd
            colmask = ((wgrp + dx >= 0) & (wgrp + dx < W)).astype(jnp.float32)
            taps.append(jnp.tile(wdf[ky, kx, :], (W,)) * colmask)
    tapw = jnp.stack(taps)                                  # (ks*ks, W*hidden)

    # SE: fold the average-over-W into fc1; keep channel-broadcast operator
    eyeC = jnp.eye(hidden, dtype=jnp.float32)
    pavg = jnp.tile(eyeC, (W, 1)) / W                       # (W*hidden, hidden)
    fc1w_eff = pavg @ p["fc1w"]                             # (W*hidden, csq)
    pbcast = jnp.tile(eyeC, (1, W))                         # (hidden, W*hidden)

    x_ld = x.reshape(N, H, wcin)                            # lane-dense slab

    kern = functools.partial(_inverted_residual_kernel, ks=ks, pd=pd, H=H,
                             hidden=hidden, use_shortcut=use_shortcut,
                             re=re, se=se)

    def const2d(shape):
        return pl.BlockSpec(shape, lambda n: (0, 0))

    out = pl.pallas_call(
        kern,
        out_shape=jax.ShapeDtypeStruct((N, H, wcout), jnp.float32),
        grid=(grid_n,),
        in_specs=[
            pl.BlockSpec((block_n, H, wcin), lambda n: (n, 0, 0)),  # x
            const2d((wcin, wc)),                                    # w1_blk
            const2d((1, wc)),                                       # b1
            const2d((ks * ks, wc)),                                 # tapw
            const2d((1, wc)),                                       # b2
            const2d((wc, csq)),                                     # fc1w_eff
            const2d((1, csq)),                                      # fc1b
            const2d((csq, hidden)),                                 # fc2w
            const2d((1, hidden)),                                   # fc2b
            const2d((hidden, wc)),                                  # pbcast
            const2d((wc, wcout)),                                   # w3_blk
            const2d((1, wcout)),                                    # b3
        ],
        out_specs=pl.BlockSpec((block_n, H, wcout), lambda n: (n, 0, 0)),
        compiler_params=pltpu.CompilerParams(
            dimension_semantics=("parallel",)),
    )(x_ld, w1_blk, b1_ld, tapw, b2_ld,
      fc1w_eff, p["fc1b"], p["fc2w"], p["fc2b"],
      pbcast, w3_blk, b3_ld)

    out = out.reshape(N, H, W, cout)
    if data_format == "NCHW":
        out = jnp.transpose(out, (0, 3, 1, 2))
    return out


# ----------------------------------------------------------------------------
# Parameter construction (deterministic, synthetic) + BN folding
# ----------------------------------------------------------------------------
def _make_divisible(ch, divisor=8, min_ch=None):
    if min_ch is None:
        min_ch = divisor
    new_ch = max(min_ch, int(ch + divisor / 2) // divisor * divisor)
    if new_ch < 0.9 * ch:
        new_ch += divisor
    return new_ch


def fold_bn(gamma, beta, rmean, rvar, eps=1e-5):
    scale = gamma / jnp.sqrt(rvar + eps)
    bias = beta - rmean * scale
    return scale[None, :], bias[None, :]


def init_params(key, cin, cout, hidden):
    csq = _make_divisible(hidden // 4, 8)
    ks_ = 3
    keys = jax.random.split(key, 16)
    p = {}
    p["w1"] = jax.random.normal(keys[0], (cin, hidden), jnp.float32) * 0.1
    p["wd"] = jax.random.normal(keys[1], (ks_, ks_, hidden), jnp.float32) * 0.1
    p["w3"] = jax.random.normal(keys[2], (hidden, cout), jnp.float32) * 0.1
    p["fc1w"] = jax.random.normal(keys[3], (hidden, csq), jnp.float32) * 0.1
    p["fc1b"] = jax.random.normal(keys[4], (1, csq), jnp.float32) * 0.1
    p["fc2w"] = jax.random.normal(keys[5], (csq, hidden), jnp.float32) * 0.1
    p["fc2b"] = jax.random.normal(keys[6], (1, hidden), jnp.float32) * 0.1

    def bn(k, c):
        k1, k2, k3, k4 = jax.random.split(k, 4)
        gamma = 1.0 + 0.1 * jax.random.normal(k1, (c,), jnp.float32)
        beta = 0.1 * jax.random.normal(k2, (c,), jnp.float32)
        rmean = 0.1 * jax.random.normal(k3, (c,), jnp.float32)
        rvar = jnp.abs(jax.random.normal(k4, (c,), jnp.float32)) + 0.5
        return fold_bn(gamma, beta, rmean, rvar)

    p["s1"], p["b1"] = bn(keys[7], hidden)
    p["s2"], p["b2"] = bn(keys[8], hidden)
    p["s3"], p["b3"] = bn(keys[9], cout)
    return p


# ----------------------------------------------------------------------------
# Pure-JAX reference (mirrors the PyTorch module, eval-mode BN, NHWC)
# ----------------------------------------------------------------------------
def inverted_residual1_ref(x, p, *, ks=3, pd=1, re=0, se=1, use_shortcut=True):
    x = x.astype(jnp.float32)
    N, H, W, Cin = x.shape

    def act(v):
        if re == 0:
            return jnp.maximum(v, 0.0)
        return jnp.clip(v / 6.0 + 0.5, 0.0, 1.0)

    y = jnp.einsum("nhwc,cd->nhwd", x, p["w1"])
    y = act(y * p["s1"] + p["b1"])
    yp = jnp.pad(y, ((0, 0), (pd, pd), (pd, pd), (0, 0)))
    acc = jnp.zeros_like(y)
    for ky in range(ks):
        for kx in range(ks):
            acc = acc + yp[:, ky:ky + H, kx:kx + W, :] * p["wd"][ky, kx, :]
    y = act(acc * p["s2"] + p["b2"])
    if se:
        m = jnp.mean(y, axis=(1, 2))                            # (N, hidden)
        s = jnp.maximum(m @ p["fc1w"] + p["fc1b"], 0.0)
        s = s @ p["fc2w"] + p["fc2b"]
        s = jnp.clip(s / 6.0 + 0.5, 0.0, 1.0)
        y = y * s[:, None, None, :]
    z = jnp.einsum("nhwc,cd->nhwd", y, p["w3"]) * p["s3"] + p["b3"]
    return z + (x if use_shortcut else 0.0)


if __name__ == "__main__":
    # Module config: InvertedResidual1(in=16, out=16, stride=1, expand=32,
    #                                  pd=1, ks=3, re=0, se=1) -> shortcut used.
    N, H, W, Cin = 8, 16, 16, 16
    Cout, HIDDEN = 16, 32

    key = jax.random.PRNGKey(0)
    kx_, kp = jax.random.split(key)
    x = jax.random.normal(kx_, (N, H, W, Cin), jnp.float32)     # NHWC
    params = init_params(kp, Cin, Cout, HIDDEN)

    out = inverted_residual1_pallas(x, params, ks=3, pd=1, re=0, se=1,
                                    use_shortcut=True)
    out = jax.block_until_ready(out)

    ref = inverted_residual1_ref(x, params, ks=3, pd=1, re=0, se=1,
                                 use_shortcut=True)
    assert out.shape == (N, H, W, Cout)
    max_err = float(jnp.max(jnp.abs(out - ref)))
    # bf16 MXU operands => looser tolerance than a pure-f32 comparison.
    assert jnp.allclose(out, ref, atol=2e-2, rtol=2e-2), max_err

    print("KERNEL_OK")
</pallas_src>

<mosaic_0001>
module attributes {stable_mosaic.version = 11 : i64} {
  func.func @_inverted_residual_kernel(%arg0: i32, %arg1: memref<4x16x256xf32, #tpu.memory_space<vmem>>, %arg2: memref<256x512xbf16, #tpu.memory_space<vmem>>, %arg3: memref<1x512xf32, #tpu.memory_space<vmem>>, %arg4: memref<9x512xf32, #tpu.memory_space<vmem>>, %arg5: memref<1x512xf32, #tpu.memory_space<vmem>>, %arg6: memref<512x8xf32, #tpu.memory_space<vmem>>, %arg7: memref<1x8xf32, #tpu.memory_space<vmem>>, %arg8: memref<8x32xf32, #tpu.memory_space<vmem>>, %arg9: memref<1x32xf32, #tpu.memory_space<vmem>>, %arg10: memref<32x512xf32, #tpu.memory_space<vmem>>, %arg11: memref<512x256xbf16, #tpu.memory_space<vmem>>, %arg12: memref<1x256xf32, #tpu.memory_space<vmem>>, %arg13: memref<4x16x256xf32, #tpu.memory_space<vmem>>) attributes {dimension_semantics = [#tpu.dimension_semantics<parallel>], iteration_bounds = array<i64: 2>, scalar_prefetch = 0 : i64, scratch_operands = 0 : i64, tpu.core_type = #tpu.core_type<tc>, window_params = [{transform_indices = @transform_0, window_bounds = array<i64: 4, 16, 256>}, {pipeline_mode = #tpu.pipeline_mode<synchronous>, transform_indices = @transform_1, window_bounds = array<i64: 256, 512>}, {pipeline_mode = #tpu.pipeline_mode<synchronous>, transform_indices = @transform_2, window_bounds = array<i64: 1, 512>}, {pipeline_mode = #tpu.pipeline_mode<synchronous>, transform_indices = @transform_3, window_bounds = array<i64: 9, 512>}, {pipeline_mode = #tpu.pipeline_mode<synchronous>, transform_indices = @transform_4, window_bounds = array<i64: 1, 512>}, {pipeline_mode = #tpu.pipeline_mode<synchronous>, transform_indices = @transform_5, window_bounds = array<i64: 512, 8>}, {pipeline_mode = #tpu.pipeline_mode<synchronous>, transform_indices = @transform_6, window_bounds = array<i64: 1, 8>}, {pipeline_mode = #tpu.pipeline_mode<synchronous>, transform_indices = @transform_7, window_bounds = array<i64: 8, 32>}, {pipeline_mode = #tpu.pipeline_mode<synchronous>, transform_indices = @transform_8, window_bounds = array<i64: 1, 32>}, {pipeline_mode = #tpu.pipeline_mode<synchronous>, transform_indices = @transform_9, window_bounds = array<i64: 32, 512>}, {pipeline_mode = #tpu.pipeline_mode<synchronous>, transform_indices = @transform_10, window_bounds = array<i64: 512, 256>}, {pipeline_mode = #tpu.pipeline_mode<synchronous>, transform_indices = @transform_11, window_bounds = array<i64: 1, 256>}, {transform_indices = @transform_12, window_bounds = array<i64: 4, 16, 256>}]} {
    %c0 = arith.constant 0 : index
    %c0_0 = arith.constant 0 : index
    %c0_1 = arith.constant 0 : index
    %0 = vector.load %arg1[%c0, %c0_0, %c0_1] : memref<4x16x256xf32, #tpu.memory_space<vmem>>, vector<4x16x256xf32>
    %1 = vector.shape_cast %0 : vector<4x16x256xf32> to vector<64x256xf32>
    %2 = arith.truncf %1 : vector<64x256xf32> to vector<64x256xbf16>
    %c0_2 = arith.constant 0 : index
    %c0_3 = arith.constant 0 : index
    %3 = vector.load %arg2[%c0_2, %c0_3] : memref<256x512xbf16, #tpu.memory_space<vmem>>, vector<256x512xbf16>
    %cst = arith.constant dense<0.000000e+00> : vector<64x512xf32>
    %4 = tpu.matmul %2, %3, %cst {dimension_numbers = #tpu.dot_dimension_numbers<[1], [0], [0], [1], [0, 0, 1, 1], [], []>} : vector<64x256xbf16>, vector<256x512xbf16>, vector<64x512xf32> -> vector<64x512xf32>
    %c0_4 = arith.constant 0 : index
    %c0_5 = arith.constant 0 : index
    %5 = vector.load %arg3[%c0_4, %c0_5] : memref<1x512xf32, #tpu.memory_space<vmem>>, vector<1x512xf32>
    %6 = vector.broadcast %5 : vector<1x512xf32> to vector<64x512xf32>
    %7 = arith.addf %4, %6 : vector<64x512xf32>
    %cst_6 = arith.constant 0.000000e+00 : f32
    %8 = vector.broadcast %cst_6 : f32 to vector<64x512xf32>
    %9 = arith.maximumf %7, %8 : vector<64x512xf32>
    %10 = tpu.iota {dimensions = array<i32: 0>} : vector<64x1xi32>
    %c16_i32 = arith.constant 16 : i32
    %c0_i32 = arith.constant 0 : i32
    %11 = arith.cmpi eq, %c16_i32, %c0_i32 : i32
    %c1_i32 = arith.constant 1 : i32
    %12 = arith.select %11, %c1_i32, %c16_i32 : i32
    %13 = vector.broadcast %12 : i32 to vector<64x1xi32>
    %14 = arith.remsi %10, %13 : vector<64x1xi32>
    %c0_i32_7 = arith.constant 0 : i32
    %15 = vector.broadcast %c0_i32_7 : i32 to vector<64x1xi32>
    %16 = arith.cmpi ne, %14, %15 : vector<64x1xi32>
    %c0_i32_8 = arith.constant 0 : i32
    %17 = vector.broadcast %c0_i32_8 : i32 to vector<64x1xi32>
    %18 = arith.cmpi slt, %14, %17 : vector<64x1xi32>
    %c0_i32_9 = arith.constant 0 : i32
    %19 = arith.cmpi slt, %12, %c0_i32_9 : i32
    %20 = vector.broadcast %19 : i1 to vector<64x1xi1>
    %21 = vector.broadcast %20 : vector<64x1xi1> to vector<64x1xi1>
    %22 = arith.xori %18, %21 : vector<64x1xi1>
    %23 = arith.andi %22, %16 : vector<64x1xi1>
    %24 = vector.broadcast %12 : i32 to vector<64x1xi32>
    %25 = arith.addi %14, %24 : vector<64x1xi32>
    %26 = arith.select %23, %25, %14 : vector<64x1xi1>, vector<64x1xi32>
    %c0_10 = arith.constant 0 : index
    %c0_11 = arith.constant 0 : index
    %27 = vector.load %arg4[%c0_10, %c0_11] : memref<9x512xf32, #tpu.memory_space<vmem>>, vector<9x512xf32>
    %c1_i32_12 = arith.constant 1 : i32
    %28 = tpu.dynamic_rotate %9 by %c1_i32_12 dim 0 : vector<64x512xf32>, i32 -> vector<64x512xf32>
    %c-1_i32 = arith.constant -1 : i32
    %29 = vector.broadcast %c-1_i32 : i32 to vector<64x1xi32>
    %30 = arith.addi %26, %29 : vector<64x1xi32>
    %c0_i32_13 = arith.constant 0 : i32
    %31 = vector.broadcast %c0_i32_13 : i32 to vector<64x1xi32>
    %32 = arith.cmpi sge, %30, %31 : vector<64x1xi32>
    %c-1_i32_14 = arith.constant -1 : i32
    %33 = vector.broadcast %c-1_i32_14 : i32 to vector<64x1xi32>
    %34 = arith.addi %26, %33 : vector<64x1xi32>
    %c16_i32_15 = arith.constant 16 : i32
    %35 = vector.broadcast %c16_i32_15 : i32 to vector<64x1xi32>
    %36 = arith.cmpi slt, %34, %35 : vector<64x1xi32>
    %37 = arith.andi %32, %36 : vector<64x1xi1>
    %cst_16 = arith.constant 0.000000e+00 : f32
    %38 = vector.shape_cast %37 : vector<64x1xi1> to vector<64x1xi1>
    %39 = vector.broadcast %38 : vector<64x1xi1> to vector<64x512xi1>
    %40 = vector.broadcast %cst_16 : f32 to vector<64x512xf32>
    %41 = arith.select %39, %28, %40 : vector<64x512xi1>, vector<64x512xf32>
    %c32_i32 = arith.constant 32 : i32
    %42 = tpu.dynamic_rotate %41 by %c32_i32 dim 1 : vector<64x512xf32>, i32 -> vector<64x512xf32>
    %43 = vector.extract_strided_slice %27 {offsets = [0, 0], sizes = [1, 512], strides = [1, 1]} : vector<9x512xf32> to vector<1x512xf32>
    %44 = vector.broadcast %43 : vector<1x512xf32> to vector<64x512xf32>
    %45 = arith.mulf %42, %44 : vector<64x512xf32>
    %46 = vector.extract_strided_slice %27 {offsets = [1, 0], sizes = [1, 512], strides = [1, 1]} : vector<9x512xf32> to vector<1x512xf32>
    %47 = vector.broadcast %46 : vector<1x512xf32> to vector<64x512xf32>
    %48 = arith.mulf %41, %47 : vector<64x512xf32>
    %49 = arith.addf %45, %48 : vector<64x512xf32>
    %c480_i32 = arith.constant 480 : i32
    %50 = tpu.dynamic_rotate %41 by %c480_i32 dim 1 : vector<64x512xf32>, i32 -> vector<64x512xf32>
    %51 = vector.extract_strided_slice %27 {offsets = [2, 0], sizes = [1, 512], strides = [1, 1]} : vector<9x512xf32> to vector<1x512xf32>
    %52 = vector.broadcast %51 : vector<1x512xf32> to vector<64x512xf32>
    %53 = arith.mulf %50, %52 : vector<64x512xf32>
    %54 = arith.addf %49, %53 : vector<64x512xf32>
    %c32_i32_17 = arith.constant 32 : i32
    %55 = tpu.dynamic_rotate %9 by %c32_i32_17 dim 1 : vector<64x512xf32>, i32 -> vector<64x512xf32>
    %56 = vector.extract_strided_slice %27 {offsets = [3, 0], sizes = [1, 512], strides = [1, 1]} : vector<9x512xf32> to vector<1x512xf32>
    %57 = vector.broadcast %56 : vector<1x512xf32> to vector<64x512xf32>
    %58 = arith.mulf %55, %57 : vector<64x512xf32>
    %59 = arith.addf %54, %58 : vector<64x512xf32>
    %60 = vector.extract_strided_slice %27 {offsets = [4, 0], sizes = [1, 512], strides = [1, 1]} : vector<9x512xf32> to vector<1x512xf32>
    %61 = vector.broadcast %60 : vector<1x512xf32> to vector<64x512xf32>
    %62 = arith.mulf %9, %61 : vector<64x512xf32>
    %63 = arith.addf %59, %62 : vector<64x512xf32>
    %c480_i32_18 = arith.constant 480 : i32
    %64 = tpu.dynamic_rotate %9 by %c480_i32_18 dim 1 : vector<64x512xf32>, i32 -> vector<64x512xf32>
    %65 = vector.extract_strided_slice %27 {offsets = [5, 0], sizes = [1, 512], strides = [1, 1]} : vector<9x512xf32> to vector<1x512xf32>
    %66 = vector.broadcast %65 : vector<1x512xf32> to vector<64x512xf32>
    %67 = arith.mulf %64, %66 : vector<64x512xf32>
    %68 = arith.addf %63, %67 : vector<64x512xf32>
    %c63_i32 = arith.constant 63 : i32
    %69 = tpu.dynamic_rotate %9 by %c63_i32 dim 0 : vector<64x512xf32>, i32 -> vector<64x512xf32>
    %c1_i32_19 = arith.constant 1 : i32
    %70 = vector.broadcast %c1_i32_19 : i32 to vector<64x1xi32>
    %71 = arith.addi %26, %70 : vector<64x1xi32>
    %c0_i32_20 = arith.constant 0 : i32
    %72 = vector.broadcast %c0_i32_20 : i32 to vector<64x1xi32>
    %73 = arith.cmpi sge, %71, %72 : vector<64x1xi32>
    %c1_i32_21 = arith.constant 1 : i32
    %74 = vector.broadcast %c1_i32_21 : i32 to vector<64x1xi32>
    %75 = arith.addi %26, %74 : vector<64x1xi32>
    %c16_i32_22 = arith.constant 16 : i32
    %76 = vector.broadcast %c16_i32_22 : i32 to vector<64x1xi32>
    %77 = arith.cmpi slt, %75, %76 : vector<64x1xi32>
    %78 = arith.andi %73, %77 : vector<64x1xi1>
    %cst_23 = arith.constant 0.000000e+00 : f32
    %79 = vector.shape_cast %78 : vector<64x1xi1> to vector<64x1xi1>
    %80 = vector.broadcast %79 : vector<64x1xi1> to vector<64x512xi1>
    %81 = vector.broadcast %cst_23 : f32 to vector<64x512xf32>
    %82 = arith.select %80, %69, %81 : vector<64x512xi1>, vector<64x512xf32>
    %c32_i32_24 = arith.constant 32 : i32
    %83 = tpu.dynamic_rotate %82 by %c32_i32_24 dim 1 : vector<64x512xf32>, i32 -> vector<64x512xf32>
    %84 = vector.extract_strided_slice %27 {offsets = [6, 0], sizes = [1, 512], strides = [1, 1]} : vector<9x512xf32> to vector<1x512xf32>
    %85 = vector.broadcast %84 : vector<1x512xf32> to vector<64x512xf32>
    %86 = arith.mulf %83, %85 : vector<64x512xf32>
    %87 = arith.addf %68, %86 : vector<64x512xf32>
    %88 = vector.extract_strided_slice %27 {offsets = [7, 0], sizes = [1, 512], strides = [1, 1]} : vector<9x512xf32> to vector<1x512xf32>
    %89 = vector.broadcast %88 : vector<1x512xf32> to vector<64x512xf32>
    %90 = arith.mulf %82, %89 : vector<64x512xf32>
    %91 = arith.addf %87, %90 : vector<64x512xf32>
    %c480_i32_25 = arith.constant 480 : i32
    %92 = tpu.dynamic_rotate %82 by %c480_i32_25 dim 1 : vector<64x512xf32>, i32 -> vector<64x512xf32>
    %93 = vector.extract_strided_slice %27 {offsets = [8, 0], sizes = [1, 512], strides = [1, 1]} : vector<9x512xf32> to vector<1x512xf32>
    %94 = vector.broadcast %93 : vector<1x512xf32> to vector<64x512xf32>
    %95 = arith.mulf %92, %94 : vector<64x512xf32>
    %96 = arith.addf %91, %95 : vector<64x512xf32>
    %c0_26 = arith.constant 0 : index
    %c0_27 = arith.constant 0 : index
    %97 = vector.load %arg5[%c0_26, %c0_27] : memref<1x512xf32, #tpu.memory_space<vmem>>, vector<1x512xf32>
    %98 = vector.broadcast %97 : vector<1x512xf32> to vector<64x512xf32>
    %99 = arith.addf %96, %98 : vector<64x512xf32>
    %cst_28 = arith.constant 0.000000e+00 : f32
    %100 = vector.broadcast %cst_28 : f32 to vector<64x512xf32>
    %101 = arith.maximumf %99, %100 : vector<64x512xf32>
    %102 = vector.shape_cast %101 : vector<64x512xf32> to vector<4x16x512xf32>
    %cst_29 = arith.constant dense<0.000000e+00> : vector<4x512xf32>
    %103 = vector.multi_reduction <add>, %102, %cst_29 [1] : vector<4x16x512xf32> to vector<4x512xf32>
    %cst_30 = arith.constant 1.600000e+01 : f32
    %104 = vector.broadcast %cst_30 : f32 to vector<4x512xf32>
    %105 = arith.divf %103, %104 : vector<4x512xf32>
    %c0_31 = arith.constant 0 : index
    %c0_32 = arith.constant 0 : index
    %106 = vector.load %arg6[%c0_31, %c0_32] : memref<512x8xf32, #tpu.memory_space<vmem>>, vector<512x8xf32>
    %cst_33 = arith.constant dense<0.000000e+00> : vector<4x8xf32>
    %107 = tpu.matmul %105, %106, %cst_33 {dimension_numbers = #tpu.dot_dimension_numbers<[1], [0], [0], [1], [0, 0, 1, 1], [], []>} : vector<4x512xf32>, vector<512x8xf32>, vector<4x8xf32> -> vector<4x8xf32>
    %c0_34 = arith.constant 0 : index
    %c0_35 = arith.constant 0 : index
    %108 = vector.load %arg7[%c0_34, %c0_35] : memref<1x8xf32, #tpu.memory_space<vmem>>, vector<1x8xf32>
    %109 = vector.broadcast %108 : vector<1x8xf32> to vector<4x8xf32>
    %110 = arith.addf %107, %109 : vector<4x8xf32>
    %cst_36 = arith.constant 0.000000e+00 : f32
    %111 = vector.broadcast %cst_36 : f32 to vector<4x8xf32>
    %112 = arith.maximumf %110, %111 : vector<4x8xf32>
    %c0_37 = arith.constant 0 : index
    %c0_38 = arith.constant 0 : index
    %113 = vector.load %arg8[%c0_37, %c0_38] : memref<8x32xf32, #tpu.memory_space<vmem>>, vector<8x32xf32>
    %cst_39 = arith.constant dense<0.000000e+00> : vector<4x32xf32>
    %114 = tpu.matmul %112, %113, %cst_39 {dimension_numbers = #tpu.dot_dimension_numbers<[1], [0], [0], [1], [0, 0, 1, 1], [], []>} : vector<4x8xf32>, vector<8x32xf32>, vector<4x32xf32> -> vector<4x32xf32>
    %c0_40 = arith.constant 0 : index
    %c0_41 = arith.constant 0 : index
    %115 = vector.load %arg9[%c0_40, %c0_41] : memref<1x32xf32, #tpu.memory_space<vmem>>, vector<1x32xf32>
    %116 = vector.broadcast %115 : vector<1x32xf32> to vector<4x32xf32>
    %117 = arith.addf %114, %116 : vector<4x32xf32>
    %cst_42 = arith.constant 0.166666672 : f32
    %118 = vector.broadcast %cst_42 : f32 to vector<4x32xf32>
    %119 = arith.mulf %117, %118 : vector<4x32xf32>
    %cst_43 = arith.constant 5.000000e-01 : f32
    %120 = vector.broadcast %cst_43 : f32 to vector<4x32xf32>
    %121 = arith.addf %119, %120 : vector<4x32xf32>
    %cst_44 = arith.constant 0.000000e+00 : f32
    %cst_45 = arith.constant 1.000000e+00 : f32
    %122 = vector.broadcast %cst_44 : f32 to vector<4x32xf32>
    %123 = arith.maximumf %122, %121 : vector<4x32xf32>
    %124 = vector.broadcast %cst_45 : f32 to vector<4x32xf32>
    %125 = arith.minimumf %124, %123 : vector<4x32xf32>
    %c0_46 = arith.constant 0 : index
    %c0_47 = arith.constant 0 : index
    %126 = vector.load %arg10[%c0_46, %c0_47] : memref<32x512xf32, #tpu.memory_space<vmem>>, vector<32x512xf32>
    %cst_48 = arith.constant dense<0.000000e+00> : vector<4x512xf32>
    %127 = tpu.matmul %125, %126, %cst_48 {dimension_numbers = #tpu.dot_dimension_numbers<[1], [0], [0], [1], [0, 0, 1, 1], [], []>} : vector<4x32xf32>, vector<32x512xf32>, vector<4x512xf32> -> vector<4x512xf32>
    %128 = vector.shape_cast %127 : vector<4x512xf32> to vector<4x1x512xf32>
    %129 = vector.broadcast %128 : vector<4x1x512xf32> to vector<4x16x512xf32>
    %130 = arith.mulf %102, %129 : vector<4x16x512xf32>
    %131 = vector.shape_cast %130 : vector<4x16x512xf32> to vector<64x512xf32>
    %132 = arith.truncf %131 : vector<64x512xf32> to vector<64x512xbf16>
    %c0_49 = arith.constant 0 : index
    %c0_50 = arith.constant 0 : index
    %133 = vector.load %arg11[%c0_49, %c0_50] : memref<512x256xbf16, #tpu.memory_space<vmem>>, vector<512x256xbf16>
    %cst_51 = arith.constant dense<0.000000e+00> : vector<64x256xf32>
    %134 = tpu.matmul %132, %133, %cst_51 {dimension_numbers = #tpu.dot_dimension_numbers<[1], [0], [0], [1], [0, 0, 1, 1], [], []>} : vector<64x512xbf16>, vector<512x256xbf16>, vector<64x256xf32> -> vector<64x256xf32>
    %c0_52 = arith.constant 0 : index
    %c0_53 = arith.constant 0 : index
    %135 = vector.load %arg12[%c0_52, %c0_53] : memref<1x256xf32, #tpu.memory_space<vmem>>, vector<1x256xf32>
    %136 = vector.broadcast %135 : vector<1x256xf32> to vector<64x256xf32>
    %137 = arith.addf %134, %136 : vector<64x256xf32>
    %138 = arith.addf %137, %1 : vector<64x256xf32>
    %139 = vector.shape_cast %138 : vector<64x256xf32> to vector<4x16x256xf32>
    %c0_54 = arith.constant 0 : index
    %c0_55 = arith.constant 0 : index
    %c0_56 = arith.constant 0 : index
    %140 = vector.load %arg13[%c0_54, %c0_55, %c0_56] : memref<4x16x256xf32, #tpu.memory_space<vmem>>, vector<4x16x256xf32>
    tpu.vector_store %arg13[%c0_54, %c0_55, %c0_56], %139 {strides = array<i32>} : memref<4x16x256xf32, #tpu.memory_space<vmem>>, vector<4x16x256xf32>,
    return
  }
  func.func @transform_0(%arg0: i32) -> (i32, i32, i32) {
    %c0_i32 = arith.constant 0 : i32
    %c0_i32_0 = arith.constant 0 : i32
    %c0_i32_1 = arith.constant 0 : i32
    return %arg0, %c0_i32, %c0_i32_0 : i32, i32, i32
  }
  func.func @transform_1(%arg0: i32) -> (i32, i32) {
    %c0_i32 = arith.constant 0 : i32
    %c0_i32_0 = arith.constant 0 : i32
    %c0_i32_1 = arith.constant 0 : i32
    return %c0_i32, %c0_i32_0 : i32, i32
  }
  func.func @transform_2(%arg0: i32) -> (i32, i32) {
    %c0_i32 = arith.constant 0 : i32
    %c0_i32_0 = arith.constant 0 : i32
    %c0_i32_1 = arith.constant 0 : i32
    return %c0_i32, %c0_i32_0 : i32, i32
  }
  func.func @transform_3(%arg0: i32) -> (i32, i32) {
    %c0_i32 = arith.constant 0 : i32
    %c0_i32_0 = arith.constant 0 : i32
    %c0_i32_1 = arith.constant 0 : i32
    return %c0_i32, %c0_i32_0 : i32, i32
  }
  func.func @transform_4(%arg0: i32) -> (i32, i32) {
    %c0_i32 = arith.constant 0 : i32
    %c0_i32_0 = arith.constant 0 : i32
    %c0_i32_1 = arith.constant 0 : i32
    return %c0_i32, %c0_i32_0 : i32, i32
  }
  func.func @transform_5(%arg0: i32) -> (i32, i32) {
    %c0_i32 = arith.constant 0 : i32
    %c0_i32_0 = arith.constant 0 : i32
    %c0_i32_1 = arith.constant 0 : i32
    return %c0_i32, %c0_i32_0 : i32, i32
  }
  func.func @transform_6(%arg0: i32) -> (i32, i32) {
    %c0_i32 = arith.constant 0 : i32
    %c0_i32_0 = arith.constant 0 : i32
    %c0_i32_1 = arith.constant 0 : i32
    return %c0_i32, %c0_i32_0 : i32, i32
  }
  func.func @transform_7(%arg0: i32) -> (i32, i32) {
    %c0_i32 = arith.constant 0 : i32
    %c0_i32_0 = arith.constant 0 : i32
    %c0_i32_1 = arith.constant 0 : i32
    return %c0_i32, %c0_i32_0 : i32, i32
  }
  func.func @transform_8(%arg0: i32) -> (i32, i32) {
    %c0_i32 = arith.constant 0 : i32
    %c0_i32_0 = arith.constant 0 : i32
    %c0_i32_1 = arith.constant 0 : i32
    return %c0_i32, %c0_i32_0 : i32, i32
  }
  func.func @transform_9(%arg0: i32) -> (i32, i32) {
    %c0_i32 = arith.constant 0 : i32
    %c0_i32_0 = arith.constant 0 : i32
    %c0_i32_1 = arith.constant 0 : i32
    return %c0_i32, %c0_i32_0 : i32, i32
  }
  func.func @transform_10(%arg0: i32) -> (i32, i32) {
    %c0_i32 = arith.constant 0 : i32
    %c0_i32_0 = arith.constant 0 : i32
    %c0_i32_1 = arith.constant 0 : i32
    return %c0_i32, %c0_i32_0 : i32, i32
  }
  func.func @transform_11(%arg0: i32) -> (i32, i32) {
    %c0_i32 = arith.constant 0 : i32
    %c0_i32_0 = arith.constant 0 : i32
    %c0_i32_1 = arith.constant 0 : i32
    return %c0_i32, %c0_i32_0 : i32, i32
  }
  func.func @transform_12(%arg0: i32) -> (i32, i32, i32) {
    %c0_i32 = arith.constant 0 : i32
    %c0_i32_0 = arith.constant 0 : i32
    %c0_i32_1 = arith.constant 0 : i32
    return %arg0, %c0_i32, %c0_i32_0 : i32, i32, i32
  }
}

</mosaic_0001>

<llo_original>
// kernel: tpu_custom_call.1
$region0: #{tpu_custom_call.1}
  #allocation0 [shape = 'u32[]', space=smem, size = 0x4, offset = 0x4, fixed_abs, tag = 'smem constant byte address 0x4 - core index']
  #allocation1 [shape = 'u32[144,128]{1,0:T(1,128)}', space=vmem, size = 0x12000, scoped, tag = 'internal scratch']
  %s0 = inlined_call_operand.hbm [shape: f32[8,16,256], index: 0, kind: input, shape index: {}]
  %s1 = inlined_call_operand.vmem [shape: bf16[256,512], index: 1, kind: input, shape index: {}]
  %s2 = inlined_call_operand.vmem [shape: f32[1,512], index: 2, kind: input, shape index: {}]
  %s3 = inlined_call_operand.hbm [shape: f32[9,512], index: 3, kind: input, shape index: {}]
  %s4 = inlined_call_operand.vmem [shape: f32[1,512], index: 4, kind: input, shape index: {}]
  %s5 = inlined_call_operand.vmem [shape: f32[512,8], index: 5, kind: input, shape index: {}]
  %s6 = inlined_call_operand.vmem [shape: f32[1,8], index: 6, kind: input, shape index: {}]
  %s7 = inlined_call_operand.vmem [shape: f32[8,32], index: 7, kind: input, shape index: {}]
  %s8 = inlined_call_operand.vmem [shape: f32[1,32], index: 8, kind: input, shape index: {}]
  %s9 = inlined_call_operand.hbm [shape: f32[32,512], index: 9, kind: input, shape index: {}]
  %s10 = inlined_call_operand.hbm [shape: bf16[512,256], index: 10, kind: input, shape index: {}]
  %s11 = inlined_call_operand.vmem [shape: f32[1,256], index: 11, kind: input, shape index: {}]
  %s12 = inlined_call_operand.hbm [shape: f32[8,16,256], index: 12, kind: output, shape index: {}]
  %s13 = sld [smem:[#allocation0]]
  $region97: #{tpu_custom_call.1} parent=0
    _
  %s15 = ssub.s32 1, %s13
  %s16 = scalar_select 0, %s15, %s13
  $region1: #{tpu_custom_call.1} parent=0
    #allocation2 [shape = 'u8[131072]{0}', space=vmem, size = 0x20000, scoped, tag = 'input window, operand 0']
    #allocation3 [shape = 's32[2]{0}', space=sflag, size = 0x8, scoped, tag = 'scoped memory for tpu_custom_call.1']
    #allocation4 [shape = 's32[2]{0}', space=sflag, size = 0x8, scoped, tag = 'scoped memory for tpu_custom_call.1']
    #allocation5 [shape = 'u8[32768]{0}', space=vmem, size = 0x8000, scoped, tag = 'input window, operand 3, single buffered']
    #allocation6 [shape = 's32[1]{0}', space=sflag, size = 0x4, scoped, tag = 'scoped memory for tpu_custom_call.1']
    #allocation7 [shape = 'u8[65536]{0}', space=vmem, size = 0x10000, scoped, tag = 'input window, operand 9, single buffered']
    #allocation8 [shape = 'u8[262144]{0}', space=vmem, size = 0x40000, scoped, tag = 'input window, operand 10, single buffered']
    #allocation9 [shape = 's32[1]{0}', space=sflag, size = 0x4, scoped, tag = 'scoped memory for tpu_custom_call.1']
    #allocation10 [shape = 'u8[131072]{0}', space=vmem, size = 0x20000, scoped, tag = 'output window, operand 0']
    %17 = vsyncpa [#allocation3], 0
    %s18 = scalar_lea.sflag [#allocation3], 1
    %19 = vsyncpa %s18, 0
    %20 = vsyncpa [#allocation6], 0
    %21 = vsyncpa [#allocation9], 0
    %22 = vsyncpa [#allocation4], 0
    %s23 = scalar_lea.sflag [#allocation4], 1
    %24 = vsyncpa %s23, 0
    loop: start=0, step=1, limit=4
    $region2: #{tpu_custom_call.1} parent=1 // loop_pre_header
      _
    $region3: #{tpu_custom_call.1} parent=1 // loop_header
      %s26 = sphi 0, %s30
      %p27 = scmp.ge.s32.totalorder %s26, 4
      %s36 = sphi 0, %s38
      %s39 = sphi 0, %s36
      %s40 = sphi 0, %s39
      %s56 = sphi 0, %s40
      %s60 = sphi 0, %s60
      %s62 = sphi 0, %s60
      %s63 = sphi 0, %s62
      %s77 = sphi 0, %s63
      %s81 = sphi 0, %s81
      %s83 = sphi 0, %s81
      %s84 = sphi 0, %s83
      %s98 = sphi 0, %s84
      %s102 = sphi 0, %s102
      %s104 = sphi 0, %s102
      %s105 = sphi 0, %s104
      %s119 = sphi 0, %s105
      %s123 = sphi 0, %s123
      %s125 = sphi 0, %s123
      %s126 = sphi 0, %s125
      %s140 = sphi 0, %s126
      %s144 = sphi 0, %s144
      %s146 = sphi 0, %s144
      %s147 = sphi 0, %s146
      %s161 = sphi 0, %s147
      %s165 = sphi 0, %s165
      %s167 = sphi 0, %s165
      %s168 = sphi 0, %s167
      %s182 = sphi 0, %s168
      %s186 = sphi 0, %s186
      %s188 = sphi 0, %s186
      %s189 = sphi 0, %s188
      %s203 = sphi 0, %s189
      %s207 = sphi 0, %s207
      %s209 = sphi 0, %s207
      %s210 = sphi 0, %s209
      %s224 = sphi 0, %s210
      %s228 = sphi 0, %s228
      %s230 = sphi 0, %s228
      %s231 = sphi 0, %s230
      %s245 = sphi 0, %s231
      %s249 = sphi 0, %s249
      %s251 = sphi 0, %s249
      %s252 = sphi 0, %s251
      %s266 = sphi 0, %s252
      %s270 = sphi 0, %s270
      %s272 = sphi 0, %s270
      %s273 = sphi 0, %s272
      %s287 = sphi 0, %s273
      %s293 = sphi 0, %s295
      %s296 = sphi 0, %s293
      %s297 = sphi 0, %s296
      %s313 = sphi 0, %s297
    $region4: #{tpu_custom_call.1} parent=1 // loop_header_branch
      %29 = sbr.rel (%p27) target = $region8
    $region5: #{tpu_custom_call.1} parent=1 // loop_body
      %s31 = ssub.s32 %s26, 1
      %s32 = ssub.s32 %s26, 2
      %s33 = sadd.s32 %s26, 1
      %s34 = ssub.s32 %s26, %s33
      %p35 = scmp.eq.s32.totalorder %s34, 0
      %s37 = sadd.s32 %s36, 1
      %s38 = scalar_select %p35, %s36, %s37
      %p41 = pneg %p35
      %p42 = scmp.eq.s32.totalorder %s26, 1
      %p43 = por %p41, %p42
      %p44 = scmp.ne.s32.totalorder %s36, %s39
      %p45 = scmp.eq.s32.totalorder %s26, 0
      %p46 = por %p44, %p45
      %p47 = scmp.ne.s32.totalorder %s36, %s39
      %p48 = scmp.eq.s32.totalorder %s31, 1
      %p49 = por %p47, %p48
      %p50 = scmp.ne.s32.totalorder %s39, %s40
      %p51 = scmp.eq.s32.totalorder %s31, 0
      %p52 = por %p50, %p51
      %p53 = scmp.ne.s32.totalorder %s39, %s40
      %p54 = scmp.eq.s32.totalorder %s32, 1
      %p55 = por %p53, %p54
      %p57 = scmp.ne.s32.totalorder %s40, %s56
      %p58 = scmp.eq.s32.totalorder %s32, 0
      %p59 = por %p57, %p58
      %s61 = sadd.s32 %s60, 1
      %p64 = scmp.eq.s32.totalorder %s26, 1
      %p65 = scmp.ne.s32.totalorder %s60, %s62
      %p66 = scmp.eq.s32.totalorder %s26, 0
      %p67 = por %p65, %p66
      %p68 = scmp.ne.s32.totalorder %s60, %s62
      %p69 = scmp.eq.s32.totalorder %s31, 1
      %p70 = por %p68, %p69
      %p71 = scmp.ne.s32.totalorder %s62, %s63
      %p72 = scmp.eq.s32.totalorder %s31, 0
      %p73 = por %p71, %p72
      %p74 = scmp.ne.s32.totalorder %s62, %s63
      %p75 = scmp.eq.s32.totalorder %s32, 1
      %p76 = por %p74, %p75
      %p78 = scmp.ne.s32.totalorder %s63, %s77
      %p79 = scmp.eq.s32.totalorder %s32, 0
      %p80 = por %p78, %p79
      %s82 = sadd.s32 %s81, 1
      %p85 = scmp.eq.s32.totalorder %s26, 1
      %p86 = scmp.ne.s32.totalorder %s81, %s83
      %p87 = scmp.eq.s32.totalorder %s26, 0
      %p88 = por %p86, %p87
      %p89 = scmp.ne.s32.totalorder %s81, %s83
      %p90 = scmp.eq.s32.totalorder %s31, 1
      %p91 = por %p89, %p90
      %p92 = scmp.ne.s32.totalorder %s83, %s84
      %p93 = scmp.eq.s32.totalorder %s31, 0
      %p94 = por %p92, %p93
      %p95 = scmp.ne.s32.totalorder %s83, %s84
      %p96 = scmp.eq.s32.totalorder %s32, 1
      %p97 = por %p95, %p96
      %p99 = scmp.ne.s32.totalorder %s84, %s98
      %p100 = scmp.eq.s32.totalorder %s32, 0
      %p101 = por %p99, %p100
      %s103 = sadd.s32 %s102, 1
      %p106 = scmp.eq.s32.totalorder %s26, 1
      %p107 = scmp.ne.s32.totalorder %s102, %s104
      %p108 = scmp.eq.s32.totalorder %s26, 0
      %p109 = por %p107, %p108
      %p110 = scmp.ne.s32.totalorder %s102, %s104
      %p111 = scmp.eq.s32.totalorder %s31, 1
      %p112 = por %p110, %p111
      %p113 = scmp.ne.s32.totalorder %s104, %s105
      %p114 = scmp.eq.s32.totalorder %s31, 0
      %p115 = por %p113, %p114
      %p116 = scmp.ne.s32.totalorder %s104, %s105
      %p117 = scmp.eq.s32.totalorder %s32, 1
      %p118 = por %p116, %p117
      %p120 = scmp.ne.s32.totalorder %s105, %s119
      %p121 = scmp.eq.s32.totalorder %s32, 0
      %p122 = por %p120, %p121
      %s124 = sadd.s32 %s123, 1
      %p127 = scmp.eq.s32.totalorder %s26, 1
      %p128 = scmp.ne.s32.totalorder %s123, %s125
      %p129 = scmp.eq.s32.totalorder %s26, 0
      %p130 = por %p128, %p129
      %p131 = scmp.ne.s32.totalorder %s123, %s125
      %p132 = scmp.eq.s32.totalorder %s31, 1
      %p133 = por %p131, %p132
      %p134 = scmp.ne.s32.totalorder %s125, %s126
      %p135 = scmp.eq.s32.totalorder %s31, 0
      %p136 = por %p134, %p135
      %p137 = scmp.ne.s32.totalorder %s125, %s126
      %p138 = scmp.eq.s32.totalorder %s32, 1
      %p139 = por %p137, %p138
      %p141 = scmp.ne.s32.totalorder %s126, %s140
      %p142 = scmp.eq.s32.totalorder %s32, 0
      %p143 = por %p141, %p142
      %s145 = sadd.s32 %s144, 1
      %p148 = scmp.eq.s32.totalorder %s26, 1
      %p149 = scmp.ne.s32.totalorder %s144, %s146
      %p150 = scmp.eq.s32.totalorder %s26, 0
      %p151 = por %p149, %p150
      %p152 = scmp.ne.s32.totalorder %s144, %s146
      %p153 = scmp.eq.s32.totalorder %s31, 1
      %p154 = por %p152, %p153
      %p155 = scmp.ne.s32.totalorder %s146, %s147
      %p156 = scmp.eq.s32.totalorder %s31, 0
      %p157 = por %p155, %p156
      %p158 = scmp.ne.s32.totalorder %s146, %s147
      %p159 = scmp.eq.s32.totalorder %s32, 1
      %p160 = por %p158, %p159
      %p162 = scmp.ne.s32.totalorder %s147, %s161
      %p163 = scmp.eq.s32.totalorder %s32, 0
      %p164 = por %p162, %p163
      %s166 = sadd.s32 %s165, 1
      %p169 = scmp.eq.s32.totalorder %s26, 1
      %p170 = scmp.ne.s32.totalorder %s165, %s167
      %p171 = scmp.eq.s32.totalorder %s26, 0
      %p172 = por %p170, %p171
      %p173 = scmp.ne.s32.totalorder %s165, %s167
      %p174 = scmp.eq.s32.totalorder %s31, 1
      %p175 = por %p173, %p174
      %p176 = scmp.ne.s32.totalorder %s167, %s168
      %p177 = scmp.eq.s32.totalorder %s31, 0
      %p178 = por %p176, %p177
      %p179 = scmp.ne.s32.totalorder %s167, %s168
      %p180 = scmp.eq.s32.totalorder %s32, 1
      %p181 = por %p179, %p180
      %p183 = scmp.ne.s32.totalorder %s168, %s182
      %p184 = scmp.eq.s32.totalorder %s32, 0
      %p185 = por %p183, %p184
      %s187 = sadd.s32 %s186, 1
      %p190 = scmp.eq.s32.totalorder %s26, 1
      %p191 = scmp.ne.s32.totalorder %s186, %s188
      %p192 = scmp.eq.s32.totalorder %s26, 0
      %p193 = por %p191, %p192
      %p194 = scmp.ne.s32.totalorder %s186, %s188
      %p195 = scmp.eq.s32.totalorder %s31, 1
      %p196 = por %p194, %p195
      %p197 = scmp.ne.s32.totalorder %s188, %s189
      %p198 = scmp.eq.s32.totalorder %s31, 0
      %p199 = por %p197, %p198
      %p200 = scmp.ne.s32.totalorder %s188, %s189
      %p201 = scmp.eq.s32.totalorder %s32, 1
      %p202 = por %p200, %p201
      %p204 = scmp.ne.s32.totalorder %s189, %s203
      %p205 = scmp.eq.s32.totalorder %s32, 0
      %p206 = por %p204, %p205
      %s208 = sadd.s32 %s207, 1
      %p211 = scmp.eq.s32.totalorder %s26, 1
      %p212 = scmp.ne.s32.totalorder %s207, %s209
      %p213 = scmp.eq.s32.totalorder %s26, 0
      %p214 = por %p212, %p213
      %p215 = scmp.ne.s32.totalorder %s207, %s209
      %p216 = scmp.eq.s32.totalorder %s31, 1
      %p217 = por %p215, %p216
      %p218 = scmp.ne.s32.totalorder %s209, %s210
      %p219 = scmp.eq.s32.totalorder %s31, 0
      %p220 = por %p218, %p219
      %p221 = scmp.ne.s32.totalorder %s209, %s210
      %p222 = scmp.eq.s32.totalorder %s32, 1
      %p223 = por %p221, %p222
      %p225 = scmp.ne.s32.totalorder %s210, %s224
      %p226 = scmp.eq.s32.totalorder %s32, 0
      %p227 = por %p225, %p226
      %s229 = sadd.s32 %s228, 1
      %p232 = scmp.eq.s32.totalorder %s26, 1
      %p233 = scmp.ne.s32.totalorder %s228, %s230
      %p234 = scmp.eq.s32.totalorder %s26, 0
      %p235 = por %p233, %p234
      %p236 = scmp.ne.s32.totalorder %s228, %s230
      %p237 = scmp.eq.s32.totalorder %s31, 1
      %p238 = por %p236, %p237
      %p239 = scmp.ne.s32.totalorder %s230, %s231
      %p240 = scmp.eq.s32.totalorder %s31, 0
      %p241 = por %p239, %p240
      %p242 = scmp.ne.s32.totalorder %s230, %s231
      %p243 = scmp.eq.s32.totalorder %s32, 1
      %p244 = por %p242, %p243
      %p246 = scmp.ne.s32.totalorder %s231, %s245
      %p247 = scmp.eq.s32.totalorder %s32, 0
      %p248 = por %p246, %p247
      %s250 = sadd.s32 %s249, 1
      %p253 = scmp.eq.s32.totalorder %s26, 1
      %p254 = scmp.ne.s32.totalorder %s249, %s251
      %p255 = scmp.eq.s32.totalorder %s26, 0
      %p256 = por %p254, %p255
      %p257 = scmp.ne.s32.totalorder %s249, %s251
      %p258 = scmp.eq.s32.totalorder %s31, 1
      %p259 = por %p257, %p258
      %p260 = scmp.ne.s32.totalorder %s251, %s252
      %p261 = scmp.eq.s32.totalorder %s31, 0
      %p262 = por %p260, %p261
      %p263 = scmp.ne.s32.totalorder %s251, %s252
      %p264 = scmp.eq.s32.totalorder %s32, 1
      %p265 = por %p263, %p264
      %p267 = scmp.ne.s32.totalorder %s252, %s266
      %p268 = scmp.eq.s32.totalorder %s32, 0
      %p269 = por %p267, %p268
      %s271 = sadd.s32 %s270, 1
      %p274 = scmp.eq.s32.totalorder %s26, 1
      %p275 = scmp.ne.s32.totalorder %s270, %s272
      %p276 = scmp.eq.s32.totalorder %s26, 0
      %p277 = por %p275, %p276
      %p278 = scmp.ne.s32.totalorder %s270, %s272
      %p279 = scmp.eq.s32.totalorder %s31, 1
      %p280 = por %p278, %p279
      %p281 = scmp.ne.s32.totalorder %s272, %s273
      %p282 = scmp.eq.s32.totalorder %s31, 0
      %p283 = por %p281, %p282
      %p284 = scmp.ne.s32.totalorder %s272, %s273
      %p285 = scmp.eq.s32.totalorder %s32, 1
      %p286 = por %p284, %p285
      %p288 = scmp.ne.s32.totalorder %s273, %s287
      %p289 = scmp.eq.s32.totalorder %s32, 0
      %p290 = por %p288, %p289
      %s291 = ssub.s32 %s26, %s33
      %p292 = scmp.eq.s32.totalorder %s291, 0
      %s294 = sadd.s32 %s293, 1
      %s295 = scalar_select %p292, %s293, %s294
      %p298 = pneg %p292
      %p299 = scmp.eq.s32.totalorder %s26, 1
      %p300 = por %p298, %p299
      %p301 = scmp.ne.s32.totalorder %s293, %s296
      %p302 = scmp.eq.s32.totalorder %s26, 0
      %p303 = por %p301, %p302
      %p304 = scmp.ne.s32.totalorder %s293, %s296
      %p305 = scmp.eq.s32.totalorder %s31, 1
      %p306 = por %p304, %p305
      %p307 = scmp.ne.s32.totalorder %s296, %s297
      %p308 = scmp.eq.s32.totalorder %s31, 0
      %p309 = por %p307, %p308
      %p310 = scmp.ne.s32.totalorder %s296, %s297
      %p311 = scmp.eq.s32.totalorder %s32, 1
      %p312 = por %p310, %p311
      %p314 = scmp.ne.s32.totalorder %s297, %s313
      %p315 = scmp.eq.s32.totalorder %s32, 0
      %p316 = por %p314, %p315
      %p317 = scmp.le.s32.totalorder 1, %s26
      %p318 = scmp.lt.s32.totalorder %s26, 3
      %p319 = pnand %p317, %p318
      %p320 = pneg %p319
      // Predicated region
      $region9: #{tpu_custom_call.1} parent=5 // pred_check
        _
      $region10: #{tpu_custom_call.1} parent=5 // pred_check_branch
        %322 = sbr.rel (%p319) target = $region12
      $region11: #{tpu_custom_call.1} parent=5 // pred_region
        %s323 = ssub.s32 %s26, 1
        // Predicated region
        $region13: #{tpu_custom_call.1} parent=11 // pred_check
          %p324 = pneg %p73
        $region14: #{tpu_custom_call.1} parent=11 // pred_check_branch
          %326 = sbr.rel (%p324) target = $region16
        $region15: #{tpu_custom_call.1} parent=11 // pred_region
          _
        $region16: #{tpu_custom_call.1} parent=11 // pred_fallthru
          _
        // Predicated region
        $region17: #{tpu_custom_call.1} parent=11 // pred_check
          %p327 = pneg %p94
        $region18: #{tpu_custom_call.1} parent=11 // pred_check_branch
          %329 = sbr.rel (%p327) target = $region20
        $region19: #{tpu_custom_call.1} parent=11 // pred_region
          _
        $region20: #{tpu_custom_call.1} parent=11 // pred_fallthru
          _
        // Predicated region
        $region21: #{tpu_custom_call.1} parent=11 // pred_check
          %p330 = pneg %p115
        $region22: #{tpu_custom_call.1} parent=11 // pred_check_branch
          %332 = sbr.rel (%p330) target = $region24
        $region23: #{tpu_custom_call.1} parent=11 // pred_region
          %s334 = ssub.s32 1024, 1024
          %335 = vsyncadd [#allocation6], %s334
          %s336 = sshll.u32 [#allocation5], 4
          %s337 = int_to_ptr.vmem [resolvable:$true] %s336
          %342 = dma.hbm_to_vmem [thread:$0]  %s3, 1024, %s337, [#allocation6], 512, 512, 32
        $region24: #{tpu_custom_call.1} parent=11 // pred_fallthru
          _
        // Predicated region
        $region25: #{tpu_custom_call.1} parent=11 // pred_check
          %p343 = pneg %p136
        $region26: #{tpu_custom_call.1} parent=11 // pred_check_branch
          %345 = sbr.rel (%p343) target = $region28
        $region27: #{tpu_custom_call.1} parent=11 // pred_region
          _
        $region28: #{tpu_custom_call.1} parent=11 // pred_fallthru
          _
        // Predicated region
        $region29: #{tpu_custom_call.1} parent=11 // pred_check
          %p346 = pneg %p157
        $region30: #{tpu_custom_call.1} parent=11 // pred_check_branch
          %348 = sbr.rel (%p346) target = $region32
        $region31: #{tpu_custom_call.1} parent=11 // pred_region
          _
        $region32: #{tpu_custom_call.1} parent=11 // pred_fallthru
          _
        // Predicated region
        $region33: #{tpu_custom_call.1} parent=11 // pred_check
          %p349 = pneg %p178
        $region34: #{tpu_custom_call.1} parent=11 // pred_check_branch
          %351 = sbr.rel (%p349) target = $region36
        $region35: #{tpu_custom_call.1} parent=11 // pred_region
          _
        $region36: #{tpu_custom_call.1} parent=11 // pred_fallthru
          _
        // Predicated region
        $region37: #{tpu_custom_call.1} parent=11 // pred_check
          %p352 = pneg %p199
        $region38: #{tpu_custom_call.1} parent=11 // pred_check_branch
          %354 = sbr.rel (%p352) target = $region40
        $region39: #{tpu_custom_call.1} parent=11 // pred_region
          _
        $region40: #{tpu_custom_call.1} parent=11 // pred_fallthru
          _
        // Predicated region
        $region41: #{tpu_custom_call.1} parent=11 // pred_check
          %p355 = pneg %p220
        $region42: #{tpu_custom_call.1} parent=11 // pred_check_branch
          %357 = sbr.rel (%p355) target = $region44
        $region43: #{tpu_custom_call.1} parent=11 // pred_region
          _
        $region44: #{tpu_custom_call.1} parent=11 // pred_fallthru
          _
        // Predicated region
        $region45: #{tpu_custom_call.1} parent=11 // pred_check
          %p358 = pneg %p241
        $region46: #{tpu_custom_call.1} parent=11 // pred_check_branch
          %360 = sbr.rel (%p358) target = $region48
        $region47: #{tpu_custom_call.1} parent=11 // pred_region
          %s362 = ssub.s32 2048, 2048
          %363 = vsyncadd [#allocation6], %s362
          %s364 = sshll.u32 [#allocation7], 4
          %s365 = int_to_ptr.vmem [resolvable:$true] %s364
          %370 = dma.hbm_to_vmem [thread:$0]  %s9, 2048, %s365, [#allocation6], 512, 512, 32
        $region48: #{tpu_custom_call.1} parent=11 // pred_fallthru
          _
        // Predicated region
        $region49: #{tpu_custom_call.1} parent=11 // pred_check
          %p371 = pneg %p262
        $region50: #{tpu_custom_call.1} parent=11 // pred_check_branch
          %373 = sbr.rel (%p371) target = $region52
        $region51: #{tpu_custom_call.1} parent=11 // pred_region
          %s375 = ssub.s32 8192, 8192
          %376 = vsyncadd [#allocation9], %s375
          %s377 = sshll.u32 [#allocation8], 4
          %s378 = int_to_ptr.vmem [resolvable:$true] %s377
          %383 = dma.hbm_to_vmem [thread:$0]  %s10, 8192, %s378, [#allocation9], 128, 128, 8
        $region52: #{tpu_custom_call.1} parent=11 // pred_fallthru
          _
        // Predicated region
        $region53: #{tpu_custom_call.1} parent=11 // pred_check
          %p384 = pneg %p283
        $region54: #{tpu_custom_call.1} parent=11 // pred_check_branch
          %386 = sbr.rel (%p384) target = $region56
        $region55: #{tpu_custom_call.1} parent=11 // pred_region
          _
        $region56: #{tpu_custom_call.1} parent=11 // pred_fallthru
          _
      $region12: #{tpu_custom_call.1} parent=5 // pred_fallthru
        _
      %p387 = scmp.lt.s32.totalorder %s26, 2
      // Predicated region
      $region57: #{tpu_custom_call.1} parent=5 // pred_check
        %p388 = pneg %p387
      $region58: #{tpu_custom_call.1} parent=5 // pred_check_branch
        %390 = sbr.rel (%p388) target = $region60
      $region59: #{tpu_custom_call.1} parent=5 // pred_region
        // Predicated region
        $region61: #{tpu_custom_call.1} parent=59 // pred_check
          %p391 = pneg %p46
        $region62: #{tpu_custom_call.1} parent=59 // pred_check_branch
          %393 = sbr.rel (%p391) target = $region64
        $region63: #{tpu_custom_call.1} parent=59 // pred_region
          %s394 = sand.u32 %s36, 1
          %s395 = scalar_lea.sflag [#allocation3], %s394
          %s396 = sand.u32 %s36, 1
          %s397 = smul.addr %s396, 128
          %s398 = scalar_lea.vmem [#allocation2], %s397
          %s399 = smul.u32 4, %s26
          %s401 = ssub.s32 2048, 2048
          %402 = vsyncadd %s395, %s401
          %s403 = smul.addr %s399, 4
          %s404 = smul.addr %s403, 128
          %s405 = scalar_lea.hbm %s0, %s404
          %s406 = sshll.u32 %s398, 4
          %s407 = int_to_ptr.vmem [resolvable:$true] %s406
          %412 = dma.hbm_to_vmem [thread:$0]  %s405, 2048, %s407, %s395, 256, 256, 16
        $region64: #{tpu_custom_call.1} parent=59 // pred_fallthru
          _
      $region60: #{tpu_custom_call.1} parent=5 // pred_fallthru
        _
      %p413 = scmp.le.s32.totalorder 1, %s26
      %p414 = scmp.lt.s32.totalorder %s26, 3
      %p415 = pnand %p413, %p414
      %p416 = pneg %p415
      // Predicated region
      $region65: #{tpu_custom_call.1} parent=5 // pred_check
        _
      $region66: #{tpu_custom_call.1} parent=5 // pred_check_branch
        %418 = sbr.rel (%p415) target = $region68
      $region67: #{tpu_custom_call.1} parent=5 // pred_region
        %s419 = ssub.s32 %s26, 1
        %s420 = sand.u32 %s39, 1
        %s421 = scalar_lea.sflag [#allocation3], %s420
        %s422 = sand.u32 %s39, 1
        %s423 = smul.addr %s422, 128
        %s424 = scalar_lea.vmem [#allocation2], %s423
        // Predicated region
        $region69: #{tpu_custom_call.1} parent=67 // pred_check
          %p425 = pneg %p52
        $region70: #{tpu_custom_call.1} parent=67 // pred_check_branch
          %427 = sbr.rel (%p425) target = $region72
        $region71: #{tpu_custom_call.1} parent=67 // pred_region
          %428 = dma.done %s421, 2048
        $region72: #{tpu_custom_call.1} parent=67 // pred_fallthru
          _
        // Predicated region
        $region73: #{tpu_custom_call.1} parent=67 // pred_check
          %p429 = pneg %p115
        $region74: #{tpu_custom_call.1} parent=67 // pred_check_branch
          %431 = sbr.rel (%p429) target = $region76
        $region75: #{tpu_custom_call.1} parent=67 // pred_region
          %432 = dma.done [#allocation6], 1024
        $region76: #{tpu_custom_call.1} parent=67 // pred_fallthru
          _
        // Predicated region
        $region77: #{tpu_custom_call.1} parent=67 // pred_check
          %p433 = pneg %p241
        $region78: #{tpu_custom_call.1} parent=67 // pred_check_branch
          %435 = sbr.rel (%p433) target = $region80
        $region79: #{tpu_custom_call.1} parent=67 // pred_region
          %436 = dma.done [#allocation6], 2048
        $region80: #{tpu_custom_call.1} parent=67 // pred_fallthru
          _
        // Predicated region
        $region81: #{tpu_custom_call.1} parent=67 // pred_check
          %p437 = pneg %p262
        $region82: #{tpu_custom_call.1} parent=67 // pred_check_branch
          %439 = sbr.rel (%p437) target = $region84
        $region83: #{tpu_custom_call.1} parent=67 // pred_region
          %440 = dma.done [#allocation9], 8192
        $region84: #{tpu_custom_call.1} parent=67 // pred_fallthru
          _
        %s441 = sand.u32 %s39, 1
        %s442 = scalar_lea.sflag [#allocation3], %s441
        %s443 = sand.u32 %s39, 1
        %s444 = smul.addr %s443, 128
        %s445 = scalar_lea.vmem [#allocation2], %s444
        %p446 = pneg %p52
        %p447 = pneg %p49
        %p448 = pneg %p73
        %p449 = pneg %p70
        %p450 = pneg %p94
        %p451 = pneg %p91
        %p452 = pneg %p115
        %p453 = pneg %p112
        %p454 = pneg %p136
        %p455 = pneg %p133
        %p456 = pneg %p157
        %p457 = pneg %p154
        %p458 = pneg %p178
        %p459 = pneg %p175
        %p460 = pneg %p199
        %p461 = pneg %p196
        %p462 = pneg %p220
        %p463 = pneg %p217
        %p464 = pneg %p241
        %p465 = pneg %p238
        %p466 = pneg %p262
        %p467 = pneg %p259
        %p468 = pneg %p283
        %p469 = pneg %p280
        %p470 = pneg %p309
        %p471 = pneg %p306
        %s472 = sand.u32 %s296, 1
        %s473 = scalar_lea.sflag [#allocation4], %s472
        %s474 = sand.u32 %s296, 1
        %s475 = smul.addr %s474, 128
        %s476 = scalar_lea.vmem [#allocation10], %s475
        %s477 = smul.u32 4, %s31
        %s478 = smul.u32 4, %s31
        %v479 = vld [vmem:[%s424] sm:$0xff]
        %v480 = vld [vmem:[%s424 + $0x8] sm:$0xff]
        %v481 = vld [vmem:[%s424 + $0x10] sm:$0xff]
        %v482 = vld [vmem:[%s424 + $0x18] sm:$0xff]
        %v483 = vld [vmem:[%s424 + $0x20] sm:$0xff]
        %v484 = vld [vmem:[%s424 + $0x28] sm:$0xff]
        %v485 = vld [vmem:[%s424 + $0x30] sm:$0xff]
        %v486 = vld [vmem:[%s424 + $0x38] sm:$0xff]
        %v487 = vld [vmem:[%s424 + $0x40] sm:$0xff]
        %v488 = vld [vmem:[%s424 + $0x48] sm:$0xff]
        %v489 = vld [vmem:[%s424 + $0x50] sm:$0xff]
        %v490 = vld [vmem:[%s424 + $0x58] sm:$0xff]
        %v491 = vld [vmem:[%s424 + $0x60] sm:$0xff]
        %v492 = vld [vmem:[%s424 + $0x68] sm:$0xff]
        %v493 = vld [vmem:[%s424 + $0x70] sm:$0xff]
        %v494 = vld [vmem:[%s424 + $0x78] sm:$0xff]
        %v495 = vpack.c.bf16 %v481, %v479
        %v496 = vpack.c.bf16 %v482, %v480
        %v497 = vpack.c.bf16 %v485, %v483
        %v498 = vpack.c.bf16 %v486, %v484
        %v499 = vpack.c.bf16 %v489, %v487
        %v500 = vpack.c.bf16 %v490, %v488
        %v501 = vpack.c.bf16 %v493, %v491
        %v502 = vpack.c.bf16 %v494, %v492
        %v503 = vld [vmem:[%s1] sm:$0xff]
        %v504 = vld [vmem:[%s1 + $0x8] sm:$0xff]
        %v505 = vld [vmem:[%s1 + $0x10] sm:$0xff]
        %v506 = vld [vmem:[%s1 + $0x18] sm:$0xff]
        %v507 = vld [vmem:[%s1 + $0x20] sm:$0xff]
        %v508 = vld [vmem:[%s1 + $0x28] sm:$0xff]
        %v509 = vld [vmem:[%s1 + $0x30] sm:$0xff]
        %v510 = vld [vmem:[%s1 + $0x38] sm:$0xff]
        %v511 = vld [vmem:[%s1 + $0x40] sm:$0xff]
        %v512 = vld [vmem:[%s1 + $0x48] sm:$0xff]
        %v513 = vld [vmem:[%s1 + $0x50] sm:$0xff]
        %v514 = vld [vmem:[%s1 + $0x58] sm:$0xff]
        %v515 = vld [vmem:[%s1 + $0x60] sm:$0xff]
        %v516 = vld [vmem:[%s1 + $0x68] sm:$0xff]
        %v517 = vld [vmem:[%s1 + $0x70] sm:$0xff]
        %v518 = vld [vmem:[%s1 + $0x78] sm:$0xff]
        %v519 = vld [vmem:[%s1 + $0x80] sm:$0xff]
        %v520 = vld [vmem:[%s1 + $0x88] sm:$0xff]
        %v521 = vld [vmem:[%s1 + $0x90] sm:$0xff]
        %v522 = vld [vmem:[%s1 + $0x98] sm:$0xff]
        %v523 = vld [vmem:[%s1 + $0xa0] sm:$0xff]
        %v524 = vld [vmem:[%s1 + $0xa8] sm:$0xff]
        %v525 = vld [vmem:[%s1 + $0xb0] sm:$0xff]
        %v526 = vld [vmem:[%s1 + $0xb8] sm:$0xff]
        %v527 = vld [vmem:[%s1 + $0xc0] sm:$0xff]
        %v528 = vld [vmem:[%s1 + $0xc8] sm:$0xff]
        %v529 = vld [vmem:[%s1 + $0xd0] sm:$0xff]
        %v530 = vld [vmem:[%s1 + $0xd8] sm:$0xff]
        %v531 = vld [vmem:[%s1 + $0xe0] sm:$0xff]
        %v532 = vld [vmem:[%s1 + $0xe8] sm:$0xff]
        %v533 = vld [vmem:[%s1 + $0xf0] sm:$0xff]
        %v534 = vld [vmem:[%s1 + $0xf8] sm:$0xff]
        %v535 = vld [vmem:[%s1 + $0x100] sm:$0xff]
        %v536 = vld [vmem:[%s1 + $0x108] sm:$0xff]
        %v537 = vld [vmem:[%s1 + $0x110] sm:$0xff]
        %v538 = vld [vmem:[%s1 + $0x118] sm:$0xff]
        %v539 = vld [vmem:[%s1 + $0x120] sm:$0xff]
        %v540 = vld [vmem:[%s1 + $0x128] sm:$0xff]
        %v541 = vld [vmem:[%s1 + $0x130] sm:$0xff]
        %v542 = vld [vmem:[%s1 + $0x138] sm:$0xff]
        %v543 = vld [vmem:[%s1 + $0x140] sm:$0xff]
        %v544 = vld [vmem:[%s1 + $0x148] sm:$0xff]
        %v545 = vld [vmem:[%s1 + $0x150] sm:$0xff]
        %v546 = vld [vmem:[%s1 + $0x158] sm:$0xff]
        %v547 = vld [vmem:[%s1 + $0x160] sm:$0xff]
        %v548 = vld [vmem:[%s1 + $0x168] sm:$0xff]
        %v549 = vld [vmem:[%s1 + $0x170] sm:$0xff]
        %v550 = vld [vmem:[%s1 + $0x178] sm:$0xff]
        %v551 = vld [vmem:[%s1 + $0x180] sm:$0xff]
        %v552 = vld [vmem:[%s1 + $0x188] sm:$0xff]
        %v553 = vld [vmem:[%s1 + $0x190] sm:$0xff]
        %v554 = vld [vmem:[%s1 + $0x198] sm:$0xff]
        %v555 = vld [vmem:[%s1 + $0x1a0] sm:$0xff]
        %v556 = vld [vmem:[%s1 + $0x1a8] sm:$0xff]
        %v557 = vld [vmem:[%s1 + $0x1b0] sm:$0xff]
        %v558 = vld [vmem:[%s1 + $0x1b8] sm:$0xff]
        %v559 = vld [vmem:[%s1 + $0x1c0] sm:$0xff]
        %v560 = vld [vmem:[%s1 + $0x1c8] sm:$0xff]
        %v561 = vld [vmem:[%s1 + $0x1d0] sm:$0xff]
        %v562 = vld [vmem:[%s1 + $0x1d8] sm:$0xff]
        %v563 = vld [vmem:[%s1 + $0x1e0] sm:$0xff]
        %v564 = vld [vmem:[%s1 + $0x1e8] sm:$0xff]
        %v565 = vld [vmem:[%s1 + $0x1f0] sm:$0xff]
        %v566 = vld [vmem:[%s1 + $0x1f8] sm:$0xff]
        %v567 = vld [vmem:[%s2] sm:$0xf]
        %v569 = vlaneseq
        %v570 = vshrl.u32 %v569, 7
        %v571 = vsub.s32 0, %v570
        %v572 = vrot.slane %v567, %v571
        %v573 = vlaneseq
        %v574 = vshrl.u32 %v573, 7
        %v575 = vsub.s32 1, %v574
        %v576 = vrot.slane %v567, %v575
        %v577 = vlaneseq
        %v578 = vshrl.u32 %v577, 7
        %v579 = vsub.s32 2, %v578
        %v580 = vrot.slane %v567, %v579
        %v581 = vlaneseq
        %v582 = vshrl.u32 %v581, 7
        %v583 = vsub.s32 3, %v582
        %v584 = vrot.slane %v567, %v583
        %v653 = vunpack.c.l.b16 %v503
        %v654 = vunpack.c.h.b16 %v503
        %v655 = vunpack.c.l.b16 %v504
        %v656 = vunpack.c.h.b16 %v504
        %v657 = vunpack.c.l.b16 %v505
        %v658 = vunpack.c.h.b16 %v505
        %v659 = vunpack.c.l.b16 %v506
        %v660 = vunpack.c.h.b16 %v506
        %v661 = vunpack.c.l.b16 %v507
        %v662 = vunpack.c.h.b16 %v507
        %v663 = vunpack.c.l.b16 %v508
        %v664 = vunpack.c.h.b16 %v508
        %v665 = vunpack.c.l.b16 %v509
        %v666 = vunpack.c.h.b16 %v509
        %v667 = vunpack.c.l.b16 %v510
        %v668 = vunpack.c.h.b16 %v510
        %v669 = vunpack.c.l.b16 %v511
        %v670 = vunpack.c.h.b16 %v511
        %v671 = vunpack.c.l.b16 %v512
        %v672 = vunpack.c.h.b16 %v512
        %v673 = vunpack.c.l.b16 %v513
        %v674 = vunpack.c.h.b16 %v513
        %v675 = vunpack.c.l.b16 %v514
        %v676 = vunpack.c.h.b16 %v514
        %v677 = vunpack.c.l.b16 %v515
        %v678 = vunpack.c.h.b16 %v515
        %v679 = vunpack.c.l.b16 %v516
        %v680 = vunpack.c.h.b16 %v516
        %v681 = vunpack.c.l.b16 %v517
        %v682 = vunpack.c.h.b16 %v517
        %v683 = vunpack.c.l.b16 %v518
        %v684 = vunpack.c.h.b16 %v518
        %v685 = vunpack.c.l.b16 %v519
        %v686 = vunpack.c.h.b16 %v519
        %v687 = vunpack.c.l.b16 %v520
        %v688 = vunpack.c.h.b16 %v520
        %v689 = vunpack.c.l.b16 %v521
        %v690 = vunpack.c.h.b16 %v521
        %v691 = vunpack.c.l.b16 %v522
        %v692 = vunpack.c.h.b16 %v522
        %v693 = vunpack.c.l.b16 %v523
        %v694 = vunpack.c.h.b16 %v523
        %v695 = vunpack.c.l.b16 %v524
        %v696 = vunpack.c.h.b16 %v524
        %v697 = vunpack.c.l.b16 %v525
        %v698 = vunpack.c.h.b16 %v525
        %v699 = vunpack.c.l.b16 %v526
        %v700 = vunpack.c.h.b16 %v526
        %v701 = vunpack.c.l.b16 %v527
        %v702 = vunpack.c.h.b16 %v527
        %v703 = vunpack.c.l.b16 %v528
        %v704 = vunpack.c.h.b16 %v528
        %v705 = vunpack.c.l.b16 %v529
        %v706 = vunpack.c.h.b16 %v529
        %v707 = vunpack.c.l.b16 %v530
        %v708 = vunpack.c.h.b16 %v530
        %v709 = vunpack.c.l.b16 %v531
        %v710 = vunpack.c.h.b16 %v531
        %v711 = vunpack.c.l.b16 %v532
        %v712 = vunpack.c.h.b16 %v532
        %v713 = vunpack.c.l.b16 %v533
        %v714 = vunpack.c.h.b16 %v533
        %v715 = vunpack.c.l.b16 %v534
        %v716 = vunpack.c.h.b16 %v534
        %v717 = vunpack.c.l.b16 %v535
        %v718 = vunpack.c.h.b16 %v535
        %v719 = vunpack.c.l.b16 %v536
        %v720 = vunpack.c.h.b16 %v536
        %v721 = vunpack.c.l.b16 %v537
        %v722 = vunpack.c.h.b16 %v537
        %v723 = vunpack.c.l.b16 %v538
        %v724 = vunpack.c.h.b16 %v538
        %v725 = vunpack.c.l.b16 %v539
        %v726 = vunpack.c.h.b16 %v539
        %v727 = vunpack.c.l.b16 %v540
        %v728 = vunpack.c.h.b16 %v540
        %v729 = vunpack.c.l.b16 %v541
        %v730 = vunpack.c.h.b16 %v541
        %v731 = vunpack.c.l.b16 %v542
        %v732 = vunpack.c.h.b16 %v542
        %v733 = vunpack.c.l.b16 %v543
        %v734 = vunpack.c.h.b16 %v543
        %v735 = vunpack.c.l.b16 %v544
        %v736 = vunpack.c.h.b16 %v544
        %v737 = vunpack.c.l.b16 %v545
        %v738 = vunpack.c.h.b16 %v545
        %v739 = vunpack.c.l.b16 %v546
        %v740 = vunpack.c.h.b16 %v546
        %v741 = vunpack.c.l.b16 %v547
        %v742 = vunpack.c.h.b16 %v547
        %v743 = vunpack.c.l.b16 %v548
        %v744 = vunpack.c.h.b16 %v548
        %v745 = vunpack.c.l.b16 %v549
        %v746 = vunpack.c.h.b16 %v549
        %v747 = vunpack.c.l.b16 %v550
        %v748 = vunpack.c.h.b16 %v550
        %v749 = vunpack.c.l.b16 %v551
        %v750 = vunpack.c.h.b16 %v551
        %v751 = vunpack.c.l.b16 %v552
        %v752 = vunpack.c.h.b16 %v552
        %v753 = vunpack.c.l.b16 %v553
        %v754 = vunpack.c.h.b16 %v553
        %v755 = vunpack.c.l.b16 %v554
        %v756 = vunpack.c.h.b16 %v554
        %v757 = vunpack.c.l.b16 %v555
        %v758 = vunpack.c.h.b16 %v555
        %v759 = vunpack.c.l.b16 %v556
        %v760 = vunpack.c.h.b16 %v556
        %v761 = vunpack.c.l.b16 %v557
        %v762 = vunpack.c.h.b16 %v557
        %v763 = vunpack.c.l.b16 %v558
        %v764 = vunpack.c.h.b16 %v558
        %v765 = vunpack.c.l.b16 %v559
        %v766 = vunpack.c.h.b16 %v559
        %v767 = vunpack.c.l.b16 %v560
        %v768 = vunpack.c.h.b16 %v560
        %v769 = vunpack.c.l.b16 %v561
        %v770 = vunpack.c.h.b16 %v561
        %v771 = vunpack.c.l.b16 %v562
        %v772 = vunpack.c.h.b16 %v562
        %v773 = vunpack.c.l.b16 %v563
        %v774 = vunpack.c.h.b16 %v563
        %v775 = vunpack.c.l.b16 %v564
        %v776 = vunpack.c.h.b16 %v564
        %v777 = vunpack.c.l.b16 %v565
        %v778 = vunpack.c.h.b16 %v565
        %v779 = vunpack.c.l.b16 %v566
        %v780 = vunpack.c.h.b16 %v566
        %v781 = vpack.c.b16 %v657, %v653
        %v782 = vpack.c.b16 %v658, %v654
        %v783 = vpack.c.b16 %v659, %v655
        %v784 = vpack.c.b16 %v660, %v656
        %v785 = vpack.c.b16 %v665, %v661
        %v786 = vpack.c.b16 %v666, %v662
        %v787 = vpack.c.b16 %v667, %v663
        %v788 = vpack.c.b16 %v668, %v664
        %v789 = vpack.c.b16 %v673, %v669
        %v790 = vpack.c.b16 %v674, %v670
        %v791 = vpack.c.b16 %v675, %v671
        %v792 = vpack.c.b16 %v676, %v672
        %v793 = vpack.c.b16 %v681, %v677
        %v794 = vpack.c.b16 %v682, %v678
        %v795 = vpack.c.b16 %v683, %v679
        %v796 = vpack.c.b16 %v684, %v680
        %v797 = vpack.c.b16 %v689, %v685
        %v798 = vpack.c.b16 %v690, %v686
        %v799 = vpack.c.b16 %v691, %v687
        %v800 = vpack.c.b16 %v692, %v688
        %v801 = vpack.c.b16 %v697, %v693
        %v802 = vpack.c.b16 %v698, %v694
        %v803 = vpack.c.b16 %v699, %v695
        %v804 = vpack.c.b16 %v700, %v696
        %v805 = vpack.c.b16 %v705, %v701
        %v806 = vpack.c.b16 %v706, %v702
        %v807 = vpack.c.b16 %v707, %v703
        %v808 = vpack.c.b16 %v708, %v704
        %v809 = vpack.c.b16 %v713, %v709
        %v810 = vpack.c.b16 %v714, %v710
        %v811 = vpack.c.b16 %v715, %v711
        %v812 = vpack.c.b16 %v716, %v712
        %v813 = vpack.c.b16 %v721, %v717
        %v814 = vpack.c.b16 %v722, %v718
        %v815 = vpack.c.b16 %v723, %v719
        %v816 = vpack.c.b16 %v724, %v720
        %v817 = vpack.c.b16 %v729, %v725
        %v818 = vpack.c.b16 %v730, %v726
        %v819 = vpack.c.b16 %v731, %v727
        %v820 = vpack.c.b16 %v732, %v728
        %v821 = vpack.c.b16 %v737, %v733
        %v822 = vpack.c.b16 %v738, %v734
        %v823 = vpack.c.b16 %v739, %v735
        %v824 = vpack.c.b16 %v740, %v736
        %v825 = vpack.c.b16 %v745, %v741
        %v826 = vpack.c.b16 %v746, %v742
        %v827 = vpack.c.b16 %v747, %v743
        %v828 = vpack.c.b16 %v748, %v744
        %v829 = vpack.c.b16 %v753, %v749
        %v830 = vpack.c.b16 %v754, %v750
        %v831 = vpack.c.b16 %v755, %v751
        %v832 = vpack.c.b16 %v756, %v752
        %v833 = vpack.c.b16 %v761, %v757
        %v834 = vpack.c.b16 %v762, %v758
        %v835 = vpack.c.b16 %v763, %v759
        %v836 = vpack.c.b16 %v764, %v760
        %v837 = vpack.c.b16 %v769, %v765
        %v838 = vpack.c.b16 %v770, %v766
        %v839 = vpack.c.b16 %v771, %v767
        %v840 = vpack.c.b16 %v772, %v768
        %v841 = vpack.c.b16 %v777, %v773
        %v842 = vpack.c.b16 %v778, %v774
        %v843 = vpack.c.b16 %v779, %v775
        %v844 = vpack.c.b16 %v780, %v776
        %909 = vmatprep.subr.bf16.mxu0 %v782
        %910 = vmatpush1.bf16.msra.mxu0 %v781
        %911 = vmatprep.subr.bf16.mxu0 %v786
        %912 = vmatpush1.bf16.msra.mxu0 %v785
        %913 = vmatprep.subr.bf16.mxu0 %v790
        %914 = vmatpush1.bf16.msra.mxu0 %v789
        %915 = vmatprep.subr.bf16.mxu0 %v794
        %916 = vmatpush1.bf16.msra.mxu0 %v793
        %917 = vmatprep.subr.bf16.mxu0 %v798
        %918 = vmatpush1.bf16.msra.mxu0 %v797
        %919 = vmatprep.subr.bf16.mxu0 %v802
        %920 = vmatpush1.bf16.msra.mxu0 %v801
        %921 = vmatprep.subr.bf16.mxu0 %v806
        %922 = vmatpush1.bf16.msra.mxu0 %v805
        %923 = vmatprep.subr.bf16.mxu0 %v810
        %924 = vmatpush1.bf16.msra.mxu0 %v809
        %925 = vmatprep.subr.bf16.mxu0 %v814
        %926 = vmatpush1.bf16.msra.mxu0 %v813
        %927 = vmatprep.subr.bf16.mxu0 %v818
        %928 = vmatpush1.bf16.msra.mxu0 %v817
        %929 = vmatprep.subr.bf16.mxu0 %v822
        %930 = vmatpush1.bf16.msra.mxu0 %v821
        %931 = vmatprep.subr.bf16.mxu0 %v826
        %932 = vmatpush1.bf16.msra.mxu0 %v825
        %933 = vmatprep.subr.bf16.mxu0 %v830
        %934 = vmatpush1.bf16.msra.mxu0 %v829
        %935 = vmatprep.subr.bf16.mxu0 %v834
        %936 = vmatpush1.bf16.msra.mxu0 %v833
        %937 = vmatprep.subr.bf16.mxu0 %v838
        %938 = vmatpush1.bf16.msra.mxu0 %v837
        %939 = vmatprep.subr.bf16.mxu0 %v842
        %940 = vmatpush1.bf16.msra.mxu0 %v841
        %941 = vmatprep.mubr.bf16.mxu0 %v496
        %942 = vmatmul.mubr.bf16.gmra.mrb[0].mxu0 %v495
        %v943 = vpop.f32.mrb[0].mxu0
        %v944 = vadd.f32 %v572, %v943
        %v945 = vpop.f32.mrb[0].mxu0
        %v946 = vadd.f32 %v576, %v945
        %v947 = vpop.f32.mrb[0].mxu0
        %v948 = vadd.f32 %v572, %v947
        %v949 = vpop.f32.mrb[0].mxu0
        %v950 = vadd.f32 %v576, %v949
        %951 = vmatprep.mubr.bf16.mxu0 %v498
        %952 = vmatmul.mubr.bf16.gmra.mrb[0].mxu0 %v497
        %v953 = vpop.f32.mrb[0].mxu0
        %v954 = vadd.f32 %v572, %v953
        %v955 = vpop.f32.mrb[0].mxu0
        %v956 = vadd.f32 %v576, %v955
        %v957 = vpop.f32.mrb[0].mxu0
        %v958 = vadd.f32 %v572, %v957
        %v959 = vpop.f32.mrb[0].mxu0
        %v960 = vadd.f32 %v576, %v959
        %961 = vmatprep.mubr.bf16.mxu0 %v500
        %962 = vmatmul.mubr.bf16.gmra.mrb[0].mxu0 %v499
        %v963 = vpop.f32.mrb[0].mxu0
        %v964 = vadd.f32 %v572, %v963
        %v965 = vpop.f32.mrb[0].mxu0
        %v966 = vadd.f32 %v576, %v965
        %v967 = vpop.f32.mrb[0].mxu0
        %v968 = vadd.f32 %v572, %v967
        %v969 = vpop.f32.mrb[0].mxu0
        %v970 = vadd.f32 %v576, %v969
        %971 = vmatprep.mubr.bf16.mxu0 %v502
        %972 = vmatmul.mubr.bf16.gmra.mrb[0].mxu0 %v501
        %v973 = vpop.f32.mrb[0].mxu0
        %v974 = vadd.f32 %v572, %v973
        %v975 = vpop.f32.mrb[0].mxu0
        %v976 = vadd.f32 %v576, %v975
        %v977 = vpop.f32.mrb[0].mxu0
        %v978 = vadd.f32 %v572, %v977
        %v979 = vpop.f32.mrb[0].mxu0
        %v980 = vadd.f32 %v576, %v979
        %981 = vdwg.mxu0
        %982 = vmatprep.subr.bf16.mxu0 %v784
        %983 = vmatpush1.bf16.msra.mxu0 %v783
        %984 = vmatprep.subr.bf16.mxu0 %v788
        %985 = vmatpush1.bf16.msra.mxu0 %v787
        %986 = vmatprep.subr.bf16.mxu0 %v792
        %987 = vmatpush1.bf16.msra.mxu0 %v791
        %988 = vmatprep.subr.bf16.mxu0 %v796
        %989 = vmatpush1.bf16.msra.mxu0 %v795
        %990 = vmatprep.subr.bf16.mxu0 %v800
        %991 = vmatpush1.bf16.msra.mxu0 %v799
        %992 = vmatprep.subr.bf16.mxu0 %v804
        %993 = vmatpush1.bf16.msra.mxu0 %v803
        %994 = vmatprep.subr.bf16.mxu0 %v808
        %995 = vmatpush1.bf16.msra.mxu0 %v807
        %996 = vmatprep.subr.bf16.mxu0 %v812
        %997 = vmatpush1.bf16.msra.mxu0 %v811
        %998 = vmatprep.subr.bf16.mxu0 %v816
        %999 = vmatpush1.bf16.msra.mxu0 %v815
        %1000 = vmatprep.subr.bf16.mxu0 %v820
        %1001 = vmatpush1.bf16.msra.mxu0 %v819
        %1002 = vmatprep.subr.bf16.mxu0 %v824
        %1003 = vmatpush1.bf16.msra.mxu0 %v823
        %1004 = vmatprep.subr.bf16.mxu0 %v828
        %1005 = vmatpush1.bf16.msra.mxu0 %v827
        %1006 = vmatprep.subr.bf16.mxu0 %v832
        %1007 = vmatpush1.bf16.msra.mxu0 %v831
        %1008 = vmatprep.subr.bf16.mxu0 %v836
        %1009 = vmatpush1.bf16.msra.mxu0 %v835
        %1010 = vmatprep.subr.bf16.mxu0 %v840
        %1011 = vmatpush1.bf16.msra.mxu0 %v839
        %1012 = vmatprep.subr.bf16.mxu0 %v844
        %1013 = vmatpush1.bf16.msra.mxu0 %v843
        %1014 = vmatprep.mubr.bf16.mxu0 %v496
        %1015 = vmatmul.mubr.bf16.gmra.mrb[0].mxu0 %v495
        %v1016 = vpop.f32.mrb[0].mxu0
        %v1017 = vadd.f32 %v580, %v1016
        %v1018 = vpop.f32.mrb[0].mxu0
        %v1019 = vadd.f32 %v584, %v1018
        %v1020 = vpop.f32.mrb[0].mxu0
        %v1021 = vadd.f32 %v580, %v1020
        %v1022 = vpop.f32.mrb[0].mxu0
        %v1023 = vadd.f32 %v584, %v1022
        %1024 = vmatprep.mubr.bf16.mxu0 %v498
        %1025 = vmatmul.mubr.bf16.gmra.mrb[0].mxu0 %v497
        %v1026 = vpop.f32.mrb[0].mxu0
        %v1027 = vadd.f32 %v580, %v1026
        %v1028 = vpop.f32.mrb[0].mxu0
        %v1029 = vadd.f32 %v584, %v1028
        %v1030 = vpop.f32.mrb[0].mxu0
        %v1031 = vadd.f32 %v580, %v1030
        %v1032 = vpop.f32.mrb[0].mxu0
        %v1033 = vadd.f32 %v584, %v1032
        %1034 = vmatprep.mubr.bf16.mxu0 %v500
        %1035 = vmatmul.mubr.bf16.gmra.mrb[0].mxu0 %v499
        %v1036 = vpop.f32.mrb[0].mxu0
        %v1037 = vadd.f32 %v580, %v1036
        %v1038 = vpop.f32.mrb[0].mxu0
        %v1039 = vadd.f32 %v584, %v1038
        %v1040 = vpop.f32.mrb[0].mxu0
        %v1041 = vadd.f32 %v580, %v1040
        %v1042 = vpop.f32.mrb[0].mxu0
        %v1043 = vadd.f32 %v584, %v1042
        %1044 = vmatprep.mubr.bf16.mxu0 %v502
        %1045 = vmatmul.mubr.bf16.gmra.mrb[0].mxu0 %v501
        %v1046 = vpop.f32.mrb[0].mxu0
        %v1047 = vadd.f32 %v580, %v1046
        %v1048 = vpop.f32.mrb[0].mxu0
        %v1049 = vadd.f32 %v584, %v1048
        %v1050 = vpop.f32.mrb[0].mxu0
        %v1051 = vadd.f32 %v580, %v1050
        %v1052 = vpop.f32.mrb[0].mxu0
        %v1053 = vadd.f32 %v584, %v1052
        %1054 = vdwg.mxu0
        %v1055 = vmax.f32 %v944, 0.0
        %v1056 = vmax.f32 %v946, 0.0
        %v1057 = vmax.f32 %v1017, 0.0
        %v1058 = vmax.f32 %v1019, 0.0
        %v1059 = vmax.f32 %v948, 0.0
        %v1060 = vmax.f32 %v950, 0.0
        %v1061 = vmax.f32 %v1021, 0.0
        %v1062 = vmax.f32 %v1023, 0.0
        %v1063 = vmax.f32 %v954, 0.0
        %v1064 = vmax.f32 %v956, 0.0
        %v1065 = vmax.f32 %v1027, 0.0
        %v1066 = vmax.f32 %v1029, 0.0
        %v1067 = vmax.f32 %v958, 0.0
        %v1068 = vmax.f32 %v960, 0.0
        %v1069 = vmax.f32 %v1031, 0.0
        %v1070 = vmax.f32 %v1033, 0.0
        %v1071 = vmax.f32 %v964, 0.0
        %v1072 = vmax.f32 %v966, 0.0
        %v1073 = vmax.f32 %v1037, 0.0
        %v1074 = vmax.f32 %v1039, 0.0
        %v1075 = vmax.f32 %v968, 0.0
        %v1076 = vmax.f32 %v970, 0.0
        %v1077 = vmax.f32 %v1041, 0.0
        %v1078 = vmax.f32 %v1043, 0.0
        %v1079 = vmax.f32 %v974, 0.0
        %v1080 = vmax.f32 %v976, 0.0
        %v1081 = vmax.f32 %v1047, 0.0
        %v1082 = vmax.f32 %v1049, 0.0
        %v1083 = vmax.f32 %v978, 0.0
        %v1084 = vmax.f32 %v980, 0.0
        %v1085 = vmax.f32 %v1051, 0.0
        %v1086 = vmax.f32 %v1053, 0.0
        %v1087 = vlaneseq
        %v1088 = vshrl.u32 %v1087, 7
        %v1089 = vadd.s32 %v1088, 8
        %v1090 = vadd.s32 %v1088, 16
        %v1091 = vadd.s32 %v1088, 24
        %v1092 = vadd.s32 %v1088, 32
        %v1093 = vadd.s32 %v1088, 40
        %v1094 = vadd.s32 %v1088, 48
        %v1095 = vadd.s32 %v1088, 56
        %vm1096 = vcmp.lt.s32.totalorder %v1088, 0
        %v1097 = vsub.s32 0, %v1088
        %v1098 = vsel %vm1096, %v1097, %v1088
        %v1099 = vshrl.u32 %v1098, 4
        %v1100 = vand.u32 %v1098, 15
        %v1101 = vsub.s32 0, %v1100
        %v1102 = vsel %vm1096, %v1101, %v1100
        %vm1103 = vcmp.lt.s32.totalorder %v1089, 0
        %v1104 = vsub.s32 0, %v1089
        %v1105 = vsel %vm1103, %v1104, %v1089
        %v1106 = vshrl.u32 %v1105, 4
        %v1107 = vand.u32 %v1105, 15
        %v1108 = vsub.s32 0, %v1107
        %v1109 = vsel %vm1103, %v1108, %v1107
        %vm1110 = vcmp.lt.s32.totalorder %v1090, 0
        %v1111 = vsub.s32 0, %v1090
        %v1112 = vsel %vm1110, %v1111, %v1090
        %v1113 = vshrl.u32 %v1112, 4
        %v1114 = vand.u32 %v1112, 15
        %v1115 = vsub.s32 0, %v1114
        %v1116 = vsel %vm1110, %v1115, %v1114
        %vm1117 = vcmp.lt.s32.totalorder %v1091, 0
        %v1118 = vsub.s32 0, %v1091
        %v1119 = vsel %vm1117, %v1118, %v1091
        %v1120 = vshrl.u32 %v1119, 4
        %v1121 = vand.u32 %v1119, 15
        %v1122 = vsub.s32 0, %v1121
        %v1123 = vsel %vm1117, %v1122, %v1121
        %vm1124 = vcmp.lt.s32.totalorder %v1092, 0
        %v1125 = vsub.s32 0, %v1092
        %v1126 = vsel %vm1124, %v1125, %v1092
        %v1127 = vshrl.u32 %v1126, 4
        %v1128 = vand.u32 %v1126, 15
        %v1129 = vsub.s32 0, %v1128
        %v1130 = vsel %vm1124, %v1129, %v1128
        %vm1131 = vcmp.lt.s32.totalorder %v1093, 0
        %v1132 = vsub.s32 0, %v1093
        %v1133 = vsel %vm1131, %v1132, %v1093
        %v1134 = vshrl.u32 %v1133, 4
        %v1135 = vand.u32 %v1133, 15
        %v1136 = vsub.s32 0, %v1135
        %v1137 = vsel %vm1131, %v1136, %v1135
        %vm1138 = vcmp.lt.s32.totalorder %v1094, 0
        %v1139 = vsub.s32 0, %v1094
        %v1140 = vsel %vm1138, %v1139, %v1094
        %v1141 = vshrl.u32 %v1140, 4
        %v1142 = vand.u32 %v1140, 15
        %v1143 = vsub.s32 0, %v1142
        %v1144 = vsel %vm1138, %v1143, %v1142
        %vm1145 = vcmp.lt.s32.totalorder %v1095, 0
        %v1146 = vsub.s32 0, %v1095
        %v1147 = vsel %vm1145, %v1146, %v1095
        %v1148 = vshrl.u32 %v1147, 4
        %v1149 = vand.u32 %v1147, 15
        %v1150 = vsub.s32 0, %v1149
        %v1151 = vsel %vm1145, %v1150, %v1149
        %vm1152 = vcmp.ne.s32.totalorder %v1102, 0
        %vm1153 = vcmp.ne.s32.totalorder %v1109, 0
        %vm1154 = vcmp.ne.s32.totalorder %v1116, 0
        %vm1155 = vcmp.ne.s32.totalorder %v1123, 0
        %vm1156 = vcmp.ne.s32.totalorder %v1130, 0
        %vm1157 = vcmp.ne.s32.totalorder %v1137, 0
        %vm1158 = vcmp.ne.s32.totalorder %v1144, 0
        %vm1159 = vcmp.ne.s32.totalorder %v1151, 0
        %vm1160 = vcmp.lt.s32.totalorder %v1102, 0
        %vm1161 = vcmp.lt.s32.totalorder %v1109, 0
        %vm1162 = vcmp.lt.s32.totalorder %v1116, 0
        %vm1163 = vcmp.lt.s32.totalorder %v1123, 0
        %vm1164 = vcmp.lt.s32.totalorder %v1130, 0
        %vm1165 = vcmp.lt.s32.totalorder %v1137, 0
        %vm1166 = vcmp.lt.s32.totalorder %v1144, 0
        %vm1167 = vcmp.lt.s32.totalorder %v1151, 0
        %vm1168 = vmand %vm1160, %vm1152
        %vm1169 = vmand %vm1161, %vm1153
        %vm1170 = vmand %vm1162, %vm1154
        %vm1171 = vmand %vm1163, %vm1155
        %vm1172 = vmand %vm1164, %vm1156
        %vm1173 = vmand %vm1165, %vm1157
        %vm1174 = vmand %vm1166, %vm1158
        %vm1175 = vmand %vm1167, %vm1159
        %v1176 = vadd.s32 %v1102, 16
        %v1177 = vadd.s32 %v1109, 16
        %v1178 = vadd.s32 %v1116, 16
        %v1179 = vadd.s32 %v1123, 16
        %v1180 = vadd.s32 %v1130, 16
        %v1181 = vadd.s32 %v1137, 16
        %v1182 = vadd.s32 %v1144, 16
        %v1183 = vadd.s32 %v1151, 16
        %v1184 = vsel %vm1168, %v1176, %v1102
        %v1185 = vsel %vm1169, %v1177, %v1109
        %v1186 = vsel %vm1170, %v1178, %v1116
        %v1187 = vsel %vm1171, %v1179, %v1123
        %v1188 = vsel %vm1172, %v1180, %v1130
        %v1189 = vsel %vm1173, %v1181, %v1137
        %v1190 = vsel %vm1174, %v1182, %v1144
        %v1191 = vsel %vm1175, %v1183, %v1151
        %v1192 = vld [vmem:[#allocation5] sm:$0xff]
        %v1193 = vld [vmem:[#allocation5 + $0x8] sm:$0xff]
        %v1194 = vld [vmem:[#allocation5 + $0x10] sm:$0xff]
        %v1195 = vld [vmem:[#allocation5 + $0x18] sm:$0xff]
        %v1196 = vld [vmem:[#allocation5 + $0x20] sm:$0x1]
        %v1197 = vld [vmem:[#allocation5 + $0x28] sm:$0x1]
        %v1198 = vld [vmem:[#allocation5 + $0x30] sm:$0x1]
        %v1199 = vld [vmem:[#allocation5 + $0x38] sm:$0x1]
        %v1200 = vrot.slane %v1055, 7
        %v1201 = vrot.slane %v1056, 7
        %v1202 = vrot.slane %v1057, 7
        %v1203 = vrot.slane %v1058, 7
        %v1204 = vrot.slane %v1059, 7
        %v1205 = vrot.slane %v1060, 7
        %v1206 = vrot.slane %v1061, 7
        %v1207 = vrot.slane %v1062, 7
        %v1208 = vrot.slane %v1063, 7
        %v1209 = vrot.slane %v1064, 7
        %v1210 = vrot.slane %v1065, 7
        %v1211 = vrot.slane %v1066, 7
        %v1212 = vrot.slane %v1067, 7
        %v1213 = vrot.slane %v1068, 7
        %v1214 = vrot.slane %v1069, 7
        %v1215 = vrot.slane %v1070, 7
        %v1216 = vrot.slane %v1071, 7
        %v1217 = vrot.slane %v1072, 7
        %v1218 = vrot.slane %v1073, 7
        %v1219 = vrot.slane %v1074, 7
        %v1220 = vrot.slane %v1075, 7
        %v1221 = vrot.slane %v1076, 7
        %v1222 = vrot.slane %v1077, 7
        %v1223 = vrot.slane %v1078, 7
        %v1224 = vrot.slane %v1079, 7
        %v1225 = vrot.slane %v1080, 7
        %v1226 = vrot.slane %v1081, 7
        %v1227 = vrot.slane %v1082, 7
        %v1228 = vrot.slane %v1083, 7
        %v1229 = vrot.slane %v1084, 7
        %v1230 = vrot.slane %v1085, 7
        %v1231 = vrot.slane %v1086, 7
        %vm1232 = vcmp.lt.s32.totalorder %v1088, 1
        %v1233 = vsel %vm1232, %v1224, %v1228
        %v1234 = vsel %vm1232, %v1225, %v1229
        %v1235 = vsel %vm1232, %v1226, %v1230
        %v1236 = vsel %vm1232, %v1227, %v1231
        %v1237 = vsel %vm1232, %v1220, %v1224
        %v1238 = vsel %vm1232, %v1221, %v1225
        %v1239 = vsel %vm1232, %v1222, %v1226
        %v1240 = vsel %vm1232, %v1223, %v1227
        %v1241 = vsel %vm1232, %v1216, %v1220
        %v1242 = vsel %vm1232, %v1217, %v1221
        %v1243 = vsel %vm1232, %v1218, %v1222
        %v1244 = vsel %vm1232, %v1219, %v1223
        %v1245 = vsel %vm1232, %v1212, %v1216
        %v1246 = vsel %vm1232, %v1213, %v1217
        %v1247 = vsel %vm1232, %v1214, %v1218
        %v1248 = vsel %vm1232, %v1215, %v1219
        %v1249 = vsel %vm1232, %v1208, %v1212
        %v1250 = vsel %vm1232, %v1209, %v1213
        %v1251 = vsel %vm1232, %v1210, %v1214
        %v1252 = vsel %vm1232, %v1211, %v1215
        %v1253 = vsel %vm1232, %v1204, %v1208
        %v1254 = vsel %vm1232, %v1205, %v1209
        %v1255 = vsel %vm1232, %v1206, %v1210
        %v1256 = vsel %vm1232, %v1207, %v1211
        %v1257 = vsel %vm1232, %v1200, %v1204
        %v1258 = vsel %vm1232, %v1201, %v1205
        %v1259 = vsel %vm1232, %v1202, %v1206
        %v1260 = vsel %vm1232, %v1203, %v1207
        %v1261 = vsel %vm1232, %v1228, %v1200
        %v1262 = vsel %vm1232, %v1229, %v1201
        %v1263 = vsel %vm1232, %v1230, %v1202
        %v1264 = vsel %vm1232, %v1231, %v1203
        %v1265 = vadd.s32 %v1184, 4294967295
        %v1266 = vadd.s32 %v1185, 4294967295
        %v1267 = vadd.s32 %v1186, 4294967295
        %v1268 = vadd.s32 %v1187, 4294967295
        %v1269 = vadd.s32 %v1188, 4294967295
        %v1270 = vadd.s32 %v1189, 4294967295
        %v1271 = vadd.s32 %v1190, 4294967295
        %v1272 = vadd.s32 %v1191, 4294967295
        %vm1273 = vcmp.ge.s32.totalorder %v1265, 0
        %vm1274 = vcmp.ge.s32.totalorder %v1266, 0
        %vm1275 = vcmp.ge.s32.totalorder %v1267, 0
        %vm1276 = vcmp.ge.s32.totalorder %v1268, 0
        %vm1277 = vcmp.ge.s32.totalorder %v1269, 0
        %vm1278 = vcmp.ge.s32.totalorder %v1270, 0
        %vm1279 = vcmp.ge.s32.totalorder %v1271, 0
        %vm1280 = vcmp.ge.s32.totalorder %v1272, 0
        %vm1281 = vcmp.lt.s32.totalorder %v1265, 16
        %vm1282 = vcmp.lt.s32.totalorder %v1266, 16
        %vm1283 = vcmp.lt.s32.totalorder %v1267, 16
        %vm1284 = vcmp.lt.s32.totalorder %v1268, 16
        %vm1285 = vcmp.lt.s32.totalorder %v1269, 16
        %vm1286 = vcmp.lt.s32.totalorder %v1270, 16
        %vm1287 = vcmp.lt.s32.totalorder %v1271, 16
        %vm1288 = vcmp.lt.s32.totalorder %v1272, 16
        %vm1289 = vmand %vm1273, %vm1281
        %vm1290 = vmand %vm1274, %vm1282
        %vm1291 = vmand %vm1275, %vm1283
        %vm1292 = vmand %vm1276, %vm1284
        %vm1293 = vmand %vm1277, %vm1285
        %vm1294 = vmand %vm1278, %vm1286
        %vm1295 = vmand %vm1279, %vm1287
        %vm1296 = vmand %vm1280, %vm1288
        %v1297 = vsel %vm1289, 1, 0
        %v1298 = vsel %vm1290, 1, 0
        %v1299 = vsel %vm1291, 1, 0
        %v1300 = vsel %vm1292, 1, 0
        %v1301 = vsel %vm1293, 1, 0
        %v1302 = vsel %vm1294, 1, 0
        %v1303 = vsel %vm1295, 1, 0
        %v1304 = vsel %vm1296, 1, 0
        %vm1305 = vcmp.eq.s32.totalorder %v1297, 1
        %vm1306 = vcmp.eq.s32.totalorder %v1298, 1
        %vm1307 = vcmp.eq.s32.totalorder %v1299, 1
        %vm1308 = vcmp.eq.s32.totalorder %v1300, 1
        %vm1309 = vcmp.eq.s32.totalorder %v1301, 1
        %vm1310 = vcmp.eq.s32.totalorder %v1302, 1
        %vm1311 = vcmp.eq.s32.totalorder %v1303, 1
        %vm1312 = vcmp.eq.s32.totalorder %v1304, 1
        %v1313 = vsel %vm1305, %v1261, 0.0
        %v1314 = vsel %vm1305, %v1262, 0.0
        %v1315 = vsel %vm1305, %v1263, 0.0
        %v1316 = vsel %vm1305, %v1264, 0.0
        %v1317 = vsel %vm1306, %v1257, 0.0
        %v1318 = vsel %vm1306, %v1258, 0.0
        %v1319 = vsel %vm1306, %v1259, 0.0
        %v1320 = vsel %vm1306, %v1260, 0.0
        %v1321 = vsel %vm1307, %v1253, 0.0
        %v1322 = vsel %vm1307, %v1254, 0.0
        %v1323 = vsel %vm1307, %v1255, 0.0
        %v1324 = vsel %vm1307, %v1256, 0.0
        %v1325 = vsel %vm1308, %v1249, 0.0
        %v1326 = vsel %vm1308, %v1250, 0.0
        %v1327 = vsel %vm1308, %v1251, 0.0
        %v1328 = vsel %vm1308, %v1252, 0.0
        %v1329 = vsel %vm1309, %v1245, 0.0
        %v1330 = vsel %vm1309, %v1246, 0.0
        %v1331 = vsel %vm1309, %v1247, 0.0
        %v1332 = vsel %vm1309, %v1248, 0.0
        %v1333 = vsel %vm1310, %v1241, 0.0
        %v1334 = vsel %vm1310, %v1242, 0.0
        %v1335 = vsel %vm1310, %v1243, 0.0
        %v1336 = vsel %vm1310, %v1244, 0.0
        %v1337 = vsel %vm1311, %v1237, 0.0
        %v1338 = vsel %vm1311, %v1238, 0.0
        %v1339 = vsel %vm1311, %v1239, 0.0
        %v1340 = vsel %vm1311, %v1240, 0.0
        %v1341 = vsel %vm1312, %v1233, 0.0
        %v1342 = vsel %vm1312, %v1234, 0.0
        %v1343 = vsel %vm1312, %v1235, 0.0
        %v1344 = vsel %vm1312, %v1236, 0.0
        %1345 = vrot.lane.b32.xlu0 %v1313, 32
        %v1346 = vpop.permute.xlu0 %1345
        %1347 = vrot.lane.b32.xlu0 %v1317, 32
        %v1348 = vpop.permute.xlu0 %1347
        %1349 = vrot.lane.b32.xlu0 %v1321, 32
        %v1350 = vpop.permute.xlu0 %1349
        %1351 = vrot.lane.b32.xlu0 %v1325, 32
        %v1352 = vpop.permute.xlu0 %1351
        %1353 = vrot.lane.b32.xlu0 %v1329, 32
        %v1354 = vpop.permute.xlu0 %1353
        %1355 = vrot.lane.b32.xlu0 %v1333, 32
        %v1356 = vpop.permute.xlu0 %1355
        %1357 = vrot.lane.b32.xlu0 %v1337, 32
        %v1358 = vpop.permute.xlu0 %1357
        %1359 = vrot.lane.b32.xlu0 %v1341, 32
        %v1360 = vpop.permute.xlu0 %1359
        %1361 = vrot.lane.b32.xlu0 %v1314, 32
        %v1362 = vpop.permute.xlu0 %1361
        %1363 = vrot.lane.b32.xlu0 %v1318, 32
        %v1364 = vpop.permute.xlu0 %1363
        %1365 = vrot.lane.b32.xlu0 %v1322, 32
        %v1366 = vpop.permute.xlu0 %1365
        %1367 = vrot.lane.b32.xlu0 %v1326, 32
        %v1368 = vpop.permute.xlu0 %1367
        %1369 = vrot.lane.b32.xlu0 %v1330, 32
        %v1370 = vpop.permute.xlu0 %1369
        %1371 = vrot.lane.b32.xlu0 %v1334, 32
        %v1372 = vpop.permute.xlu0 %1371
        %1373 = vrot.lane.b32.xlu0 %v1338, 32
        %v1374 = vpop.permute.xlu0 %1373
        %1375 = vrot.lane.b32.xlu0 %v1342, 32
        %v1376 = vpop.permute.xlu0 %1375
        %1377 = vrot.lane.b32.xlu0 %v1315, 32
        %v1378 = vpop.permute.xlu0 %1377
        %1379 = vrot.lane.b32.xlu0 %v1319, 32
        %v1380 = vpop.permute.xlu0 %1379
        %1381 = vrot.lane.b32.xlu0 %v1323, 32
        %v1382 = vpop.permute.xlu0 %1381
        %1383 = vrot.lane.b32.xlu0 %v1327, 32
        %v1384 = vpop.permute.xlu0 %1383
        %1385 = vrot.lane.b32.xlu0 %v1331, 32
        %v1386 = vpop.permute.xlu0 %1385
        %1387 = vrot.lane.b32.xlu0 %v1335, 32
        %v1388 = vpop.permute.xlu0 %1387
        %1389 = vrot.lane.b32.xlu0 %v1339, 32
        %v1390 = vpop.permute.xlu0 %1389
        %1391 = vrot.lane.b32.xlu0 %v1343, 32
        %v1392 = vpop.permute.xlu0 %1391
        %1393 = vrot.lane.b32.xlu0 %v1316, 32
        %v1394 = vpop.permute.xlu0 %1393
        %1395 = vrot.lane.b32.xlu0 %v1320, 32
        %v1396 = vpop.permute.xlu0 %1395
        %1397 = vrot.lane.b32.xlu0 %v1324, 32
        %v1398 = vpop.permute.xlu0 %1397
        %1399 = vrot.lane.b32.xlu0 %v1328, 32
        %v1400 = vpop.permute.xlu0 %1399
        %1401 = vrot.lane.b32.xlu0 %v1332, 32
        %v1402 = vpop.permute.xlu0 %1401
        %1403 = vrot.lane.b32.xlu0 %v1336, 32
        %v1404 = vpop.permute.xlu0 %1403
        %1405 = vrot.lane.b32.xlu0 %v1340, 32
        %v1406 = vpop.permute.xlu0 %1405
        %1407 = vrot.lane.b32.xlu0 %v1344, 32
        %v1408 = vpop.permute.xlu0 %1407
        %v1409 = vlaneseq
        %v1410 = vand.u32 %v1409, 127
        %vm1411 = vcmp.lt.s32.totalorder %v1410, 32
        %v1412 = vsel %vm1411, %v1378, %v1394
        %v1413 = vsel %vm1411, %v1380, %v1396
        %v1414 = vsel %vm1411, %v1382, %v1398
        %v1415 = vsel %vm1411, %v1384, %v1400
        %v1416 = vsel %vm1411, %v1386, %v1402
        %v1417 = vsel %vm1411, %v1388, %v1404
        %v1418 = vsel %vm1411, %v1390, %v1406
        %v1419 = vsel %vm1411, %v1392, %v1408
        %v1420 = vsel %vm1411, %v1362, %v1378
        %v1421 = vsel %vm1411, %v1364, %v1380
        %v1422 = vsel %vm1411, %v1366, %v1382
        %v1423 = vsel %vm1411, %v1368, %v1384
        %v1424 = vsel %vm1411, %v1370, %v1386
        %v1425 = vsel %vm1411, %v1372, %v1388
        %v1426 = vsel %vm1411, %v1374, %v1390
        %v1427 = vsel %vm1411, %v1376, %v1392
        %v1428 = vsel %vm1411, %v1346, %v1362
        %v1429 = vsel %vm1411, %v1348, %v1364
        %v1430 = vsel %vm1411, %v1350, %v1366
        %v1431 = vsel %vm1411, %v1352, %v1368
        %v1432 = vsel %vm1411, %v1354, %v1370
        %v1433 = vsel %vm1411, %v1356, %v1372
        %v1434 = vsel %vm1411, %v1358, %v1374
        %v1435 = vsel %vm1411, %v1360, %v1376
        %v1436 = vsel %vm1411, %v1394, %v1346
        %v1437 = vsel %vm1411, %v1396, %v1348
        %v1438 = vsel %vm1411, %v1398, %v1350
        %v1439 = vsel %vm1411, %v1400, %v1352
        %v1440 = vsel %vm1411, %v1402, %v1354
        %v1441 = vsel %vm1411, %v1404, %v1356
        %v1442 = vsel %vm1411, %v1406, %v1358
        %v1443 = vsel %vm1411, %v1408, %v1360
        %v1444 = vlaneseq
        %v1445 = vshrl.u32 %v1444, 7
        %v1446 = vsub.s32 0, %v1445
        %v1447 = vrot.slane %v1192, %v1446
        %v1448 = vlaneseq
        %v1449 = vshrl.u32 %v1448, 7
        %v1450 = vsub.s32 0, %v1449
        %v1451 = vrot.slane %v1193, %v1450
        %v1452 = vlaneseq
        %v1453 = vshrl.u32 %v1452, 7
        %v1454 = vsub.s32 0, %v1453
        %v1455 = vrot.slane %v1194, %v1454
        %v1456 = vlaneseq
        %v1457 = vshrl.u32 %v1456, 7
        %v1458 = vsub.s32 0, %v1457
        %v1459 = vrot.slane %v1195, %v1458
        %v1460 = vmul.f32 %v1436, %v1447
        %v1461 = vmul.f32 %v1428, %v1451
        %v1462 = vmul.f32 %v1420, %v1455
        %v1463 = vmul.f32 %v1412, %v1459
        %v1464 = vmul.f32 %v1437, %v1447
        %v1465 = vmul.f32 %v1429, %v1451
        %v1466 = vmul.f32 %v1421, %v1455
        %v1467 = vmul.f32 %v1413, %v1459
        %v1468 = vmul.f32 %v1438, %v1447
        %v1469 = vmul.f32 %v1430, %v1451
        %v1470 = vmul.f32 %v1422, %v1455
        %v1471 = vmul.f32 %v1414, %v1459
        %v1472 = vmul.f32 %v1439, %v1447
        %v1473 = vmul.f32 %v1431, %v1451
        %v1474 = vmul.f32 %v1423, %v1455
        %v1475 = vmul.f32 %v1415, %v1459
        %v1476 = vmul.f32 %v1440, %v1447
        %v1477 = vmul.f32 %v1432, %v1451
        %v1478 = vmul.f32 %v1424, %v1455
        %v1479 = vmul.f32 %v1416, %v1459
        %v1480 = vmul.f32 %v1441, %v1447
        %v1481 = vmul.f32 %v1433, %v1451
        %v1482 = vmul.f32 %v1425, %v1455
        %v1483 = vmul.f32 %v1417, %v1459
        %v1484 = vmul.f32 %v1442, %v1447
        %v1485 = vmul.f32 %v1434, %v1451
        %v1486 = vmul.f32 %v1426, %v1455
        %v1487 = vmul.f32 %v1418, %v1459
        %v1488 = vmul.f32 %v1443, %v1447
        %v1489 = vmul.f32 %v1435, %v1451
        %v1490 = vmul.f32 %v1427, %v1455
        %v1491 = vmul.f32 %v1419, %v1459
        %v1492 = vlaneseq
        %v1493 = vshrl.u32 %v1492, 7
        %v1494 = vsub.s32 1, %v1493
        %v1495 = vrot.slane %v1192, %v1494
        %v1496 = vlaneseq
        %v1497 = vshrl.u32 %v1496, 7
        %v1498 = vsub.s32 1, %v1497
        %v1499 = vrot.slane %v1193, %v1498
        %v1500 = vlaneseq
        %v1501 = vshrl.u32 %v1500, 7
        %v1502 = vsub.s32 1, %v1501
        %v1503 = vrot.slane %v1194, %v1502
        %v1504 = vlaneseq
        %v1505 = vshrl.u32 %v1504, 7
        %v1506 = vsub.s32 1, %v1505
        %v1507 = vrot.slane %v1195, %v1506
        %v1508 = vmul.f32 %v1313, %v1495
        %v1509 = vmul.f32 %v1314, %v1499
        %v1510 = vmul.f32 %v1315, %v1503
        %v1511 = vmul.f32 %v1316, %v1507
        %v1512 = vmul.f32 %v1317, %v1495
        %v1513 = vmul.f32 %v1318, %v1499
        %v1514 = vmul.f32 %v1319, %v1503
        %v1515 = vmul.f32 %v1320, %v1507
        %v1516 = vmul.f32 %v1321, %v1495
        %v1517 = vmul.f32 %v1322, %v1499
        %v1518 = vmul.f32 %v1323, %v1503
        %v1519 = vmul.f32 %v1324, %v1507
        %v1520 = vmul.f32 %v1325, %v1495
        %v1521 = vmul.f32 %v1326, %v1499
        %v1522 = vmul.f32 %v1327, %v1503
        %v1523 = vmul.f32 %v1328, %v1507
        %v1524 = vmul.f32 %v1329, %v1495
        %v1525 = vmul.f32 %v1330, %v1499
        %v1526 = vmul.f32 %v1331, %v1503
        %v1527 = vmul.f32 %v1332, %v1507
        %v1528 = vmul.f32 %v1333, %v1495
        %v1529 = vmul.f32 %v1334, %v1499
        %v1530 = vmul.f32 %v1335, %v1503
        %v1531 = vmul.f32 %v1336, %v1507
        %v1532 = vmul.f32 %v1337, %v1495
        %v1533 = vmul.f32 %v1338, %v1499
        %v1534 = vmul.f32 %v1339, %v1503
        %v1535 = vmul.f32 %v1340, %v1507
        %v1536 = vmul.f32 %v1341, %v1495
        %v1537 = vmul.f32 %v1342, %v1499
        %v1538 = vmul.f32 %v1343, %v1503
        %v1539 = vmul.f32 %v1344, %v1507
        %v1540 = vadd.f32 %v1460, %v1508
        %v1541 = vadd.f32 %v1461, %v1509
        %v1542 = vadd.f32 %v1462, %v1510
        %v1543 = vadd.f32 %v1463, %v1511
        %v1544 = vadd.f32 %v1464, %v1512
        %v1545 = vadd.f32 %v1465, %v1513
        %v1546 = vadd.f32 %v1466, %v1514
        %v1547 = vadd.f32 %v1467, %v1515
        %v1548 = vadd.f32 %v1468, %v1516
        %v1549 = vadd.f32 %v1469, %v1517
        %v1550 = vadd.f32 %v1470, %v1518
        %v1551 = vadd.f32 %v1471, %v1519
        %v1552 = vadd.f32 %v1472, %v1520
        %v1553 = vadd.f32 %v1473, %v1521
        %v1554 = vadd.f32 %v1474, %v1522
        %v1555 = vadd.f32 %v1475, %v1523
        %v1556 = vadd.f32 %v1476, %v1524
        %v1557 = vadd.f32 %v1477, %v1525
        %v1558 = vadd.f32 %v1478, %v1526
        %v1559 = vadd.f32 %v1479, %v1527
        %v1560 = vadd.f32 %v1480, %v1528
        %v1561 = vadd.f32 %v1481, %v1529
        %v1562 = vadd.f32 %v1482, %v1530
        %v1563 = vadd.f32 %v1483, %v1531
        %v1564 = vadd.f32 %v1484, %v1532
        %v1565 = vadd.f32 %v1485, %v1533
        %v1566 = vadd.f32 %v1486, %v1534
        %v1567 = vadd.f32 %v1487, %v1535
        %v1568 = vadd.f32 %v1488, %v1536
        %v1569 = vadd.f32 %v1489, %v1537
        %v1570 = vadd.f32 %v1490, %v1538
        %v1571 = vadd.f32 %v1491, %v1539
        %1572 = vrot.lane.b32.xlu0 %v1313, 96
        %v1573 = vpop.permute.xlu0 %1572
        %1574 = vrot.lane.b32.xlu0 %v1317, 96
        %v1575 = vpop.permute.xlu0 %1574
        %1576 = vrot.lane.b32.xlu0 %v1321, 96
        %v1577 = vpop.permute.xlu0 %1576
        %1578 = vrot.lane.b32.xlu0 %v1325, 96
        %v1579 = vpop.permute.xlu0 %1578
        %1580 = vrot.lane.b32.xlu0 %v1329, 96
        %v1581 = vpop.permute.xlu0 %1580
        %1582 = vrot.lane.b32.xlu0 %v1333, 96
        %v1583 = vpop.permute.xlu0 %1582
        %1584 = vrot.lane.b32.xlu0 %v1337, 96
        %v1585 = vpop.permute.xlu0 %1584
        %1586 = vrot.lane.b32.xlu0 %v1341, 96
        %v1587 = vpop.permute.xlu0 %1586
        %1588 = vrot.lane.b32.xlu0 %v1314, 96
        %v1589 = vpop.permute.xlu0 %1588
        %1590 = vrot.lane.b32.xlu0 %v1318, 96
        %v1591 = vpop.permute.xlu0 %1590
        %1592 = vrot.lane.b32.xlu0 %v1322, 96
        %v1593 = vpop.permute.xlu0 %1592
        %1594 = vrot.lane.b32.xlu0 %v1326, 96
        %v1595 = vpop.permute.xlu0 %1594
        %1596 = vrot.lane.b32.xlu0 %v1330, 96
        %v1597 = vpop.permute.xlu0 %1596
        %1598 = vrot.lane.b32.xlu0 %v1334, 96
        %v1599 = vpop.permute.xlu0 %1598
        %1600 = vrot.lane.b32.xlu0 %v1338, 96
        %v1601 = vpop.permute.xlu0 %1600
        %1602 = vrot.lane.b32.xlu0 %v1342, 96
        %v1603 = vpop.permute.xlu0 %1602
        %1604 = vrot.lane.b32.xlu0 %v1315, 96
        %v1605 = vpop.permute.xlu0 %1604
        %1606 = vrot.lane.b32.xlu0 %v1319, 96
        %v1607 = vpop.permute.xlu0 %1606
        %1608 = vrot.lane.b32.xlu0 %v1323, 96
        %v1609 = vpop.permute.xlu0 %1608
        %1610 = vrot.lane.b32.xlu0 %v1327, 96
        %v1611 = vpop.permute.xlu0 %1610
        %1612 = vrot.lane.b32.xlu0 %v1331, 96
        %v1613 = vpop.permute.xlu0 %1612
        %1614 = vrot.lane.b32.xlu0 %v1335, 96
        %v1615 = vpop.permute.xlu0 %1614
        %1616 = vrot.lane.b32.xlu0 %v1339, 96
        %v1617 = vpop.permute.xlu0 %1616
        %1618 = vrot.lane.b32.xlu0 %v1343, 96
        %v1619 = vpop.permute.xlu0 %1618
        %1620 = vrot.lane.b32.xlu0 %v1316, 96
        %v1621 = vpop.permute.xlu0 %1620
        %1622 = vrot.lane.b32.xlu0 %v1320, 96
        %v1623 = vpop.permute.xlu0 %1622
        %1624 = vrot.lane.b32.xlu0 %v1324, 96
        %v1625 = vpop.permute.xlu0 %1624
        %1626 = vrot.lane.b32.xlu0 %v1328, 96
        %v1627 = vpop.permute.xlu0 %1626
        %1628 = vrot.lane.b32.xlu0 %v1332, 96
        %v1629 = vpop.permute.xlu0 %1628
        %1630 = vrot.lane.b32.xlu0 %v1336, 96
        %v1631 = vpop.permute.xlu0 %1630
        %1632 = vrot.lane.b32.xlu0 %v1340, 96
        %v1633 = vpop.permute.xlu0 %1632
        %1634 = vrot.lane.b32.xlu0 %v1344, 96
        %v1635 = vpop.permute.xlu0 %1634
        %vm1636 = vcmp.lt.s32.totalorder %v1410, 96
        %v1637 = vsel %vm1636, %v1605, %v1621
        %v1638 = vsel %vm1636, %v1607, %v1623
        %v1639 = vsel %vm1636, %v1609, %v1625
        %v1640 = vsel %vm1636, %v1611, %v1627
        %v1641 = vsel %vm1636, %v1613, %v1629
        %v1642 = vsel %vm1636, %v1615, %v1631
        %v1643 = vsel %vm1636, %v1617, %v1633
        %v1644 = vsel %vm1636, %v1619, %v1635
        %v1645 = vsel %vm1636, %v1589, %v1605
        %v1646 = vsel %vm1636, %v1591, %v1607
        %v1647 = vsel %vm1636, %v1593, %v1609
        %v1648 = vsel %vm1636, %v1595, %v1611
        %v1649 = vsel %vm1636, %v1597, %v1613
        %v1650 = vsel %vm1636, %v1599, %v1615
        %v1651 = vsel %vm1636, %v1601, %v1617
        %v1652 = vsel %vm1636, %v1603, %v1619
        %v1653 = vsel %vm1636, %v1573, %v1589
        %v1654 = vsel %vm1636, %v1575, %v1591
        %v1655 = vsel %vm1636, %v1577, %v1593
        %v1656 = vsel %vm1636, %v1579, %v1595
        %v1657 = vsel %vm1636, %v1581, %v1597
        %v1658 = vsel %vm1636, %v1583, %v1599
        %v1659 = vsel %vm1636, %v1585, %v1601
        %v1660 = vsel %vm1636, %v1587, %v1603
        %v1661 = vsel %vm1636, %v1621, %v1573
        %v1662 = vsel %vm1636, %v1623, %v1575
        %v1663 = vsel %vm1636, %v1625, %v1577
        %v1664 = vsel %vm1636, %v1627, %v1579
        %v1665 = vsel %vm1636, %v1629, %v1581
        %v1666 = vsel %vm1636, %v1631, %v1583
        %v1667 = vsel %vm1636, %v1633, %v1585
        %v1668 = vsel %vm1636, %v1635, %v1587
        %v1669 = vlaneseq
        %v1670 = vshrl.u32 %v1669, 7
        %v1671 = vsub.s32 2, %v1670
        %v1672 = vrot.slane %v1192, %v1671
        %v1673 = vlaneseq
        %v1674 = vshrl.u32 %v1673, 7
        %v1675 = vsub.s32 2, %v1674
        %v1676 = vrot.slane %v1193, %v1675
        %v1677 = vlaneseq
        %v1678 = vshrl.u32 %v1677, 7
        %v1679 = vsub.s32 2, %v1678
        %v1680 = vrot.slane %v1194, %v1679
        %v1681 = vlaneseq
        %v1682 = vshrl.u32 %v1681, 7
        %v1683 = vsub.s32 2, %v1682
        %v1684 = vrot.slane %v1195, %v1683
        %v1685 = vmul.f32 %v1653, %v1672
        %v1686 = vmul.f32 %v1645, %v1676
        %v1687 = vmul.f32 %v1637, %v1680
        %v1688 = vmul.f32 %v1661, %v1684
        %v1689 = vmul.f32 %v1654, %v1672
        %v1690 = vmul.f32 %v1646, %v1676
        %v1691 = vmul.f32 %v1638, %v1680
        %v1692 = vmul.f32 %v1662, %v1684
        %v1693 = vmul.f32 %v1655, %v1672
        %v1694 = vmul.f32 %v1647, %v1676
        %v1695 = vmul.f32 %v1639, %v1680
        %v1696 = vmul.f32 %v1663, %v1684
        %v1697 = vmul.f32 %v1656, %v1672
        %v1698 = vmul.f32 %v1648, %v1676
        %v1699 = vmul.f32 %v1640, %v1680
        %v1700 = vmul.f32 %v1664, %v1684
        %v1701 = vmul.f32 %v1657, %v1672
        %v1702 = vmul.f32 %v1649, %v1676
        %v1703 = vmul.f32 %v1641, %v1680
        %v1704 = vmul.f32 %v1665, %v1684
        %v1705 = vmul.f32 %v1658, %v1672
        %v1706 = vmul.f32 %v1650, %v1676
        %v1707 = vmul.f32 %v1642, %v1680
        %v1708 = vmul.f32 %v1666, %v1684
        %v1709 = vmul.f32 %v1659, %v1672
        %v1710 = vmul.f32 %v1651, %v1676
        %v1711 = vmul.f32 %v1643, %v1680
        %v1712 = vmul.f32 %v1667, %v1684
        %v1713 = vmul.f32 %v1660, %v1672
        %v1714 = vmul.f32 %v1652, %v1676
        %v1715 = vmul.f32 %v1644, %v1680
        %v1716 = vmul.f32 %v1668, %v1684
        %v1717 = vadd.f32 %v1540, %v1685
        %v1718 = vadd.f32 %v1541, %v1686
        %v1719 = vadd.f32 %v1542, %v1687
        %v1720 = vadd.f32 %v1543, %v1688
        %v1721 = vadd.f32 %v1544, %v1689
        %v1722 = vadd.f32 %v1545, %v1690
        %v1723 = vadd.f32 %v1546, %v1691
        %v1724 = vadd.f32 %v1547, %v1692
        %v1725 = vadd.f32 %v1548, %v1693
        %v1726 = vadd.f32 %v1549, %v1694
        %v1727 = vadd.f32 %v1550, %v1695
        %v1728 = vadd.f32 %v1551, %v1696
        %v1729 = vadd.f32 %v1552, %v1697
        %v1730 = vadd.f32 %v1553, %v1698
        %v1731 = vadd.f32 %v1554, %v1699
        %v1732 = vadd.f32 %v1555, %v1700
        %v1733 = vadd.f32 %v1556, %v1701
        %v1734 = vadd.f32 %v1557, %v1702
        %v1735 = vadd.f32 %v1558, %v1703
        %v1736 = vadd.f32 %v1559, %v1704
        %v1737 = vadd.f32 %v1560, %v1705
        %v1738 = vadd.f32 %v1561, %v1706
        %v1739 = vadd.f32 %v1562, %v1707
        %v1740 = vadd.f32 %v1563, %v1708
        %v1741 = vadd.f32 %v1564, %v1709
        %v1742 = vadd.f32 %v1565, %v1710
        %v1743 = vadd.f32 %v1566, %v1711
        %v1744 = vadd.f32 %v1567, %v1712
        %v1745 = vadd.f32 %v1568, %v1713
        %v1746 = vadd.f32 %v1569, %v1714
        %v1747 = vadd.f32 %v1570, %v1715
        %v1748 = vadd.f32 %v1571, %v1716
        %1749 = vrot.lane.b32.xlu0 %v1055, 32
        %v1750 = vpop.permute.xlu0 %1749
        %1751 = vrot.lane.b32.xlu0 %v1059, 32
        %v1752 = vpop.permute.xlu0 %1751
        %1753 = vrot.lane.b32.xlu0 %v1063, 32
        %v1754 = vpop.permute.xlu0 %1753
        %1755 = vrot.lane.b32.xlu0 %v1067, 32
        %v1756 = vpop.permute.xlu0 %1755
        %1757 = vrot.lane.b32.xlu0 %v1071, 32
        %v1758 = vpop.permute.xlu0 %1757
        %1759 = vrot.lane.b32.xlu0 %v1075, 32
        %v1760 = vpop.permute.xlu0 %1759
        %1761 = vrot.lane.b32.xlu0 %v1079, 32
        %v1762 = vpop.permute.xlu0 %1761
        %1763 = vrot.lane.b32.xlu0 %v1083, 32
        %v1764 = vpop.permute.xlu0 %1763
        %1765 = vrot.lane.b32.xlu0 %v1056, 32
        %v1766 = vpop.permute.xlu0 %1765
        %1767 = vrot.lane.b32.xlu0 %v1060, 32
        %v1768 = vpop.permute.xlu0 %1767
        %1769 = vrot.lane.b32.xlu0 %v1064, 32
        %v1770 = vpop.permute.xlu0 %1769
        %1771 = vrot.lane.b32.xlu0 %v1068, 32
        %v1772 = vpop.permute.xlu0 %1771
        %1773 = vrot.lane.b32.xlu0 %v1072, 32
        %v1774 = vpop.permute.xlu0 %1773
        %1775 = vrot.lane.b32.xlu0 %v1076, 32
        %v1776 = vpop.permute.xlu0 %1775
        %1777 = vrot.lane.b32.xlu0 %v1080, 32
        %v1778 = vpop.permute.xlu0 %1777
        %1779 = vrot.lane.b32.xlu0 %v1084, 32
        %v1780 = vpop.permute.xlu0 %1779
        %1781 = vrot.lane.b32.xlu0 %v1057, 32
        %v1782 = vpop.permute.xlu0 %1781
        %1783 = vrot.lane.b32.xlu0 %v1061, 32
        %v1784 = vpop.permute.xlu0 %1783
        %1785 = vrot.lane.b32.xlu0 %v1065, 32
        %v1786 = vpop.permute.xlu0 %1785
        %1787 = vrot.lane.b32.xlu0 %v1069, 32
        %v1788 = vpop.permute.xlu0 %1787
        %1789 = vrot.lane.b32.xlu0 %v1073, 32
        %v1790 = vpop.permute.xlu0 %1789
        %1791 = vrot.lane.b32.xlu0 %v1077, 32
        %v1792 = vpop.permute.xlu0 %1791
        %1793 = vrot.lane.b32.xlu0 %v1081, 32
        %v1794 = vpop.permute.xlu0 %1793
        %1795 = vrot.lane.b32.xlu0 %v1085, 32
        %v1796 = vpop.permute.xlu0 %1795
        %1797 = vrot.lane.b32.xlu0 %v1058, 32
        %v1798 = vpop.permute.xlu0 %1797
        %1799 = vrot.lane.b32.xlu0 %v1062, 32
        %v1800 = vpop.permute.xlu0 %1799
        %1801 = vrot.lane.b32.xlu0 %v1066, 32
        %v1802 = vpop.permute.xlu0 %1801
        %1803 = vrot.lane.b32.xlu0 %v1070, 32
        %v1804 = vpop.permute.xlu0 %1803
        %1805 = vrot.lane.b32.xlu0 %v1074, 32
        %v1806 = vpop.permute.xlu0 %1805
        %1807 = vrot.lane.b32.xlu0 %v1078, 32
        %v1808 = vpop.permute.xlu0 %1807
        %1809 = vrot.lane.b32.xlu0 %v1082, 32
        %v1810 = vpop.permute.xlu0 %1809
        %1811 = vrot.lane.b32.xlu0 %v1086, 32
        %v1812 = vpop.permute.xlu0 %1811
        %v1813 = vsel %vm1411, %v1782, %v1798
        %v1814 = vsel %vm1411, %v1784, %v1800
        %v1815 = vsel %vm1411, %v1786, %v1802
        %v1816 = vsel %vm1411, %v1788, %v1804
        %v1817 = vsel %vm1411, %v1790, %v1806
        %v1818 = vsel %vm1411, %v1792, %v1808
        %v1819 = vsel %vm1411, %v1794, %v1810
        %v1820 = vsel %vm1411, %v1796, %v1812
        %v1821 = vsel %vm1411, %v1766, %v1782
        %v1822 = vsel %vm1411, %v1768, %v1784
        %v1823 = vsel %vm1411, %v1770, %v1786
        %v1824 = vsel %vm1411, %v1772, %v1788
        %v1825 = vsel %vm1411, %v1774, %v1790
        %v1826 = vsel %vm1411, %v1776, %v1792
        %v1827 = vsel %vm1411, %v1778, %v1794
        %v1828 = vsel %vm1411, %v1780, %v1796
        %v1829 = vsel %vm1411, %v1750, %v1766
        %v1830 = vsel %vm1411, %v1752, %v1768
        %v1831 = vsel %vm1411, %v1754, %v1770
        %v1832 = vsel %vm1411, %v1756, %v1772
        %v1833 = vsel %vm1411, %v1758, %v1774
        %v1834 = vsel %vm1411, %v1760, %v1776
        %v1835 = vsel %vm1411, %v1762, %v1778
        %v1836 = vsel %vm1411, %v1764, %v1780
        %v1837 = vsel %vm1411, %v1798, %v1750
        %v1838 = vsel %vm1411, %v1800, %v1752
        %v1839 = vsel %vm1411, %v1802, %v1754
        %v1840 = vsel %vm1411, %v1804, %v1756
        %v1841 = vsel %vm1411, %v1806, %v1758
        %v1842 = vsel %vm1411, %v1808, %v1760
        %v1843 = vsel %vm1411, %v1810, %v1762
        %v1844 = vsel %vm1411, %v1812, %v1764
        %v1845 = vlaneseq
        %v1846 = vshrl.u32 %v1845, 7
        %v1847 = vsub.s32 3, %v1846
        %v1848 = vrot.slane %v1192, %v1847
        %v1849 = vlaneseq
        %v1850 = vshrl.u32 %v1849, 7
        %v1851 = vsub.s32 3, %v1850
        %v1852 = vrot.slane %v1193, %v1851
        %v1853 = vlaneseq
        %v1854 = vshrl.u32 %v1853, 7
        %v1855 = vsub.s32 3, %v1854
        %v1856 = vrot.slane %v1194, %v1855
        %v1857 = vlaneseq
        %v1858 = vshrl.u32 %v1857, 7
        %v1859 = vsub.s32 3, %v1858
        %v1860 = vrot.slane %v1195, %v1859
        %v1861 = vmul.f32 %v1837, %v1848
        %v1862 = vmul.f32 %v1829, %v1852
        %v1863 = vmul.f32 %v1821, %v1856
        %v1864 = vmul.f32 %v1813, %v1860
        %v1865 = vmul.f32 %v1838, %v1848
        %v1866 = vmul.f32 %v1830, %v1852
        %v1867 = vmul.f32 %v1822, %v1856
        %v1868 = vmul.f32 %v1814, %v1860
        %v1869 = vmul.f32 %v1839, %v1848
        %v1870 = vmul.f32 %v1831, %v1852
        %v1871 = vmul.f32 %v1823, %v1856
        %v1872 = vmul.f32 %v1815, %v1860
        %v1873 = vmul.f32 %v1840, %v1848
        %v1874 = vmul.f32 %v1832, %v1852
        %v1875 = vmul.f32 %v1824, %v1856
        %v1876 = vmul.f32 %v1816, %v1860
        %v1877 = vmul.f32 %v1841, %v1848
        %v1878 = vmul.f32 %v1833, %v1852
        %v1879 = vmul.f32 %v1825, %v1856
        %v1880 = vmul.f32 %v1817, %v1860
        %v1881 = vmul.f32 %v1842, %v1848
        %v1882 = vmul.f32 %v1834, %v1852
        %v1883 = vmul.f32 %v1826, %v1856
        %v1884 = vmul.f32 %v1818, %v1860
        %v1885 = vmul.f32 %v1843, %v1848
        %v1886 = vmul.f32 %v1835, %v1852
        %v1887 = vmul.f32 %v1827, %v1856
        %v1888 = vmul.f32 %v1819, %v1860
        %v1889 = vmul.f32 %v1844, %v1848
        %v1890 = vmul.f32 %v1836, %v1852
        %v1891 = vmul.f32 %v1828, %v1856
        %v1892 = vmul.f32 %v1820, %v1860
        %v1893 = vadd.f32 %v1717, %v1861
        %v1894 = vadd.f32 %v1718, %v1862
        %v1895 = vadd.f32 %v1719, %v1863
        %v1896 = vadd.f32 %v1720, %v1864
        %v1897 = vadd.f32 %v1721, %v1865
        %v1898 = vadd.f32 %v1722, %v1866
        %v1899 = vadd.f32 %v1723, %v1867
        %v1900 = vadd.f32 %v1724, %v1868
        %v1901 = vadd.f32 %v1725, %v1869
        %v1902 = vadd.f32 %v1726, %v1870
        %v1903 = vadd.f32 %v1727, %v1871
        %v1904 = vadd.f32 %v1728, %v1872
        %v1905 = vadd.f32 %v1729, %v1873
        %v1906 = vadd.f32 %v1730, %v1874
        %v1907 = vadd.f32 %v1731, %v1875
        %v1908 = vadd.f32 %v1732, %v1876
        %v1909 = vadd.f32 %v1733, %v1877
        %v1910 = vadd.f32 %v1734, %v1878
        %v1911 = vadd.f32 %v1735, %v1879
        %v1912 = vadd.f32 %v1736, %v1880
        %v1913 = vadd.f32 %v1737, %v1881
        %v1914 = vadd.f32 %v1738, %v1882
        %v1915 = vadd.f32 %v1739, %v1883
        %v1916 = vadd.f32 %v1740, %v1884
        %v1917 = vadd.f32 %v1741, %v1885
        %v1918 = vadd.f32 %v1742, %v1886
        %v1919 = vadd.f32 %v1743, %v1887
        %v1920 = vadd.f32 %v1744, %v1888
        %v1921 = vadd.f32 %v1745, %v1889
        %v1922 = vadd.f32 %v1746, %v1890
        %v1923 = vadd.f32 %v1747, %v1891
        %v1924 = vadd.f32 %v1748, %v1892
        %v1925 = vlaneseq
        %v1926 = vshrl.u32 %v1925, 7
        %v1927 = vsub.s32 4, %v1926
        %v1928 = vrot.slane %v1192, %v1927
        %v1929 = vlaneseq
        %v1930 = vshrl.u32 %v1929, 7
        %v1931 = vsub.s32 4, %v1930
        %v1932 = vrot.slane %v1193, %v1931
        %v1933 = vlaneseq
        %v1934 = vshrl.u32 %v1933, 7
        %v1935 = vsub.s32 4, %v1934
        %v1936 = vrot.slane %v1194, %v1935
        %v1937 = vlaneseq
        %v1938 = vshrl.u32 %v1937, 7
        %v1939 = vsub.s32 4, %v1938
        %v1940 = vrot.slane %v1195, %v1939
        %v1941 = vmul.f32 %v1055, %v1928
        %v1942 = vmul.f32 %v1056, %v1932
        %v1943 = vmul.f32 %v1057, %v1936
        %v1944 = vmul.f32 %v1058, %v1940
        %v1945 = vmul.f32 %v1059, %v1928
        %v1946 = vmul.f32 %v1060, %v1932
        %v1947 = vmul.f32 %v1061, %v1936
        %v1948 = vmul.f32 %v1062, %v1940
        %v1949 = vmul.f32 %v1063, %v1928
        %v1950 = vmul.f32 %v1064, %v1932
        %v1951 = vmul.f32 %v1065, %v1936
        %v1952 = vmul.f32 %v1066, %v1940
        %v1953 = vmul.f32 %v1067, %v1928
        %v1954 = vmul.f32 %v1068, %v1932
        %v1955 = vmul.f32 %v1069, %v1936
        %v1956 = vmul.f32 %v1070, %v1940
        %v1957 = vmul.f32 %v1071, %v1928
        %v1958 = vmul.f32 %v1072, %v1932
        %v1959 = vmul.f32 %v1073, %v1936
        %v1960 = vmul.f32 %v1074, %v1940
        %v1961 = vmul.f32 %v1075, %v1928
        %v1962 = vmul.f32 %v1076, %v1932
        %v1963 = vmul.f32 %v1077, %v1936
        %v1964 = vmul.f32 %v1078, %v1940
        %v1965 = vmul.f32 %v1079, %v1928
        %v1966 = vmul.f32 %v1080, %v1932
        %v1967 = vmul.f32 %v1081, %v1936
        %v1968 = vmul.f32 %v1082, %v1940
        %v1969 = vmul.f32 %v1083, %v1928
        %v1970 = vmul.f32 %v1084, %v1932
        %v1971 = vmul.f32 %v1085, %v1936
        %v1972 = vmul.f32 %v1086, %v1940
        %v1973 = vadd.f32 %v1893, %v1941
        %v1974 = vadd.f32 %v1894, %v1942
        %v1975 = vadd.f32 %v1895, %v1943
        %v1976 = vadd.f32 %v1896, %v1944
        %v1977 = vadd.f32 %v1897, %v1945
        %v1978 = vadd.f32 %v1898, %v1946
        %v1979 = vadd.f32 %v1899, %v1947
        %v1980 = vadd.f32 %v1900, %v1948
        %v1981 = vadd.f32 %v1901, %v1949
        %v1982 = vadd.f32 %v1902, %v1950
        %v1983 = vadd.f32 %v1903, %v1951
        %v1984 = vadd.f32 %v1904, %v1952
        %v1985 = vadd.f32 %v1905, %v1953
        %v1986 = vadd.f32 %v1906, %v1954
        %v1987 = vadd.f32 %v1907, %v1955
        %v1988 = vadd.f32 %v1908, %v1956
        %v1989 = vadd.f32 %v1909, %v1957
        %v1990 = vadd.f32 %v1910, %v1958
        %v1991 = vadd.f32 %v1911, %v1959
        %v1992 = vadd.f32 %v1912, %v1960
        %v1993 = vadd.f32 %v1913, %v1961
        %v1994 = vadd.f32 %v1914, %v1962
        %v1995 = vadd.f32 %v1915, %v1963
        %v1996 = vadd.f32 %v1916, %v1964
        %v1997 = vadd.f32 %v1917, %v1965
        %v1998 = vadd.f32 %v1918, %v1966
        %v1999 = vadd.f32 %v1919, %v1967
        %v2000 = vadd.f32 %v1920, %v1968
        %v2001 = vadd.f32 %v1921, %v1969
        %v2002 = vadd.f32 %v1922, %v1970
        %v2003 = vadd.f32 %v1923, %v1971
        %v2004 = vadd.f32 %v1924, %v1972
        %2005 = vrot.lane.b32.xlu0 %v1055, 96
        %v2006 = vpop.permute.xlu0 %2005
        %2007 = vrot.lane.b32.xlu0 %v1059, 96
        %v2008 = vpop.permute.xlu0 %2007
        %2009 = vrot.lane.b32.xlu0 %v1063, 96
        %v2010 = vpop.permute.xlu0 %2009
        %2011 = vrot.lane.b32.xlu0 %v1067, 96
        %v2012 = vpop.permute.xlu0 %2011
        %2013 = vrot.lane.b32.xlu0 %v1071, 96
        %v2014 = vpop.permute.xlu0 %2013
        %2015 = vrot.lane.b32.xlu0 %v1075, 96
        %v2016 = vpop.permute.xlu0 %2015
        %2017 = vrot.lane.b32.xlu0 %v1079, 96
        %v2018 = vpop.permute.xlu0 %2017
        %2019 = vrot.lane.b32.xlu0 %v1083, 96
        %v2020 = vpop.permute.xlu0 %2019
        %2021 = vrot.lane.b32.xlu0 %v1056, 96
        %v2022 = vpop.permute.xlu0 %2021
        %2023 = vrot.lane.b32.xlu0 %v1060, 96
        %v2024 = vpop.permute.xlu0 %2023
        %2025 = vrot.lane.b32.xlu0 %v1064, 96
        %v2026 = vpop.permute.xlu0 %2025
        %2027 = vrot.lane.b32.xlu0 %v1068, 96
        %v2028 = vpop.permute.xlu0 %2027
        %2029 = vrot.lane.b32.xlu0 %v1072, 96
        %v2030 = vpop.permute.xlu0 %2029
        %2031 = vrot.lane.b32.xlu0 %v1076, 96
        %v2032 = vpop.permute.xlu0 %2031
        %2033 = vrot.lane.b32.xlu0 %v1080, 96
        %v2034 = vpop.permute.xlu0 %2033
        %2035 = vrot.lane.b32.xlu0 %v1084, 96
        %v2036 = vpop.permute.xlu0 %2035
        %2037 = vrot.lane.b32.xlu0 %v1057, 96
        %v2038 = vpop.permute.xlu0 %2037
        %2039 = vrot.lane.b32.xlu0 %v1061, 96
        %v2040 = vpop.permute.xlu0 %2039
        %2041 = vrot.lane.b32.xlu0 %v1065, 96
        %v2042 = vpop.permute.xlu0 %2041
        %2043 = vrot.lane.b32.xlu0 %v1069, 96
        %v2044 = vpop.permute.xlu0 %2043
        %2045 = vrot.lane.b32.xlu0 %v1073, 96
        %v2046 = vpop.permute.xlu0 %2045
        %2047 = vrot.lane.b32.xlu0 %v1077, 96
        %v2048 = vpop.permute.xlu0 %2047
        %2049 = vrot.lane.b32.xlu0 %v1081, 96
        %v2050 = vpop.permute.xlu0 %2049
        %2051 = vrot.lane.b32.xlu0 %v1085, 96
        %v2052 = vpop.permute.xlu0 %2051
        %2053 = vrot.lane.b32.xlu0 %v1058, 96
        %v2054 = vpop.permute.xlu0 %2053
        %2055 = vrot.lane.b32.xlu0 %v1062, 96
        %v2056 = vpop.permute.xlu0 %2055
        %2057 = vrot.lane.b32.xlu0 %v1066, 96
        %v2058 = vpop.permute.xlu0 %2057
        %2059 = vrot.lane.b32.xlu0 %v1070, 96
        %v2060 = vpop.permute.xlu0 %2059
        %2061 = vrot.lane.b32.xlu0 %v1074, 96
        %v2062 = vpop.permute.xlu0 %2061
        %2063 = vrot.lane.b32.xlu0 %v1078, 96
        %v2064 = vpop.permute.xlu0 %2063
        %2065 = vrot.lane.b32.xlu0 %v1082, 96
        %v2066 = vpop.permute.xlu0 %2065
        %2067 = vrot.lane.b32.xlu0 %v1086, 96
        %v2068 = vpop.permute.xlu0 %2067
        %v2069 = vsel %vm1636, %v2038, %v2054
        %v2070 = vsel %vm1636, %v2040, %v2056
        %v2071 = vsel %vm1636, %v2042, %v2058
        %v2072 = vsel %vm1636, %v2044, %v2060
        %v2073 = vsel %vm1636, %v2046, %v2062
        %v2074 = vsel %vm1636, %v2048, %v2064
        %v2075 = vsel %vm1636, %v2050, %v2066
        %v2076 = vsel %vm1636, %v2052, %v2068
        %v2077 = vsel %vm1636, %v2022, %v2038
        %v2078 = vsel %vm1636, %v2024, %v2040
        %v2079 = vsel %vm1636, %v2026, %v2042
        %v2080 = vsel %vm1636, %v2028, %v2044
        %v2081 = vsel %vm1636, %v2030, %v2046
        %v2082 = vsel %vm1636, %v2032, %v2048
        %v2083 = vsel %vm1636, %v2034, %v2050
        %v2084 = vsel %vm1636, %v2036, %v2052
        %v2085 = vsel %vm1636, %v2006, %v2022
        %v2086 = vsel %vm1636, %v2008, %v2024
        %v2087 = vsel %vm1636, %v2010, %v2026
        %v2088 = vsel %vm1636, %v2012, %v2028
        %v2089 = vsel %vm1636, %v2014, %v2030
        %v2090 = vsel %vm1636, %v2016, %v2032
        %v2091 = vsel %vm1636, %v2018, %v2034
        %v2092 = vsel %vm1636, %v2020, %v2036
        %v2093 = vsel %vm1636, %v2054, %v2006
        %v2094 = vsel %vm1636, %v2056, %v2008
        %v2095 = vsel %vm1636, %v2058, %v2010
        %v2096 = vsel %vm1636, %v2060, %v2012
        %v2097 = vsel %vm1636, %v2062, %v2014
        %v2098 = vsel %vm1636, %v2064, %v2016
        %v2099 = vsel %vm1636, %v2066, %v2018
        %v2100 = vsel %vm1636, %v2068, %v2020
        %v2101 = vlaneseq
        %v2102 = vshrl.u32 %v2101, 7
        %v2103 = vsub.s32 5, %v2102
        %v2104 = vrot.slane %v1192, %v2103
        %v2105 = vlaneseq
        %v2106 = vshrl.u32 %v2105, 7
        %v2107 = vsub.s32 5, %v2106
        %v2108 = vrot.slane %v1193, %v2107
        %v2109 = vlaneseq
        %v2110 = vshrl.u32 %v2109, 7
        %v2111 = vsub.s32 5, %v2110
        %v2112 = vrot.slane %v1194, %v2111
        %v2113 = vlaneseq
        %v2114 = vshrl.u32 %v2113, 7
        %v2115 = vsub.s32 5, %v2114
        %v2116 = vrot.slane %v1195, %v2115
        %v2117 = vmul.f32 %v2085, %v2104
        %v2118 = vmul.f32 %v2077, %v2108
        %v2119 = vmul.f32 %v2069, %v2112
        %v2120 = vmul.f32 %v2093, %v2116
        %v2121 = vmul.f32 %v2086, %v2104
        %v2122 = vmul.f32 %v2078, %v2108
        %v2123 = vmul.f32 %v2070, %v2112
        %v2124 = vmul.f32 %v2094, %v2116
        %v2125 = vmul.f32 %v2087, %v2104
        %v2126 = vmul.f32 %v2079, %v2108
        %v2127 = vmul.f32 %v2071, %v2112
        %v2128 = vmul.f32 %v2095, %v2116
        %v2129 = vmul.f32 %v2088, %v2104
        %v2130 = vmul.f32 %v2080, %v2108
        %v2131 = vmul.f32 %v2072, %v2112
        %v2132 = vmul.f32 %v2096, %v2116
        %v2133 = vmul.f32 %v2089, %v2104
        %v2134 = vmul.f32 %v2081, %v2108
        %v2135 = vmul.f32 %v2073, %v2112
        %v2136 = vmul.f32 %v2097, %v2116
        %v2137 = vmul.f32 %v2090, %v2104
        %v2138 = vmul.f32 %v2082, %v2108
        %v2139 = vmul.f32 %v2074, %v2112
        %v2140 = vmul.f32 %v2098, %v2116
        %v2141 = vmul.f32 %v2091, %v2104
        %v2142 = vmul.f32 %v2083, %v2108
        %v2143 = vmul.f32 %v2075, %v2112
        %v2144 = vmul.f32 %v2099, %v2116
        %v2145 = vmul.f32 %v2092, %v2104
        %v2146 = vmul.f32 %v2084, %v2108
        %v2147 = vmul.f32 %v2076, %v2112
        %v2148 = vmul.f32 %v2100, %v2116
        %v2149 = vadd.f32 %v1973, %v2117
        %v2150 = vadd.f32 %v1974, %v2118
        %v2151 = vadd.f32 %v1975, %v2119
        %v2152 = vadd.f32 %v1976, %v2120
        %v2153 = vadd.f32 %v1977, %v2121
        %v2154 = vadd.f32 %v1978, %v2122
        %v2155 = vadd.f32 %v1979, %v2123
        %v2156 = vadd.f32 %v1980, %v2124
        %v2157 = vadd.f32 %v1981, %v2125
        %v2158 = vadd.f32 %v1982, %v2126
        %v2159 = vadd.f32 %v1983, %v2127
        %v2160 = vadd.f32 %v1984, %v2128
        %v2161 = vadd.f32 %v1985, %v2129
        %v2162 = vadd.f32 %v1986, %v2130
        %v2163 = vadd.f32 %v1987, %v2131
        %v2164 = vadd.f32 %v1988, %v2132
        %v2165 = vadd.f32 %v1989, %v2133
        %v2166 = vadd.f32 %v1990, %v2134
        %v2167 = vadd.f32 %v1991, %v2135
        %v2168 = vadd.f32 %v1992, %v2136
        %v2169 = vadd.f32 %v1993, %v2137
        %v2170 = vadd.f32 %v1994, %v2138
        %v2171 = vadd.f32 %v1995, %v2139
        %v2172 = vadd.f32 %v1996, %v2140
        %v2173 = vadd.f32 %v1997, %v2141
        %v2174 = vadd.f32 %v1998, %v2142
        %v2175 = vadd.f32 %v1999, %v2143
        %v2176 = vadd.f32 %v2000, %v2144
        %v2177 = vadd.f32 %v2001, %v2145
        %v2178 = vadd.f32 %v2002, %v2146
        %v2179 = vadd.f32 %v2003, %v2147
        %v2180 = vadd.f32 %v2004, %v2148
        %v2181 = vrot.slane %v1055, 1
        %v2182 = vrot.slane %v1056, 1
        %v2183 = vrot.slane %v1057, 1
        %v2184 = vrot.slane %v1058, 1
        %v2185 = vrot.slane %v1059, 1
        %v2186 = vrot.slane %v1060, 1
        %v2187 = vrot.slane %v1061, 1
        %v2188 = vrot.slane %v1062, 1
        %v2189 = vrot.slane %v1063, 1
        %v2190 = vrot.slane %v1064, 1
        %v2191 = vrot.slane %v1065, 1
        %v2192 = vrot.slane %v1066, 1
        %v2193 = vrot.slane %v1067, 1
        %v2194 = vrot.slane %v1068, 1
        %v2195 = vrot.slane %v1069, 1
        %v2196 = vrot.slane %v1070, 1
        %v2197 = vrot.slane %v1071, 1
        %v2198 = vrot.slane %v1072, 1
        %v2199 = vrot.slane %v1073, 1
        %v2200 = vrot.slane %v1074, 1
        %v2201 = vrot.slane %v1075, 1
        %v2202 = vrot.slane %v1076, 1
        %v2203 = vrot.slane %v1077, 1
        %v2204 = vrot.slane %v1078, 1
        %v2205 = vrot.slane %v1079, 1
        %v2206 = vrot.slane %v1080, 1
        %v2207 = vrot.slane %v1081, 1
        %v2208 = vrot.slane %v1082, 1
        %v2209 = vrot.slane %v1083, 1
        %v2210 = vrot.slane %v1084, 1
        %v2211 = vrot.slane %v1085, 1
        %v2212 = vrot.slane %v1086, 1
        %vm2213 = vcmp.lt.s32.totalorder %v1088, 7
        %v2214 = vsel %vm2213, %v2205, %v2209
        %v2215 = vsel %vm2213, %v2206, %v2210
        %v2216 = vsel %vm2213, %v2207, %v2211
        %v2217 = vsel %vm2213, %v2208, %v2212
        %v2218 = vsel %vm2213, %v2201, %v2205
        %v2219 = vsel %vm2213, %v2202, %v2206
        %v2220 = vsel %vm2213, %v2203, %v2207
        %v2221 = vsel %vm2213, %v2204, %v2208
        %v2222 = vsel %vm2213, %v2197, %v2201
        %v2223 = vsel %vm2213, %v2198, %v2202
        %v2224 = vsel %vm2213, %v2199, %v2203
        %v2225 = vsel %vm2213, %v2200, %v2204
        %v2226 = vsel %vm2213, %v2193, %v2197
        %v2227 = vsel %vm2213, %v2194, %v2198
        %v2228 = vsel %vm2213, %v2195, %v2199
        %v2229 = vsel %vm2213, %v2196, %v2200
        %v2230 = vsel %vm2213, %v2189, %v2193
        %v2231 = vsel %vm2213, %v2190, %v2194
        %v2232 = vsel %vm2213, %v2191, %v2195
        %v2233 = vsel %vm2213, %v2192, %v2196
        %v2234 = vsel %vm2213, %v2185, %v2189
        %v2235 = vsel %vm2213, %v2186, %v2190
        %v2236 = vsel %vm2213, %v2187, %v2191
        %v2237 = vsel %vm2213, %v2188, %v2192
        %v2238 = vsel %vm2213, %v2181, %v2185
        %v2239 = vsel %vm2213, %v2182, %v2186
        %v2240 = vsel %vm2213, %v2183, %v2187
        %v2241 = vsel %vm2213, %v2184, %v2188
        %v2242 = vsel %vm2213, %v2209, %v2181
        %v2243 = vsel %vm2213, %v2210, %v2182
        %v2244 = vsel %vm2213, %v2211, %v2183
        %v2245 = vsel %vm2213, %v2212, %v2184
        %v2246 = vadd.s32 %v1184, 1
        %v2247 = vadd.s32 %v1185, 1
        %v2248 = vadd.s32 %v1186, 1
        %v2249 = vadd.s32 %v1187, 1
        %v2250 = vadd.s32 %v1188, 1
        %v2251 = vadd.s32 %v1189, 1
        %v2252 = vadd.s32 %v1190, 1
        %v2253 = vadd.s32 %v1191, 1
        %vm2254 = vcmp.ge.s32.totalorder %v2246, 0
        %vm2255 = vcmp.ge.s32.totalorder %v2247, 0
        %vm2256 = vcmp.ge.s32.totalorder %v2248, 0
        %vm2257 = vcmp.ge.s32.totalorder %v2249, 0
        %vm2258 = vcmp.ge.s32.totalorder %v2250, 0
        %vm2259 = vcmp.ge.s32.totalorder %v2251, 0
        %vm2260 = vcmp.ge.s32.totalorder %v2252, 0
        %vm2261 = vcmp.ge.s32.totalorder %v2253, 0
        %vm2262 = vcmp.lt.s32.totalorder %v2246, 16
        %vm2263 = vcmp.lt.s32.totalorder %v2247, 16
        %vm2264 = vcmp.lt.s32.totalorder %v2248, 16
        %vm2265 = vcmp.lt.s32.totalorder %v2249, 16
        %vm2266 = vcmp.lt.s32.totalorder %v2250, 16
        %vm2267 = vcmp.lt.s32.totalorder %v2251, 16
        %vm2268 = vcmp.lt.s32.totalorder %v2252, 16
        %vm2269 = vcmp.lt.s32.totalorder %v2253, 16
        %vm2270 = vmand %vm2254, %vm2262
        %vm2271 = vmand %vm2255, %vm2263
        %vm2272 = vmand %vm2256, %vm2264
        %vm2273 = vmand %vm2257, %vm2265
        %vm2274 = vmand %vm2258, %vm2266
        %vm2275 = vmand %vm2259, %vm2267
        %vm2276 = vmand %vm2260, %vm2268
        %vm2277 = vmand %vm2261, %vm2269
        %v2278 = vsel %vm2270, 1, 0
        %v2279 = vsel %vm2271, 1, 0
        %v2280 = vsel %vm2272, 1, 0
        %v2281 = vsel %vm2273, 1, 0
        %v2282 = vsel %vm2274, 1, 0
        %v2283 = vsel %vm2275, 1, 0
        %v2284 = vsel %vm2276, 1, 0
        %v2285 = vsel %vm2277, 1, 0
        %vm2286 = vcmp.eq.s32.totalorder %v2278, 1
        %vm2287 = vcmp.eq.s32.totalorder %v2279, 1
        %vm2288 = vcmp.eq.s32.totalorder %v2280, 1
        %vm2289 = vcmp.eq.s32.totalorder %v2281, 1
        %vm2290 = vcmp.eq.s32.totalorder %v2282, 1
        %vm2291 = vcmp.eq.s32.totalorder %v2283, 1
        %vm2292 = vcmp.eq.s32.totalorder %v2284, 1
        %vm2293 = vcmp.eq.s32.totalorder %v2285, 1
        %v2294 = vsel %vm2286, %v2238, 0.0
        %v2295 = vsel %vm2286, %v2239, 0.0
        %v2296 = vsel %vm2286, %v2240, 0.0
        %v2297 = vsel %vm2286, %v2241, 0.0
        %v2298 = vsel %vm2287, %v2234, 0.0
        %v2299 = vsel %vm2287, %v2235, 0.0
        %v2300 = vsel %vm2287, %v2236, 0.0
        %v2301 = vsel %vm2287, %v2237, 0.0
        %v2302 = vsel %vm2288, %v2230, 0.0
        %v2303 = vsel %vm2288, %v2231, 0.0
        %v2304 = vsel %vm2288, %v2232, 0.0
        %v2305 = vsel %vm2288, %v2233, 0.0
        %v2306 = vsel %vm2289, %v2226, 0.0
        %v2307 = vsel %vm2289, %v2227, 0.0
        %v2308 = vsel %vm2289, %v2228, 0.0
        %v2309 = vsel %vm2289, %v2229, 0.0
        %v2310 = vsel %vm2290, %v2222, 0.0
        %v2311 = vsel %vm2290, %v2223, 0.0
        %v2312 = vsel %vm2290, %v2224, 0.0
        %v2313 = vsel %vm2290, %v2225, 0.0
        %v2314 = vsel %vm2291, %v2218, 0.0
        %v2315 = vsel %vm2291, %v2219, 0.0
        %v2316 = vsel %vm2291, %v2220, 0.0
        %v2317 = vsel %vm2291, %v2221, 0.0
        %v2318 = vsel %vm2292, %v2214, 0.0
        %v2319 = vsel %vm2292, %v2215, 0.0
        %v2320 = vsel %vm2292, %v2216, 0.0
        %v2321 = vsel %vm2292, %v2217, 0.0
        %v2322 = vsel %vm2293, %v2242, 0.0
        %v2323 = vsel %vm2293, %v2243, 0.0
        %v2324 = vsel %vm2293, %v2244, 0.0
        %v2325 = vsel %vm2293, %v2245, 0.0
        %2326 = vrot.lane.b32.xlu0 %v2294, 32
        %v2327 = vpop.permute.xlu0 %2326
        %2328 = vrot.lane.b32.xlu0 %v2298, 32
        %v2329 = vpop.permute.xlu0 %2328
        %2330 = vrot.lane.b32.xlu0 %v2302, 32
        %v2331 = vpop.permute.xlu0 %2330
        %2332 = vrot.lane.b32.xlu0 %v2306, 32
        %v2333 = vpop.permute.xlu0 %2332
        %2334 = vrot.lane.b32.xlu0 %v2310, 32
        %v2335 = vpop.permute.xlu0 %2334
        %2336 = vrot.lane.b32.xlu0 %v2314, 32
        %v2337 = vpop.permute.xlu0 %2336
        %2338 = vrot.lane.b32.xlu0 %v2318, 32
        %v2339 = vpop.permute.xlu0 %2338
        %2340 = vrot.lane.b32.xlu0 %v2322, 32
        %v2341 = vpop.permute.xlu0 %2340
        %2342 = vrot.lane.b32.xlu0 %v2295, 32
        %v2343 = vpop.permute.xlu0 %2342
        %2344 = vrot.lane.b32.xlu0 %v2299, 32
        %v2345 = vpop.permute.xlu0 %2344
        %2346 = vrot.lane.b32.xlu0 %v2303, 32
        %v2347 = vpop.permute.xlu0 %2346
        %2348 = vrot.lane.b32.xlu0 %v2307, 32
        %v2349 = vpop.permute.xlu0 %2348
        %2350 = vrot.lane.b32.xlu0 %v2311, 32
        %v2351 = vpop.permute.xlu0 %2350
        %2352 = vrot.lane.b32.xlu0 %v2315, 32
        %v2353 = vpop.permute.xlu0 %2352
        %2354 = vrot.lane.b32.xlu0 %v2319, 32
        %v2355 = vpop.permute.xlu0 %2354
        %2356 = vrot.lane.b32.xlu0 %v2323, 32
        %v2357 = vpop.permute.xlu0 %2356
        %2358 = vrot.lane.b32.xlu0 %v2296, 32
        %v2359 = vpop.permute.xlu0 %2358
        %2360 = vrot.lane.b32.xlu0 %v2300, 32
        %v2361 = vpop.permute.xlu0 %2360
        %2362 = vrot.lane.b32.xlu0 %v2304, 32
        %v2363 = vpop.permute.xlu0 %2362
        %2364 = vrot.lane.b32.xlu0 %v2308, 32
        %v2365 = vpop.permute.xlu0 %2364
        %2366 = vrot.lane.b32.xlu0 %v2312, 32
        %v2367 = vpop.permute.xlu0 %2366
        %2368 = vrot.lane.b32.xlu0 %v2316, 32
        %v2369 = vpop.permute.xlu0 %2368
        %2370 = vrot.lane.b32.xlu0 %v2320, 32
        %v2371 = vpop.permute.xlu0 %2370
        %2372 = vrot.lane.b32.xlu0 %v2324, 32
        %v2373 = vpop.permute.xlu0 %2372
        %2374 = vrot.lane.b32.xlu0 %v2297, 32
        %v2375 = vpop.permute.xlu0 %2374
        %2376 = vrot.lane.b32.xlu0 %v2301, 32
        %v2377 = vpop.permute.xlu0 %2376
        %2378 = vrot.lane.b32.xlu0 %v2305, 32
        %v2379 = vpop.permute.xlu0 %2378
        %2380 = vrot.lane.b32.xlu0 %v2309, 32
        %v2381 = vpop.permute.xlu0 %2380
        %2382 = vrot.lane.b32.xlu0 %v2313, 32
        %v2383 = vpop.permute.xlu0 %2382
        %2384 = vrot.lane.b32.xlu0 %v2317, 32
        %v2385 = vpop.permute.xlu0 %2384
        %2386 = vrot.lane.b32.xlu0 %v2321, 32
        %v2387 = vpop.permute.xlu0 %2386
        %2388 = vrot.lane.b32.xlu0 %v2325, 32
        %v2389 = vpop.permute.xlu0 %2388
        %v2390 = vsel %vm1411, %v2359, %v2375
        %v2391 = vsel %vm1411, %v2361, %v2377
        %v2392 = vsel %vm1411, %v2363, %v2379
        %v2393 = vsel %vm1411, %v2365, %v2381
        %v2394 = vsel %vm1411, %v2367, %v2383
        %v2395 = vsel %vm1411, %v2369, %v2385
        %v2396 = vsel %vm1411, %v2371, %v2387
        %v2397 = vsel %vm1411, %v2373, %v2389
        %v2398 = vsel %vm1411, %v2343, %v2359
        %v2399 = vsel %vm1411, %v2345, %v2361
        %v2400 = vsel %vm1411, %v2347, %v2363
        %v2401 = vsel %vm1411, %v2349, %v2365
        %v2402 = vsel %vm1411, %v2351, %v2367
        %v2403 = vsel %vm1411, %v2353, %v2369
        %v2404 = vsel %vm1411, %v2355, %v2371
        %v2405 = vsel %vm1411, %v2357, %v2373
        %v2406 = vsel %vm1411, %v2327, %v2343
        %v2407 = vsel %vm1411, %v2329, %v2345
        %v2408 = vsel %vm1411, %v2331, %v2347
        %v2409 = vsel %vm1411, %v2333, %v2349
        %v2410 = vsel %vm1411, %v2335, %v2351
        %v2411 = vsel %vm1411, %v2337, %v2353
        %v2412 = vsel %vm1411, %v2339, %v2355
        %v2413 = vsel %vm1411, %v2341, %v2357
        %v2414 = vsel %vm1411, %v2375, %v2327
        %v2415 = vsel %vm1411, %v2377, %v2329
        %v2416 = vsel %vm1411, %v2379, %v2331
        %v2417 = vsel %vm1411, %v2381, %v2333
        %v2418 = vsel %vm1411, %v2383, %v2335
        %v2419 = vsel %vm1411, %v2385, %v2337
        %v2420 = vsel %vm1411, %v2387, %v2339
        %v2421 = vsel %vm1411, %v2389, %v2341
        %v2422 = vlaneseq
        %v2423 = vshrl.u32 %v2422, 7
        %v2424 = vsub.s32 6, %v2423
        %v2425 = vrot.slane %v1192, %v2424
        %v2426 = vlaneseq
        %v2427 = vshrl.u32 %v2426, 7
        %v2428 = vsub.s32 6, %v2427
        %v2429 = vrot.slane %v1193, %v2428
        %v2430 = vlaneseq
        %v2431 = vshrl.u32 %v2430, 7
        %v2432 = vsub.s32 6, %v2431
        %v2433 = vrot.slane %v1194, %v2432
        %v2434 = vlaneseq
        %v2435 = vshrl.u32 %v2434, 7
        %v2436 = vsub.s32 6, %v2435
        %v2437 = vrot.slane %v1195, %v2436
        %v2438 = vmul.f32 %v2414, %v2425
        %v2439 = vmul.f32 %v2406, %v2429
        %v2440 = vmul.f32 %v2398, %v2433
        %v2441 = vmul.f32 %v2390, %v2437
        %v2442 = vmul.f32 %v2415, %v2425
        %v2443 = vmul.f32 %v2407, %v2429
        %v2444 = vmul.f32 %v2399, %v2433
        %v2445 = vmul.f32 %v2391, %v2437
        %v2446 = vmul.f32 %v2416, %v2425
        %v2447 = vmul.f32 %v2408, %v2429
        %v2448 = vmul.f32 %v2400, %v2433
        %v2449 = vmul.f32 %v2392, %v2437
        %v2450 = vmul.f32 %v2417, %v2425
        %v2451 = vmul.f32 %v2409, %v2429
        %v2452 = vmul.f32 %v2401, %v2433
        %v2453 = vmul.f32 %v2393, %v2437
        %v2454 = vmul.f32 %v2418, %v2425
        %v2455 = vmul.f32 %v2410, %v2429
        %v2456 = vmul.f32 %v2402, %v2433
        %v2457 = vmul.f32 %v2394, %v2437
        %v2458 = vmul.f32 %v2419, %v2425
        %v2459 = vmul.f32 %v2411, %v2429
        %v2460 = vmul.f32 %v2403, %v2433
        %v2461 = vmul.f32 %v2395, %v2437
        %v2462 = vmul.f32 %v2420, %v2425
        %v2463 = vmul.f32 %v2412, %v2429
        %v2464 = vmul.f32 %v2404, %v2433
        %v2465 = vmul.f32 %v2396, %v2437
        %v2466 = vmul.f32 %v2421, %v2425
        %v2467 = vmul.f32 %v2413, %v2429
        %v2468 = vmul.f32 %v2405, %v2433
        %v2469 = vmul.f32 %v2397, %v2437
        %v2470 = vadd.f32 %v2149, %v2438
        %v2471 = vadd.f32 %v2150, %v2439
        %v2472 = vadd.f32 %v2151, %v2440
        %v2473 = vadd.f32 %v2152, %v2441
        %v2474 = vadd.f32 %v2153, %v2442
        %v2475 = vadd.f32 %v2154, %v2443
        %v2476 = vadd.f32 %v2155, %v2444
        %v2477 = vadd.f32 %v2156, %v2445
        %v2478 = vadd.f32 %v2157, %v2446
        %v2479 = vadd.f32 %v2158, %v2447
        %v2480 = vadd.f32 %v2159, %v2448
        %v2481 = vadd.f32 %v2160, %v2449
        %v2482 = vadd.f32 %v2161, %v2450
        %v2483 = vadd.f32 %v2162, %v2451
        %v2484 = vadd.f32 %v2163, %v2452
        %v2485 = vadd.f32 %v2164, %v2453
        %v2486 = vadd.f32 %v2165, %v2454
        %v2487 = vadd.f32 %v2166, %v2455
        %v2488 = vadd.f32 %v2167, %v2456
        %v2489 = vadd.f32 %v2168, %v2457
        %v2490 = vadd.f32 %v2169, %v2458
        %v2491 = vadd.f32 %v2170, %v2459
        %v2492 = vadd.f32 %v2171, %v2460
        %v2493 = vadd.f32 %v2172, %v2461
        %v2494 = vadd.f32 %v2173, %v2462
        %v2495 = vadd.f32 %v2174, %v2463
        %v2496 = vadd.f32 %v2175, %v2464
        %v2497 = vadd.f32 %v2176, %v2465
        %v2498 = vadd.f32 %v2177, %v2466
        %v2499 = vadd.f32 %v2178, %v2467
        %v2500 = vadd.f32 %v2179, %v2468
        %v2501 = vadd.f32 %v2180, %v2469
        %v2502 = vlaneseq
        %v2503 = vshrl.u32 %v2502, 7
        %v2504 = vsub.s32 7, %v2503
        %v2505 = vrot.slane %v1192, %v2504
        %v2506 = vlaneseq
        %v2507 = vshrl.u32 %v2506, 7
        %v2508 = vsub.s32 7, %v2507
        %v2509 = vrot.slane %v1193, %v2508
        %v2510 = vlaneseq
        %v2511 = vshrl.u32 %v2510, 7
        %v2512 = vsub.s32 7, %v2511
        %v2513 = vrot.slane %v1194, %v2512
        %v2514 = vlaneseq
        %v2515 = vshrl.u32 %v2514, 7
        %v2516 = vsub.s32 7, %v2515
        %v2517 = vrot.slane %v1195, %v2516
        %v2518 = vmul.f32 %v2294, %v2505
        %v2519 = vmul.f32 %v2295, %v2509
        %v2520 = vmul.f32 %v2296, %v2513
        %v2521 = vmul.f32 %v2297, %v2517
        %v2522 = vmul.f32 %v2298, %v2505
        %v2523 = vmul.f32 %v2299, %v2509
        %v2524 = vmul.f32 %v2300, %v2513
        %v2525 = vmul.f32 %v2301, %v2517
        %v2526 = vmul.f32 %v2302, %v2505
        %v2527 = vmul.f32 %v2303, %v2509
        %v2528 = vmul.f32 %v2304, %v2513
        %v2529 = vmul.f32 %v2305, %v2517
        %v2530 = vmul.f32 %v2306, %v2505
        %v2531 = vmul.f32 %v2307, %v2509
        %v2532 = vmul.f32 %v2308, %v2513
        %v2533 = vmul.f32 %v2309, %v2517
        %v2534 = vmul.f32 %v2310, %v2505
        %v2535 = vmul.f32 %v2311, %v2509
        %v2536 = vmul.f32 %v2312, %v2513
        %v2537 = vmul.f32 %v2313, %v2517
        %v2538 = vmul.f32 %v2314, %v2505
        %v2539 = vmul.f32 %v2315, %v2509
        %v2540 = vmul.f32 %v2316, %v2513
        %v2541 = vmul.f32 %v2317, %v2517
        %v2542 = vmul.f32 %v2318, %v2505
        %v2543 = vmul.f32 %v2319, %v2509
        %v2544 = vmul.f32 %v2320, %v2513
        %v2545 = vmul.f32 %v2321, %v2517
        %v2546 = vmul.f32 %v2322, %v2505
        %v2547 = vmul.f32 %v2323, %v2509
        %v2548 = vmul.f32 %v2324, %v2513
        %v2549 = vmul.f32 %v2325, %v2517
        %v2550 = vadd.f32 %v2470, %v2518
        %v2551 = vadd.f32 %v2471, %v2519
        %v2552 = vadd.f32 %v2472, %v2520
        %v2553 = vadd.f32 %v2473, %v2521
        %v2554 = vadd.f32 %v2474, %v2522
        %v2555 = vadd.f32 %v2475, %v2523
        %v2556 = vadd.f32 %v2476, %v2524
        %v2557 = vadd.f32 %v2477, %v2525
        %v2558 = vadd.f32 %v2478, %v2526
        %v2559 = vadd.f32 %v2479, %v2527
        %v2560 = vadd.f32 %v2480, %v2528
        %v2561 = vadd.f32 %v2481, %v2529
        %v2562 = vadd.f32 %v2482, %v2530
        %v2563 = vadd.f32 %v2483, %v2531
        %v2564 = vadd.f32 %v2484, %v2532
        %v2565 = vadd.f32 %v2485, %v2533
        %v2566 = vadd.f32 %v2486, %v2534
        %v2567 = vadd.f32 %v2487, %v2535
        %v2568 = vadd.f32 %v2488, %v2536
        %v2569 = vadd.f32 %v2489, %v2537
        %v2570 = vadd.f32 %v2490, %v2538
        %v2571 = vadd.f32 %v2491, %v2539
        %v2572 = vadd.f32 %v2492, %v2540
        %v2573 = vadd.f32 %v2493, %v2541
        %v2574 = vadd.f32 %v2494, %v2542
        %v2575 = vadd.f32 %v2495, %v2543
        %v2576 = vadd.f32 %v2496, %v2544
        %v2577 = vadd.f32 %v2497, %v2545
        %v2578 = vadd.f32 %v2498, %v2546
        %v2579 = vadd.f32 %v2499, %v2547
        %v2580 = vadd.f32 %v2500, %v2548
        %v2581 = vadd.f32 %v2501, %v2549
        %2582 = vrot.lane.b32.xlu0 %v2294, 96
        %v2583 = vpop.permute.xlu0 %2582
        %2584 = vrot.lane.b32.xlu0 %v2298, 96
        %v2585 = vpop.permute.xlu0 %2584
        %2586 = vrot.lane.b32.xlu0 %v2302, 96
        %v2587 = vpop.permute.xlu0 %2586
        %2588 = vrot.lane.b32.xlu0 %v2306, 96
        %v2589 = vpop.permute.xlu0 %2588
        %2590 = vrot.lane.b32.xlu0 %v2310, 96
        %v2591 = vpop.permute.xlu0 %2590
        %2592 = vrot.lane.b32.xlu0 %v2314, 96
        %v2593 = vpop.permute.xlu0 %2592
        %2594 = vrot.lane.b32.xlu0 %v2318, 96
        %v2595 = vpop.permute.xlu0 %2594
        %2596 = vrot.lane.b32.xlu0 %v2322, 96
        %v2597 = vpop.permute.xlu0 %2596
        %2598 = vrot.lane.b32.xlu0 %v2295, 96
        %v2599 = vpop.permute.xlu0 %2598
        %2600 = vrot.lane.b32.xlu0 %v2299, 96
        %v2601 = vpop.permute.xlu0 %2600
        %2602 = vrot.lane.b32.xlu0 %v2303, 96
        %v2603 = vpop.permute.xlu0 %2602
        %2604 = vrot.lane.b32.xlu0 %v2307, 96
        %v2605 = vpop.permute.xlu0 %2604
        %2606 = vrot.lane.b32.xlu0 %v2311, 96
        %v2607 = vpop.permute.xlu0 %2606
        %2608 = vrot.lane.b32.xlu0 %v2315, 96
        %v2609 = vpop.permute.xlu0 %2608
        %2610 = vrot.lane.b32.xlu0 %v2319, 96
        %v2611 = vpop.permute.xlu0 %2610
        %2612 = vrot.lane.b32.xlu0 %v2323, 96
        %v2613 = vpop.permute.xlu0 %2612
        %2614 = vrot.lane.b32.xlu0 %v2296, 96
        %v2615 = vpop.permute.xlu0 %2614
        %2616 = vrot.lane.b32.xlu0 %v2300, 96
        %v2617 = vpop.permute.xlu0 %2616
        %2618 = vrot.lane.b32.xlu0 %v2304, 96
        %v2619 = vpop.permute.xlu0 %2618
        %2620 = vrot.lane.b32.xlu0 %v2308, 96
        %v2621 = vpop.permute.xlu0 %2620
        %2622 = vrot.lane.b32.xlu0 %v2312, 96
        %v2623 = vpop.permute.xlu0 %2622
        %2624 = vrot.lane.b32.xlu0 %v2316, 96
        %v2625 = vpop.permute.xlu0 %2624
        %2626 = vrot.lane.b32.xlu0 %v2320, 96
        %v2627 = vpop.permute.xlu0 %2626
        %2628 = vrot.lane.b32.xlu0 %v2324, 96
        %v2629 = vpop.permute.xlu0 %2628
        %2630 = vrot.lane.b32.xlu0 %v2297, 96
        %v2631 = vpop.permute.xlu0 %2630
        %2632 = vrot.lane.b32.xlu0 %v2301, 96
        %v2633 = vpop.permute.xlu0 %2632
        %2634 = vrot.lane.b32.xlu0 %v2305, 96
        %v2635 = vpop.permute.xlu0 %2634
        %2636 = vrot.lane.b32.xlu0 %v2309, 96
        %v2637 = vpop.permute.xlu0 %2636
        %2638 = vrot.lane.b32.xlu0 %v2313, 96
        %v2639 = vpop.permute.xlu0 %2638
        %2640 = vrot.lane.b32.xlu0 %v2317, 96
        %v2641 = vpop.permute.xlu0 %2640
        %2642 = vrot.lane.b32.xlu0 %v2321, 96
        %v2643 = vpop.permute.xlu0 %2642
        %2644 = vrot.lane.b32.xlu0 %v2325, 96
        %v2645 = vpop.permute.xlu0 %2644
        %v2646 = vsel %vm1636, %v2615, %v2631
        %v2647 = vsel %vm1636, %v2617, %v2633
        %v2648 = vsel %vm1636, %v2619, %v2635
        %v2649 = vsel %vm1636, %v2621, %v2637
        %v2650 = vsel %vm1636, %v2623, %v2639
        %v2651 = vsel %vm1636, %v2625, %v2641
        %v2652 = vsel %vm1636, %v2627, %v2643
        %v2653 = vsel %vm1636, %v2629, %v2645
        %v2654 = vsel %vm1636, %v2599, %v2615
        %v2655 = vsel %vm1636, %v2601, %v2617
        %v2656 = vsel %vm1636, %v2603, %v2619
        %v2657 = vsel %vm1636, %v2605, %v2621
        %v2658 = vsel %vm1636, %v2607, %v2623
        %v2659 = vsel %vm1636, %v2609, %v2625
        %v2660 = vsel %vm1636, %v2611, %v2627
        %v2661 = vsel %vm1636, %v2613, %v2629
        %v2662 = vsel %vm1636, %v2583, %v2599
        %v2663 = vsel %vm1636, %v2585, %v2601
        %v2664 = vsel %vm1636, %v2587, %v2603
        %v2665 = vsel %vm1636, %v2589, %v2605
        %v2666 = vsel %vm1636, %v2591, %v2607
        %v2667 = vsel %vm1636, %v2593, %v2609
        %v2668 = vsel %vm1636, %v2595, %v2611
        %v2669 = vsel %vm1636, %v2597, %v2613
        %v2670 = vsel %vm1636, %v2631, %v2583
        %v2671 = vsel %vm1636, %v2633, %v2585
        %v2672 = vsel %vm1636, %v2635, %v2587
        %v2673 = vsel %vm1636, %v2637, %v2589
        %v2674 = vsel %vm1636, %v2639, %v2591
        %v2675 = vsel %vm1636, %v2641, %v2593
        %v2676 = vsel %vm1636, %v2643, %v2595
        %v2677 = vsel %vm1636, %v2645, %v2597
        %v2678 = vlaneseq
        %v2679 = vshrl.u32 %v2678, 7
        %v2680 = vsub.s32 0, %v2679
        %v2681 = vrot.slane %v1196, %v2680
        %v2682 = vlaneseq
        %v2683 = vshrl.u32 %v2682, 7
        %v2684 = vsub.s32 0, %v2683
        %v2685 = vrot.slane %v1197, %v2684
        %v2686 = vlaneseq
        %v2687 = vshrl.u32 %v2686, 7
        %v2688 = vsub.s32 0, %v2687
        %v2689 = vrot.slane %v1198, %v2688
        %v2690 = vlaneseq
        %v2691 = vshrl.u32 %v2690, 7
        %v2692 = vsub.s32 0, %v2691
        %v2693 = vrot.slane %v1199, %v2692
        %v2694 = vmul.f32 %v2662, %v2681
        %v2695 = vmul.f32 %v2654, %v2685
        %v2696 = vmul.f32 %v2646, %v2689
        %v2697 = vmul.f32 %v2670, %v2693
        %v2698 = vmul.f32 %v2663, %v2681
        %v2699 = vmul.f32 %v2655, %v2685
        %v2700 = vmul.f32 %v2647, %v2689
        %v2701 = vmul.f32 %v2671, %v2693
        %v2702 = vmul.f32 %v2664, %v2681
        %v2703 = vmul.f32 %v2656, %v2685
        %v2704 = vmul.f32 %v2648, %v2689
        %v2705 = vmul.f32 %v2672, %v2693
        %v2706 = vmul.f32 %v2665, %v2681
        %v2707 = vmul.f32 %v2657, %v2685
        %v2708 = vmul.f32 %v2649, %v2689
        %v2709 = vmul.f32 %v2673, %v2693
        %v2710 = vmul.f32 %v2666, %v2681
        %v2711 = vmul.f32 %v2658, %v2685
        %v2712 = vmul.f32 %v2650, %v2689
        %v2713 = vmul.f32 %v2674, %v2693
        %v2714 = vmul.f32 %v2667, %v2681
        %v2715 = vmul.f32 %v2659, %v2685
        %v2716 = vmul.f32 %v2651, %v2689
        %v2717 = vmul.f32 %v2675, %v2693
        %v2718 = vmul.f32 %v2668, %v2681
        %v2719 = vmul.f32 %v2660, %v2685
        %v2720 = vmul.f32 %v2652, %v2689
        %v2721 = vmul.f32 %v2676, %v2693
        %v2722 = vmul.f32 %v2669, %v2681
        %v2723 = vmul.f32 %v2661, %v2685
        %v2724 = vmul.f32 %v2653, %v2689
        %v2725 = vmul.f32 %v2677, %v2693
        %v2726 = vadd.f32 %v2550, %v2694
        %v2727 = vadd.f32 %v2551, %v2695
        %v2728 = vadd.f32 %v2552, %v2696
        %v2729 = vadd.f32 %v2553, %v2697
        %v2730 = vadd.f32 %v2554, %v2698
        %v2731 = vadd.f32 %v2555, %v2699
        %v2732 = vadd.f32 %v2556, %v2700
        %v2733 = vadd.f32 %v2557, %v2701
        %v2734 = vadd.f32 %v2558, %v2702
        %v2735 = vadd.f32 %v2559, %v2703
        %v2736 = vadd.f32 %v2560, %v2704
        %v2737 = vadd.f32 %v2561, %v2705
        %v2738 = vadd.f32 %v2562, %v2706
        %v2739 = vadd.f32 %v2563, %v2707
        %v2740 = vadd.f32 %v2564, %v2708
        %v2741 = vadd.f32 %v2565, %v2709
        %v2742 = vadd.f32 %v2566, %v2710
        %v2743 = vadd.f32 %v2567, %v2711
        %v2744 = vadd.f32 %v2568, %v2712
        %v2745 = vadd.f32 %v2569, %v2713
        %v2746 = vadd.f32 %v2570, %v2714
        %v2747 = vadd.f32 %v2571, %v2715
        %v2748 = vadd.f32 %v2572, %v2716
        %v2749 = vadd.f32 %v2573, %v2717
        %v2750 = vadd.f32 %v2574, %v2718
        %v2751 = vadd.f32 %v2575, %v2719
        %v2752 = vadd.f32 %v2576, %v2720
        %v2753 = vadd.f32 %v2577, %v2721
        %v2754 = vadd.f32 %v2578, %v2722
        %v2755 = vadd.f32 %v2579, %v2723
        %v2756 = vadd.f32 %v2580, %v2724
        %v2757 = vadd.f32 %v2581, %v2725
        %v2758 = vld [vmem:[%s4] sm:$0xf]
        %v2760 = vlaneseq
        %v2761 = vshrl.u32 %v2760, 7
        %v2762 = vsub.s32 0, %v2761
        %v2763 = vrot.slane %v2758, %v2762
        %v2764 = vlaneseq
        %v2765 = vshrl.u32 %v2764, 7
        %v2766 = vsub.s32 1, %v2765
        %v2767 = vrot.slane %v2758, %v2766
        %v2768 = vlaneseq
        %v2769 = vshrl.u32 %v2768, 7
        %v2770 = vsub.s32 2, %v2769
        %v2771 = vrot.slane %v2758, %v2770
        %v2772 = vlaneseq
        %v2773 = vshrl.u32 %v2772, 7
        %v2774 = vsub.s32 3, %v2773
        %v2775 = vrot.slane %v2758, %v2774
        %v2780 = vadd.f32 %v2726, %v2763
        %v2781 = vadd.f32 %v2727, %v2767
        %v2782 = vadd.f32 %v2728, %v2771
        %v2783 = vadd.f32 %v2729, %v2775
        %v2784 = vadd.f32 %v2730, %v2763
        %v2785 = vadd.f32 %v2731, %v2767
        %v2786 = vadd.f32 %v2732, %v2771
        %v2787 = vadd.f32 %v2733, %v2775
        %v2788 = vadd.f32 %v2734, %v2763
        %v2789 = vadd.f32 %v2735, %v2767
        %v2790 = vadd.f32 %v2736, %v2771
        %v2791 = vadd.f32 %v2737, %v2775
        %v2792 = vadd.f32 %v2738, %v2763
        %v2793 = vadd.f32 %v2739, %v2767
        %v2794 = vadd.f32 %v2740, %v2771
        %v2795 = vadd.f32 %v2741, %v2775
        %v2796 = vadd.f32 %v2742, %v2763
        %v2797 = vadd.f32 %v2743, %v2767
        %v2798 = vadd.f32 %v2744, %v2771
        %v2799 = vadd.f32 %v2745, %v2775
        %v2800 = vadd.f32 %v2746, %v2763
        %v2801 = vadd.f32 %v2747, %v2767
        %v2802 = vadd.f32 %v2748, %v2771
        %v2803 = vadd.f32 %v2749, %v2775
        %v2804 = vadd.f32 %v2750, %v2763
        %v2805 = vadd.f32 %v2751, %v2767
        %v2806 = vadd.f32 %v2752, %v2771
        %v2807 = vadd.f32 %v2753, %v2775
        %v2808 = vadd.f32 %v2754, %v2763
        %v2809 = vadd.f32 %v2755, %v2767
        %v2810 = vadd.f32 %v2756, %v2771
        %v2811 = vadd.f32 %v2757, %v2775
        %v2812 = vmax.f32 %v2780, 0.0
        %v2813 = vmax.f32 %v2781, 0.0
        %v2814 = vmax.f32 %v2782, 0.0
        %v2815 = vmax.f32 %v2783, 0.0
        %v2816 = vmax.f32 %v2784, 0.0
        %v2817 = vmax.f32 %v2785, 0.0
        %v2818 = vmax.f32 %v2786, 0.0
        %v2819 = vmax.f32 %v2787, 0.0
        %v2820 = vmax.f32 %v2788, 0.0
        %v2821 = vmax.f32 %v2789, 0.0
        %v2822 = vmax.f32 %v2790, 0.0
        %v2823 = vmax.f32 %v2791, 0.0
        %v2824 = vmax.f32 %v2792, 0.0
        %v2825 = vmax.f32 %v2793, 0.0
        %v2826 = vmax.f32 %v2794, 0.0
        %v2827 = vmax.f32 %v2795, 0.0
        %v2828 = vmax.f32 %v2796, 0.0
        %v2829 = vmax.f32 %v2797, 0.0
        %v2830 = vmax.f32 %v2798, 0.0
        %v2831 = vmax.f32 %v2799, 0.0
        %v2832 = vmax.f32 %v2800, 0.0
        %v2833 = vmax.f32 %v2801, 0.0
        %v2834 = vmax.f32 %v2802, 0.0
        %v2835 = vmax.f32 %v2803, 0.0
        %v2836 = vmax.f32 %v2804, 0.0
        %v2837 = vmax.f32 %v2805, 0.0
        %v2838 = vmax.f32 %v2806, 0.0
        %v2839 = vmax.f32 %v2807, 0.0
        %v2840 = vmax.f32 %v2808, 0.0
        %v2841 = vmax.f32 %v2809, 0.0
        %v2842 = vmax.f32 %v2810, 0.0
        %v2843 = vmax.f32 %v2811, 0.0
        %v2844 = vadd.f32 %v2812, %v2816
        %v2845 = vrot.slane %v2844, 4
        %v2846 = vadd.f32 %v2844, %v2845
        %v2847 = vrot.slane %v2846, 2
        %v2848 = vadd.f32 %v2846, %v2847
        %v2849 = vrot.slane %v2848, 1
        %v2850 = vadd.f32 %v2848, %v2849
        %v2851 = vadd.f32 %v2813, %v2817
        %v2852 = vrot.slane %v2851, 4
        %v2853 = vadd.f32 %v2851, %v2852
        %v2854 = vrot.slane %v2853, 2
        %v2855 = vadd.f32 %v2853, %v2854
        %v2856 = vrot.slane %v2855, 1
        %v2857 = vadd.f32 %v2855, %v2856
        %v2858 = vadd.f32 %v2814, %v2818
        %v2859 = vrot.slane %v2858, 4
        %v2860 = vadd.f32 %v2858, %v2859
        %v2861 = vrot.slane %v2860, 2
        %v2862 = vadd.f32 %v2860, %v2861
        %v2863 = vrot.slane %v2862, 1
        %v2864 = vadd.f32 %v2862, %v2863
        %v2865 = vadd.f32 %v2815, %v2819
        %v2866 = vrot.slane %v2865, 4
        %v2867 = vadd.f32 %v2865, %v2866
        %v2868 = vrot.slane %v2867, 2
        %v2869 = vadd.f32 %v2867, %v2868
        %v2870 = vrot.slane %v2869, 1
        %v2871 = vadd.f32 %v2869, %v2870
        %v2872 = vadd.f32 %v2820, %v2824
        %v2873 = vrot.slane %v2872, 4
        %v2874 = vadd.f32 %v2872, %v2873
        %v2875 = vrot.slane %v2874, 2
        %v2876 = vadd.f32 %v2874, %v2875
        %v2877 = vrot.slane %v2876, 1
        %v2878 = vadd.f32 %v2876, %v2877
        %v2879 = vadd.f32 %v2821, %v2825
        %v2880 = vrot.slane %v2879, 4
        %v2881 = vadd.f32 %v2879, %v2880
        %v2882 = vrot.slane %v2881, 2
        %v2883 = vadd.f32 %v2881, %v2882
        %v2884 = vrot.slane %v2883, 1
        %v2885 = vadd.f32 %v2883, %v2884
        %v2886 = vadd.f32 %v2822, %v2826
        %v2887 = vrot.slane %v2886, 4
        %v2888 = vadd.f32 %v2886, %v2887
        %v2889 = vrot.slane %v2888, 2
        %v2890 = vadd.f32 %v2888, %v2889
        %v2891 = vrot.slane %v2890, 1
        %v2892 = vadd.f32 %v2890, %v2891
        %v2893 = vadd.f32 %v2823, %v2827
        %v2894 = vrot.slane %v2893, 4
        %v2895 = vadd.f32 %v2893, %v2894
        %v2896 = vrot.slane %v2895, 2
        %v2897 = vadd.f32 %v2895, %v2896
        %v2898 = vrot.slane %v2897, 1
        %v2899 = vadd.f32 %v2897, %v2898
        %v2900 = vadd.f32 %v2828, %v2832
        %v2901 = vrot.slane %v2900, 4
        %v2902 = vadd.f32 %v2900, %v2901
        %v2903 = vrot.slane %v2902, 2
        %v2904 = vadd.f32 %v2902, %v2903
        %v2905 = vrot.slane %v2904, 1
        %v2906 = vadd.f32 %v2904, %v2905
        %v2907 = vadd.f32 %v2829, %v2833
        %v2908 = vrot.slane %v2907, 4
        %v2909 = vadd.f32 %v2907, %v2908
        %v2910 = vrot.slane %v2909, 2
        %v2911 = vadd.f32 %v2909, %v2910
        %v2912 = vrot.slane %v2911, 1
        %v2913 = vadd.f32 %v2911, %v2912
        %v2914 = vadd.f32 %v2830, %v2834
        %v2915 = vrot.slane %v2914, 4
        %v2916 = vadd.f32 %v2914, %v2915
        %v2917 = vrot.slane %v2916, 2
        %v2918 = vadd.f32 %v2916, %v2917
        %v2919 = vrot.slane %v2918, 1
        %v2920 = vadd.f32 %v2918, %v2919
        %v2921 = vadd.f32 %v2831, %v2835
        %v2922 = vrot.slane %v2921, 4
        %v2923 = vadd.f32 %v2921, %v2922
        %v2924 = vrot.slane %v2923, 2
        %v2925 = vadd.f32 %v2923, %v2924
        %v2926 = vrot.slane %v2925, 1
        %v2927 = vadd.f32 %v2925, %v2926
        %v2928 = vadd.f32 %v2836, %v2840
        %v2929 = vrot.slane %v2928, 4
        %v2930 = vadd.f32 %v2928, %v2929
        %v2931 = vrot.slane %v2930, 2
        %v2932 = vadd.f32 %v2930, %v2931
        %v2933 = vrot.slane %v2932, 1
        %v2934 = vadd.f32 %v2932, %v2933
        %v2935 = vadd.f32 %v2837, %v2841
        %v2936 = vrot.slane %v2935, 4
        %v2937 = vadd.f32 %v2935, %v2936
        %v2938 = vrot.slane %v2937, 2
        %v2939 = vadd.f32 %v2937, %v2938
        %v2940 = vrot.slane %v2939, 1
        %v2941 = vadd.f32 %v2939, %v2940
        %v2942 = vadd.f32 %v2838, %v2842
        %v2943 = vrot.slane %v2942, 4
        %v2944 = vadd.f32 %v2942, %v2943
        %v2945 = vrot.slane %v2944, 2
        %v2946 = vadd.f32 %v2944, %v2945
        %v2947 = vrot.slane %v2946, 1
        %v2948 = vadd.f32 %v2946, %v2947
        %v2949 = vadd.f32 %v2839, %v2843
        %v2950 = vrot.slane %v2949, 4
        %v2951 = vadd.f32 %v2949, %v2950
        %v2952 = vrot.slane %v2951, 2
        %v2953 = vadd.f32 %v2951, %v2952
        %v2954 = vrot.slane %v2953, 1
        %v2955 = vadd.f32 %v2953, %v2954
        %v2956 = vrcp.pop 16.0
        %v2957 = vmul.f32 %v2850, %v2956
        %v2958 = vmul.f32 %v2857, %v2956
        %v2959 = vmul.f32 %v2864, %v2956
        %v2960 = vmul.f32 %v2871, %v2956
        %v2961 = vmul.f32 %v2878, %v2956
        %v2962 = vmul.f32 %v2885, %v2956
        %v2963 = vmul.f32 %v2892, %v2956
        %v2964 = vmul.f32 %v2899, %v2956
        %v2965 = vmul.f32 %v2906, %v2956
        %v2966 = vmul.f32 %v2913, %v2956
        %v2967 = vmul.f32 %v2920, %v2956
        %v2968 = vmul.f32 %v2927, %v2956
        %v2969 = vmul.f32 %v2934, %v2956
        %v2970 = vmul.f32 %v2941, %v2956
        %v2971 = vmul.f32 %v2948, %v2956
        %v2972 = vmul.f32 %v2955, %v2956
        %v2973 = vld [vmem:[%s5] sm:$0xff]
        %v2974 = vld [vmem:[%s5 + $0x8] sm:$0xff]
        %v2975 = vld [vmem:[%s5 + $0x10] sm:$0xff]
        %v2976 = vld [vmem:[%s5 + $0x18] sm:$0xff]
        %v2977 = vld [vmem:[%s5 + $0x20] sm:$0xff]
        %v2978 = vld [vmem:[%s5 + $0x28] sm:$0xff]
        %v2979 = vld [vmem:[%s5 + $0x30] sm:$0xff]
        %v2980 = vld [vmem:[%s5 + $0x38] sm:$0xff]
        %v2981 = vld [vmem:[%s5 + $0x40] sm:$0xff]
        %v2982 = vld [vmem:[%s5 + $0x48] sm:$0xff]
        %v2983 = vld [vmem:[%s5 + $0x50] sm:$0xff]
        %v2984 = vld [vmem:[%s5 + $0x58] sm:$0xff]
        %v2985 = vld [vmem:[%s5 + $0x60] sm:$0xff]
        %v2986 = vld [vmem:[%s5 + $0x68] sm:$0xff]
        %v2987 = vld [vmem:[%s5 + $0x70] sm:$0xff]
        %v2988 = vld [vmem:[%s5 + $0x78] sm:$0xff]
        %v2989 = vld [vmem:[%s5 + $0x80] sm:$0xff]
        %v2990 = vld [vmem:[%s5 + $0x88] sm:$0xff]
        %v2991 = vld [vmem:[%s5 + $0x90] sm:$0xff]
        %v2992 = vld [vmem:[%s5 + $0x98] sm:$0xff]
        %v2993 = vld [vmem:[%s5 + $0xa0] sm:$0xff]
        %v2994 = vld [vmem:[%s5 + $0xa8] sm:$0xff]
        %v2995 = vld [vmem:[%s5 + $0xb0] sm:$0xff]
        %v2996 = vld [vmem:[%s5 + $0xb8] sm:$0xff]
        %v2997 = vld [vmem:[%s5 + $0xc0] sm:$0xff]
        %v2998 = vld [vmem:[%s5 + $0xc8] sm:$0xff]
        %v2999 = vld [vmem:[%s5 + $0xd0] sm:$0xff]
        %v3000 = vld [vmem:[%s5 + $0xd8] sm:$0xff]
        %v3001 = vld [vmem:[%s5 + $0xe0] sm:$0xff]
        %v3002 = vld [vmem:[%s5 + $0xe8] sm:$0xff]
        %v3003 = vld [vmem:[%s5 + $0xf0] sm:$0xff]
        %v3004 = vld [vmem:[%s5 + $0xf8] sm:$0xff]
        %v3005 = vld [vmem:[%s5 + $0x100] sm:$0xff]
        %v3006 = vld [vmem:[%s5 + $0x108] sm:$0xff]
        %v3007 = vld [vmem:[%s5 + $0x110] sm:$0xff]
        %v3008 = vld [vmem:[%s5 + $0x118] sm:$0xff]
        %v3009 = vld [vmem:[%s5 + $0x120] sm:$0xff]
        %v3010 = vld [vmem:[%s5 + $0x128] sm:$0xff]
        %v3011 = vld [vmem:[%s5 + $0x130] sm:$0xff]
        %v3012 = vld [vmem:[%s5 + $0x138] sm:$0xff]
        %v3013 = vld [vmem:[%s5 + $0x140] sm:$0xff]
        %v3014 = vld [vmem:[%s5 + $0x148] sm:$0xff]
        %v3015 = vld [vmem:[%s5 + $0x150] sm:$0xff]
        %v3016 = vld [vmem:[%s5 + $0x158] sm:$0xff]
        %v3017 = vld [vmem:[%s5 + $0x160] sm:$0xff]
        %v3018 = vld [vmem:[%s5 + $0x168] sm:$0xff]
        %v3019 = vld [vmem:[%s5 + $0x170] sm:$0xff]
        %v3020 = vld [vmem:[%s5 + $0x178] sm:$0xff]
        %v3021 = vld [vmem:[%s5 + $0x180] sm:$0xff]
        %v3022 = vld [vmem:[%s5 + $0x188] sm:$0xff]
        %v3023 = vld [vmem:[%s5 + $0x190] sm:$0xff]
        %v3024 = vld [vmem:[%s5 + $0x198] sm:$0xff]
        %v3025 = vld [vmem:[%s5 + $0x1a0] sm:$0xff]
        %v3026 = vld [vmem:[%s5 + $0x1a8] sm:$0xff]
        %v3027 = vld [vmem:[%s5 + $0x1b0] sm:$0xff]
        %v3028 = vld [vmem:[%s5 + $0x1b8] sm:$0xff]
        %v3029 = vld [vmem:[%s5 + $0x1c0] sm:$0xff]
        %v3030 = vld [vmem:[%s5 + $0x1c8] sm:$0xff]
        %v3031 = vld [vmem:[%s5 + $0x1d0] sm:$0xff]
        %v3032 = vld [vmem:[%s5 + $0x1d8] sm:$0xff]
        %v3033 = vld [vmem:[%s5 + $0x1e0] sm:$0xff]
        %v3034 = vld [vmem:[%s5 + $0x1e8] sm:$0xff]
        %v3035 = vld [vmem:[%s5 + $0x1f0] sm:$0xff]
        %v3036 = vld [vmem:[%s5 + $0x1f8] sm:$0xff]
        %v3037 = vld [vmem:[%s6] sm:$0x1]
        %v3039 = vlaneseq
        %v3040 = vshrl.u32 %v3039, 7
        %v3041 = vsub.s32 0, %v3040
        %v3042 = vrot.slane %v3037, %v3041
        %vm3060 = vcmask 1041409
        %v3061 = vsel %vm3060, %v2961, %v2957
        %vm3062 = vcmask 1042434
        %v3063 = vsel %vm3062, %v2965, %v3061
        %vm3064 = vcmask 1043459
        %v3065 = vsel %vm3064, %v2969, %v3063
        %v3066 = vsel %vm3060, %v2962, %v2958
        %v3067 = vsel %vm3062, %v2966, %v3066
        %v3068 = vsel %vm3064, %v2970, %v3067
        %v3069 = vsel %vm3060, %v2963, %v2959
        %v3070 = vsel %vm3062, %v2967, %v3069
        %v3071 = vsel %vm3064, %v2971, %v3070
        %v3072 = vsel %vm3060, %v2964, %v2960
        %v3073 = vsel %vm3062, %v2968, %v3072
        %v3074 = vsel %vm3064, %v2972, %v3073
        %3079 = vmatprep.subr.mxu0 0.0
        %3080 = vmatpush1.msra.mxu0 %v2973
        %3081 = vmatprep.subr.mxu0 0.0
        %3082 = vmatpush1.msra.mxu0 %v2974
        %3083 = vmatprep.subr.mxu0 0.0
        %3084 = vmatpush1.msra.mxu0 %v2975
        %3085 = vmatprep.subr.mxu0 0.0
        %3086 = vmatpush1.msra.mxu0 %v2976
        %3087 = vmatprep.subr.mxu0 0.0
        %3088 = vmatpush1.msra.mxu0 %v2977
        %3089 = vmatprep.subr.mxu0 0.0
        %3090 = vmatpush1.msra.mxu0 %v2978
        %3091 = vmatprep.subr.mxu0 0.0
        %3092 = vmatpush1.msra.mxu0 %v2979
        %3093 = vmatprep.subr.mxu0 0.0
        %3094 = vmatpush1.msra.mxu0 %v2980
        %3095 = vmatprep.subr.mxu0 0.0
        %3096 = vmatpush1.msra.mxu0 %v2981
        %3097 = vmatprep.subr.mxu0 0.0
        %3098 = vmatpush1.msra.mxu0 %v2982
        %3099 = vmatprep.subr.mxu0 0.0
        %3100 = vmatpush1.msra.mxu0 %v2983
        %3101 = vmatprep.subr.mxu0 0.0
        %3102 = vmatpush1.msra.mxu0 %v2984
        %3103 = vmatprep.subr.mxu0 0.0
        %3104 = vmatpush1.msra.mxu0 %v2985
        %3105 = vmatprep.subr.mxu0 0.0
        %3106 = vmatpush1.msra.mxu0 %v2986
        %3107 = vmatprep.subr.mxu0 0.0
        %3108 = vmatpush1.msra.mxu0 %v2987
        %3109 = vmatprep.subr.mxu0 0.0
        %3110 = vmatpush1.msra.mxu0 %v2988
        %3111 = vmatprep.subr.mxu0 0.0
        %3112 = vmatpush1.msra.mxu0 %v2989
        %3113 = vmatprep.subr.mxu0 0.0
        %3114 = vmatpush1.msra.mxu0 %v2990
        %3115 = vmatprep.subr.mxu0 0.0
        %3116 = vmatpush1.msra.mxu0 %v2991
        %3117 = vmatprep.subr.mxu0 0.0
        %3118 = vmatpush1.msra.mxu0 %v2992
        %3119 = vmatprep.subr.mxu0 0.0
        %3120 = vmatpush1.msra.mxu0 %v2993
        %3121 = vmatprep.subr.mxu0 0.0
        %3122 = vmatpush1.msra.mxu0 %v2994
        %3123 = vmatprep.subr.mxu0 0.0
        %3124 = vmatpush1.msra.mxu0 %v2995
        %3125 = vmatprep.subr.mxu0 0.0
        %3126 = vmatpush1.msra.mxu0 %v2996
        %3127 = vmatprep.subr.mxu0 0.0
        %3128 = vmatpush1.msra.mxu0 %v2997
        %3129 = vmatprep.subr.mxu0 0.0
        %3130 = vmatpush1.msra.mxu0 %v2998
        %3131 = vmatprep.subr.mxu0 0.0
        %3132 = vmatpush1.msra.mxu0 %v2999
        %3133 = vmatprep.subr.mxu0 0.0
        %3134 = vmatpush1.msra.mxu0 %v3000
        %3135 = vmatprep.subr.mxu0 0.0
        %3136 = vmatpush1.msra.mxu0 %v3001
        %3137 = vmatprep.subr.mxu0 0.0
        %3138 = vmatpush1.msra.mxu0 %v3002
        %3139 = vmatprep.subr.mxu0 0.0
        %3140 = vmatpush1.msra.mxu0 %v3003
        %3141 = vmatprep.subr.mxu0 0.0
        %3142 = vmatpush1.msra.mxu0 %v3004
        %3143 = vmatprep.mubr.f32.mxu0 %v3068
        %3144 = vmatmul.mubr.f32.gmra.mrb[0].mxu0 %v3065
        %v3145 = vpop.f32.mrb[0].mxu0
        %v3146 = vadd.f32 %v3042, %v3145
        %v3147 = vpop.f32.mrb[0].mxu0
        %3148 = vdwg.mxu0
        %3149 = vmatprep.subr.mxu0 0.0
        %3150 = vmatpush1.msra.mxu0 %v3005
        %3151 = vmatprep.subr.mxu0 0.0
        %3152 = vmatpush1.msra.mxu0 %v3006
        %3153 = vmatprep.subr.mxu0 0.0
        %3154 = vmatpush1.msra.mxu0 %v3007
        %3155 = vmatprep.subr.mxu0 0.0
        %3156 = vmatpush1.msra.mxu0 %v3008
        %3157 = vmatprep.subr.mxu0 0.0
        %3158 = vmatpush1.msra.mxu0 %v3009
        %3159 = vmatprep.subr.mxu0 0.0
        %3160 = vmatpush1.msra.mxu0 %v3010
        %3161 = vmatprep.subr.mxu0 0.0
        %3162 = vmatpush1.msra.mxu0 %v3011
        %3163 = vmatprep.subr.mxu0 0.0
        %3164 = vmatpush1.msra.mxu0 %v3012
        %3165 = vmatprep.subr.mxu0 0.0
        %3166 = vmatpush1.msra.mxu0 %v3013
        %3167 = vmatprep.subr.mxu0 0.0
        %3168 = vmatpush1.msra.mxu0 %v3014
        %3169 = vmatprep.subr.mxu0 0.0
        %3170 = vmatpush1.msra.mxu0 %v3015
        %3171 = vmatprep.subr.mxu0 0.0
        %3172 = vmatpush1.msra.mxu0 %v3016
        %3173 = vmatprep.subr.mxu0 0.0
        %3174 = vmatpush1.msra.mxu0 %v3017
        %3175 = vmatprep.subr.mxu0 0.0
        %3176 = vmatpush1.msra.mxu0 %v3018
        %3177 = vmatprep.subr.mxu0 0.0
        %3178 = vmatpush1.msra.mxu0 %v3019
        %3179 = vmatprep.subr.mxu0 0.0
        %3180 = vmatpush1.msra.mxu0 %v3020
        %3181 = vmatprep.subr.mxu0 0.0
        %3182 = vmatpush1.msra.mxu0 %v3021
        %3183 = vmatprep.subr.mxu0 0.0
        %3184 = vmatpush1.msra.mxu0 %v3022
        %3185 = vmatprep.subr.mxu0 0.0
        %3186 = vmatpush1.msra.mxu0 %v3023
        %3187 = vmatprep.subr.mxu0 0.0
        %3188 = vmatpush1.msra.mxu0 %v3024
        %3189 = vmatprep.subr.mxu0 0.0
        %3190 = vmatpush1.msra.mxu0 %v3025
        %3191 = vmatprep.subr.mxu0 0.0
        %3192 = vmatpush1.msra.mxu0 %v3026
        %3193 = vmatprep.subr.mxu0 0.0
        %3194 = vmatpush1.msra.mxu0 %v3027
        %3195 = vmatprep.subr.mxu0 0.0
        %3196 = vmatpush1.msra.mxu0 %v3028
        %3197 = vmatprep.subr.mxu0 0.0
        %3198 = vmatpush1.msra.mxu0 %v3029
        %3199 = vmatprep.subr.mxu0 0.0
        %3200 = vmatpush1.msra.mxu0 %v3030
        %3201 = vmatprep.subr.mxu0 0.0
        %3202 = vmatpush1.msra.mxu0 %v3031
        %3203 = vmatprep.subr.mxu0 0.0
        %3204 = vmatpush1.msra.mxu0 %v3032
        %3205 = vmatprep.subr.mxu0 0.0
        %3206 = vmatpush1.msra.mxu0 %v3033
        %3207 = vmatprep.subr.mxu0 0.0
        %3208 = vmatpush1.msra.mxu0 %v3034
        %3209 = vmatprep.subr.mxu0 0.0
        %3210 = vmatpush1.msra.mxu0 %v3035
        %3211 = vmatprep.subr.mxu0 0.0
        %3212 = vmatpush1.msra.mxu0 %v3036
        %3213 = vmatprep.mubr.f32.mxu0 %v3074
        %3214 = vmatmul.mubr.f32.gmra.mrb[0].mxu0 %v3071
        %v3215 = vpop.f32.mrb[0].mxu0
        %v3216 = vadd.f32 %v3146, %v3215
        %v3217 = vpop.f32.mrb[0].mxu0
        %3218 = vdwg.mxu0
        %v3219 = vmax.f32 %v3216, 0.0
        %v3220 = vld [vmem:[%s7] sm:$0xff]
        %v3221 = vld [vmem:[%s8] sm:$0x1]
        %v3223 = vlaneseq
        %v3224 = vshrl.u32 %v3223, 7
        %v3225 = vsub.s32 0, %v3224
        %v3226 = vrot.slane %v3221, %v3225
        %vm3228 = vcmask 64512
        %v3230 = vsel %vm3228, %v3219, 0
        %3232 = vmatprep.subr.mxu0 0.0
        %3233 = vmatpush1.msra.mxu0 %v3220
        %3234 = vmatprep.subr.mxu0 0.0
        %3235 = vmatpush1.msra.mxu0 0.0
        %3236 = vmatprep.subr.mxu0 0.0
        %3237 = vmatpush1.msra.mxu0 0.0
        %3238 = vmatprep.subr.mxu0 0.0
        %3239 = vmatpush1.msra.mxu0 0.0
        %3240 = vmatprep.subr.mxu0 0.0
        %3241 = vmatpush1.msra.mxu0 0.0
        %3242 = vmatprep.subr.mxu0 0.0
        %3243 = vmatpush1.msra.mxu0 0.0
        %3244 = vmatprep.subr.mxu0 0.0
        %3245 = vmatpush1.msra.mxu0 0.0
        %3246 = vmatprep.subr.mxu0 0.0
        %3247 = vmatpush1.msra.mxu0 0.0
        %3248 = vmatprep.subr.mxu0 0.0
        %3249 = vmatpush1.msra.mxu0 0.0
        %3250 = vmatprep.subr.mxu0 0.0
        %3251 = vmatpush1.msra.mxu0 0.0
        %3252 = vmatprep.subr.mxu0 0.0
        %3253 = vmatpush1.msra.mxu0 0.0
        %3254 = vmatprep.subr.mxu0 0.0
        %3255 = vmatpush1.msra.mxu0 0.0
        %3256 = vmatprep.subr.mxu0 0.0
        %3257 = vmatpush1.msra.mxu0 0.0
        %3258 = vmatprep.subr.mxu0 0.0
        %3259 = vmatpush1.msra.mxu0 0.0
        %3260 = vmatprep.subr.mxu0 0.0
        %3261 = vmatpush1.msra.mxu0 0.0
        %3262 = vmatprep.subr.mxu0 0.0
        %3263 = vmatpush1.msra.mxu0 0.0
        %3264 = vmatprep.subr.mxu0 0.0
        %3265 = vmatpush1.msra.mxu0 0.0
        %3266 = vmatprep.subr.mxu0 0.0
        %3267 = vmatpush1.msra.mxu0 0.0
        %3268 = vmatprep.subr.mxu0 0.0
        %3269 = vmatpush1.msra.mxu0 0.0
        %3270 = vmatprep.subr.mxu0 0.0
        %3271 = vmatpush1.msra.mxu0 0.0
        %3272 = vmatprep.subr.mxu0 0.0
        %3273 = vmatpush1.msra.mxu0 0.0
        %3274 = vmatprep.subr.mxu0 0.0
        %3275 = vmatpush1.msra.mxu0 0.0
        %3276 = vmatprep.subr.mxu0 0.0
        %3277 = vmatpush1.msra.mxu0 0.0
        %3278 = vmatprep.subr.mxu0 0.0
        %3279 = vmatpush1.msra.mxu0 0.0
        %3280 = vmatprep.subr.mxu0 0.0
        %3281 = vmatpush1.msra.mxu0 0.0
        %3282 = vmatprep.subr.mxu0 0.0
        %3283 = vmatpush1.msra.mxu0 0.0
        %3284 = vmatprep.subr.mxu0 0.0
        %3285 = vmatpush1.msra.mxu0 0.0
        %3286 = vmatprep.subr.mxu0 0.0
        %3287 = vmatpush1.msra.mxu0 0.0
        %3288 = vmatprep.subr.mxu0 0.0
        %3289 = vmatpush1.msra.mxu0 0.0
        %3290 = vmatprep.subr.mxu0 0.0
        %3291 = vmatpush1.msra.mxu0 0.0
        %3292 = vmatprep.subr.mxu0 0.0
        %3293 = vmatpush1.msra.mxu0 0.0
        %3294 = vmatprep.subr.mxu0 0.0
        %3295 = vmatpush1.msra.mxu0 0.0
        %3296 = vmatprep.mubr.f32.mxu0 0.0
        %3297 = vmatmul.mubr.f32.gmra.mrb[0].mxu0 %v3230
        %v3298 = vpop.f32.mrb[0].mxu0
        %v3299 = vadd.f32 %v3226, %v3298
        %v3300 = vpop.f32.mrb[0].mxu0
        %3301 = vdwg.mxu0
        %v3302 = vmul.f32 %v3299, 0.16666667
        %v3303 = vadd.f32 %v3302, 0.5
        %v3304 = vmax.f32 %v3303, 0.0
        %v3305 = vmin.f32 %v3304, 1.0
        %v3306 = vld [vmem:[#allocation7] sm:$0xff]
        %v3307 = vld [vmem:[#allocation7 + $0x8] sm:$0xff]
        %v3308 = vld [vmem:[#allocation7 + $0x10] sm:$0xff]
        %v3309 = vld [vmem:[#allocation7 + $0x18] sm:$0xff]
        %v3310 = vld [vmem:[#allocation7 + $0x20] sm:$0xff]
        %v3311 = vld [vmem:[#allocation7 + $0x28] sm:$0xff]
        %v3312 = vld [vmem:[#allocation7 + $0x30] sm:$0xff]
        %v3313 = vld [vmem:[#allocation7 + $0x38] sm:$0xff]
        %v3314 = vld [vmem:[#allocation7 + $0x40] sm:$0xff]
        %v3315 = vld [vmem:[#allocation7 + $0x48] sm:$0xff]
        %v3316 = vld [vmem:[#allocation7 + $0x50] sm:$0xff]
        %v3317 = vld [vmem:[#allocation7 + $0x58] sm:$0xff]
        %v3318 = vld [vmem:[#allocation7 + $0x60] sm:$0xff]
        %v3319 = vld [vmem:[#allocation7 + $0x68] sm:$0xff]
        %v3320 = vld [vmem:[#allocation7 + $0x70] sm:$0xff]
        %v3321 = vld [vmem:[#allocation7 + $0x78] sm:$0xff]
        %vm3322 = vcmask 261120
        %v3324 = vsel %vm3322, %v3305, 0
        %3326 = vmatprep.subr.mxu0 %v3307
        %3327 = vmatpush1.msra.mxu0 %v3306
        %3328 = vmatprep.subr.mxu0 %v3311
        %3329 = vmatpush1.msra.mxu0 %v3310
        %3330 = vmatprep.subr.mxu0 %v3315
        %3331 = vmatpush1.msra.mxu0 %v3314
        %3332 = vmatprep.subr.mxu0 %v3319
        %3333 = vmatpush1.msra.mxu0 %v3318
        %3334 = vmatprep.subr.mxu0 0.0
        %3335 = vmatpush1.msra.mxu0 0.0
        %3336 = vmatprep.subr.mxu0 0.0
        %3337 = vmatpush1.msra.mxu0 0.0
        %3338 = vmatprep.subr.mxu0 0.0
        %3339 = vmatpush1.msra.mxu0 0.0
        %3340 = vmatprep.subr.mxu0 0.0
        %3341 = vmatpush1.msra.mxu0 0.0
        %3342 = vmatprep.subr.mxu0 0.0
        %3343 = vmatpush1.msra.mxu0 0.0
        %3344 = vmatprep.subr.mxu0 0.0
        %3345 = vmatpush1.msra.mxu0 0.0
        %3346 = vmatprep.subr.mxu0 0.0
        %3347 = vmatpush1.msra.mxu0 0.0
        %3348 = vmatprep.subr.mxu0 0.0
        %3349 = vmatpush1.msra.mxu0 0.0
        %3350 = vmatprep.subr.mxu0 0.0
        %3351 = vmatpush1.msra.mxu0 0.0
        %3352 = vmatprep.subr.mxu0 0.0
        %3353 = vmatpush1.msra.mxu0 0.0
        %3354 = vmatprep.subr.mxu0 0.0
        %3355 = vmatpush1.msra.mxu0 0.0
        %3356 = vmatprep.subr.mxu0 0.0
        %3357 = vmatpush1.msra.mxu0 0.0
        %3358 = vmatprep.subr.mxu0 0.0
        %3359 = vmatpush1.msra.mxu0 0.0
        %3360 = vmatprep.subr.mxu0 0.0
        %3361 = vmatpush1.msra.mxu0 0.0
        %3362 = vmatprep.subr.mxu0 0.0
        %3363 = vmatpush1.msra.mxu0 0.0
        %3364 = vmatprep.subr.mxu0 0.0
        %3365 = vmatpush1.msra.mxu0 0.0
        %3366 = vmatprep.subr.mxu0 0.0
        %3367 = vmatpush1.msra.mxu0 0.0
        %3368 = vmatprep.subr.mxu0 0.0
        %3369 = vmatpush1.msra.mxu0 0.0
        %3370 = vmatprep.subr.mxu0 0.0
        %3371 = vmatpush1.msra.mxu0 0.0
        %3372 = vmatprep.subr.mxu0 0.0
        %3373 = vmatpush1.msra.mxu0 0.0
        %3374 = vmatprep.subr.mxu0 0.0
        %3375 = vmatpush1.msra.mxu0 0.0
        %3376 = vmatprep.subr.mxu0 0.0
        %3377 = vmatpush1.msra.mxu0 0.0
        %3378 = vmatprep.subr.mxu0 0.0
        %3379 = vmatpush1.msra.mxu0 0.0
        %3380 = vmatprep.subr.mxu0 0.0
        %3381 = vmatpush1.msra.mxu0 0.0
        %3382 = vmatprep.subr.mxu0 0.0
        %3383 = vmatpush1.msra.mxu0 0.0
        %3384 = vmatprep.subr.mxu0 0.0
        %3385 = vmatpush1.msra.mxu0 0.0
        %3386 = vmatprep.subr.mxu0 0.0
        %3387 = vmatpush1.msra.mxu0 0.0
        %3388 = vmatprep.subr.mxu0 0.0
        %3389 = vmatpush1.msra.mxu0 0.0
        %3390 = vmatprep.mubr.f32.mxu0 0.0
        %3391 = vmatmul.mubr.f32.gmra.mrb[0].mxu0 %v3324
        %v3392 = vpop.f32.mrb[0].mxu0
        %v3393 = vadd.f32 0.0, %v3392
        %v3394 = vpop.f32.mrb[0].mxu0
        %v3395 = vadd.f32 0.0, %v3394
        %3396 = vdwg.mxu0
        %3397 = vmatprep.subr.mxu0 %v3309
        %3398 = vmatpush1.msra.mxu0 %v3308
        %3399 = vmatprep.subr.mxu0 %v3313
        %3400 = vmatpush1.msra.mxu0 %v3312
        %3401 = vmatprep.subr.mxu0 %v3317
        %3402 = vmatpush1.msra.mxu0 %v3316
        %3403 = vmatprep.subr.mxu0 %v3321
        %3404 = vmatpush1.msra.mxu0 %v3320
        %3405 = vmatprep.subr.mxu0 0.0
        %3406 = vmatpush1.msra.mxu0 0.0
        %3407 = vmatprep.subr.mxu0 0.0
        %3408 = vmatpush1.msra.mxu0 0.0
        %3409 = vmatprep.subr.mxu0 0.0
        %3410 = vmatpush1.msra.mxu0 0.0
        %3411 = vmatprep.subr.mxu0 0.0
        %3412 = vmatpush1.msra.mxu0 0.0
        %3413 = vmatprep.subr.mxu0 0.0
        %3414 = vmatpush1.msra.mxu0 0.0
        %3415 = vmatprep.subr.mxu0 0.0
        %3416 = vmatpush1.msra.mxu0 0.0
        %3417 = vmatprep.subr.mxu0 0.0
        %3418 = vmatpush1.msra.mxu0 0.0
        %3419 = vmatprep.subr.mxu0 0.0
        %3420 = vmatpush1.msra.mxu0 0.0
        %3421 = vmatprep.subr.mxu0 0.0
        %3422 = vmatpush1.msra.mxu0 0.0
        %3423 = vmatprep.subr.mxu0 0.0
        %3424 = vmatpush1.msra.mxu0 0.0
        %3425 = vmatprep.subr.mxu0 0.0
        %3426 = vmatpush1.msra.mxu0 0.0
        %3427 = vmatprep.subr.mxu0 0.0
        %3428 = vmatpush1.msra.mxu0 0.0
        %3429 = vmatprep.subr.mxu0 0.0
        %3430 = vmatpush1.msra.mxu0 0.0
        %3431 = vmatprep.subr.mxu0 0.0
        %3432 = vmatpush1.msra.mxu0 0.0
        %3433 = vmatprep.subr.mxu0 0.0
        %3434 = vmatpush1.msra.mxu0 0.0
        %3435 = vmatprep.subr.mxu0 0.0
        %3436 = vmatpush1.msra.mxu0 0.0
        %3437 = vmatprep.subr.mxu0 0.0
        %3438 = vmatpush1.msra.mxu0 0.0
        %3439 = vmatprep.subr.mxu0 0.0
        %3440 = vmatpush1.msra.mxu0 0.0
        %3441 = vmatprep.subr.mxu0 0.0
        %3442 = vmatpush1.msra.mxu0 0.0
        %3443 = vmatprep.subr.mxu0 0.0
        %3444 = vmatpush1.msra.mxu0 0.0
        %3445 = vmatprep.subr.mxu0 0.0
        %3446 = vmatpush1.msra.mxu0 0.0
        %3447 = vmatprep.subr.mxu0 0.0
        %3448 = vmatpush1.msra.mxu0 0.0
        %3449 = vmatprep.subr.mxu0 0.0
        %3450 = vmatpush1.msra.mxu0 0.0
        %3451 = vmatprep.subr.mxu0 0.0
        %3452 = vmatpush1.msra.mxu0 0.0
        %3453 = vmatprep.subr.mxu0 0.0
        %3454 = vmatpush1.msra.mxu0 0.0
        %3455 = vmatprep.subr.mxu0 0.0
        %3456 = vmatpush1.msra.mxu0 0.0
        %3457 = vmatprep.subr.mxu0 0.0
        %3458 = vmatpush1.msra.mxu0 0.0
        %3459 = vmatprep.subr.mxu0 0.0
        %3460 = vmatpush1.msra.mxu0 0.0
        %3461 = vmatprep.mubr.f32.mxu0 0.0
        %3462 = vmatmul.mubr.f32.gmra.mrb[0].mxu0 %v3324
        %v3463 = vpop.f32.mrb[0].mxu0
        %v3464 = vadd.f32 0.0, %v3463
        %v3465 = vpop.f32.mrb[0].mxu0
        %v3466 = vadd.f32 0.0, %v3465
        %3467 = vdwg.mxu0
        %v3472 = vcombine.low %v3393, %v3395
        %v3473 = vcombine.low %v3464, %v3466
        %v3475 = vunpack.c.l.s4 1966171168
        %v3476 = vunpack.c.0.s8 %v3475
        %v3477 = vlaneseq
        %v3478 = vshrl.u32 %v3477, 7
        %v3479 = vsub.s32 %v3476, %v3478
        %v3480 = vrot.slane %v3472, %v3479
        %v3482 = vunpack.c.l.s4 1966171168
        %v3483 = vunpack.c.0.s8 %v3482
        %v3484 = vlaneseq
        %v3485 = vshrl.u32 %v3484, 7
        %v3486 = vsub.s32 %v3483, %v3485
        %v3487 = vrot.slane %v3473, %v3486
        %v3488 = vcombine.low %v3480, %v3487
        %v3489 = vcombine.high %v3480, %v3487
        %v3491 = vunpack.c.l.s4 1966171168
        %v3492 = vunpack.c.0.s8 %v3491
        %v3493 = vlaneseq
        %v3494 = vshrl.u32 %v3493, 7
        %v3495 = vsub.s32 %v3492, %v3494
        %v3496 = vrot.slane %v3488, %v3495
        %v3498 = vunpack.c.l.s4 1966171168
        %v3499 = vunpack.c.0.s8 %v3498
        %v3500 = vlaneseq
        %v3501 = vshrl.u32 %v3500, 7
        %v3502 = vsub.s32 %v3499, %v3501
        %v3503 = vrot.slane %v3489, %v3502
        %v3504 = vcombine.high %v3496, %v3496
        %v3505 = vcombine.high %v3503, %v3503
        %v3506 = vlaneseq
        %v3507 = vshrl.u32 %v3506, 7
        %v3508 = vsub.s32 0, %v3507
        %v3509 = vrot.slane %v3496, %v3508
        %v3510 = vlaneseq
        %v3511 = vshrl.u32 %v3510, 7
        %v3512 = vsub.s32 1, %v3511
        %v3513 = vrot.slane %v3496, %v3512
        %v3514 = vlaneseq
        %v3515 = vshrl.u32 %v3514, 7
        %v3516 = vsub.s32 2, %v3515
        %v3517 = vrot.slane %v3496, %v3516
        %v3518 = vlaneseq
        %v3519 = vshrl.u32 %v3518, 7
        %v3520 = vsub.s32 3, %v3519
        %v3521 = vrot.slane %v3496, %v3520
        %v3522 = vlaneseq
        %v3523 = vshrl.u32 %v3522, 7
        %v3524 = vsub.s32 0, %v3523
        %v3525 = vrot.slane %v3503, %v3524
        %v3526 = vlaneseq
        %v3527 = vshrl.u32 %v3526, 7
        %v3528 = vsub.s32 1, %v3527
        %v3529 = vrot.slane %v3503, %v3528
        %v3530 = vlaneseq
        %v3531 = vshrl.u32 %v3530, 7
        %v3532 = vsub.s32 2, %v3531
        %v3533 = vrot.slane %v3503, %v3532
        %v3534 = vlaneseq
        %v3535 = vshrl.u32 %v3534, 7
        %v3536 = vsub.s32 3, %v3535
        %v3537 = vrot.slane %v3503, %v3536
        %v3538 = vlaneseq
        %v3539 = vshrl.u32 %v3538, 7
        %v3540 = vsub.s32 0, %v3539
        %v3541 = vrot.slane %v3504, %v3540
        %v3542 = vlaneseq
        %v3543 = vshrl.u32 %v3542, 7
        %v3544 = vsub.s32 1, %v3543
        %v3545 = vrot.slane %v3504, %v3544
        %v3546 = vlaneseq
        %v3547 = vshrl.u32 %v3546, 7
        %v3548 = vsub.s32 2, %v3547
        %v3549 = vrot.slane %v3504, %v3548
        %v3550 = vlaneseq
        %v3551 = vshrl.u32 %v3550, 7
        %v3552 = vsub.s32 3, %v3551
        %v3553 = vrot.slane %v3504, %v3552
        %v3554 = vlaneseq
        %v3555 = vshrl.u32 %v3554, 7
        %v3556 = vsub.s32 0, %v3555
        %v3557 = vrot.slane %v3505, %v3556
        %v3558 = vlaneseq
        %v3559 = vshrl.u32 %v3558, 7
        %v3560 = vsub.s32 1, %v3559
        %v3561 = vrot.slane %v3505, %v3560
        %v3562 = vlaneseq
        %v3563 = vshrl.u32 %v3562, 7
        %v3564 = vsub.s32 2, %v3563
        %v3565 = vrot.slane %v3505, %v3564
        %v3566 = vlaneseq
        %v3567 = vshrl.u32 %v3566, 7
        %v3568 = vsub.s32 3, %v3567
        %v3569 = vrot.slane %v3505, %v3568
        %v3586 = vmul.f32 %v2812, %v3509
        %v3587 = vmul.f32 %v2813, %v3513
        %v3588 = vmul.f32 %v2814, %v3517
        %v3589 = vmul.f32 %v2815, %v3521
        %v3590 = vmul.f32 %v2816, %v3509
        %v3591 = vmul.f32 %v2817, %v3513
        %v3592 = vmul.f32 %v2818, %v3517
        %v3593 = vmul.f32 %v2819, %v3521
        %v3594 = vmul.f32 %v2820, %v3525
        %v3595 = vmul.f32 %v2821, %v3529
        %v3596 = vmul.f32 %v2822, %v3533
        %v3597 = vmul.f32 %v2823, %v3537
        %v3598 = vmul.f32 %v2824, %v3525
        %v3599 = vmul.f32 %v2825, %v3529
        %v3600 = vmul.f32 %v2826, %v3533
        %v3601 = vmul.f32 %v2827, %v3537
        %v3602 = vmul.f32 %v2828, %v3541
        %v3603 = vmul.f32 %v2829, %v3545
        %v3604 = vmul.f32 %v2830, %v3549
        %v3605 = vmul.f32 %v2831, %v3553
        %v3606 = vmul.f32 %v2832, %v3541
        %v3607 = vmul.f32 %v2833, %v3545
        %v3608 = vmul.f32 %v2834, %v3549
        %v3609 = vmul.f32 %v2835, %v3553
        %v3610 = vmul.f32 %v2836, %v3557
        %v3611 = vmul.f32 %v2837, %v3561
        %v3612 = vmul.f32 %v2838, %v3565
        %v3613 = vmul.f32 %v2839, %v3569
        %v3614 = vmul.f32 %v2840, %v3557
        %v3615 = vmul.f32 %v2841, %v3561
        %v3616 = vmul.f32 %v2842, %v3565
        %v3617 = vmul.f32 %v2843, %v3569
        %v3618 = vpack.c.bf16 %v3590, %v3586
        %v3619 = vpack.c.bf16 %v3591, %v3587
        %v3620 = vpack.c.bf16 %v3592, %v3588
        %v3621 = vpack.c.bf16 %v3593, %v3589
        %v3622 = vpack.c.bf16 %v3598, %v3594
        %v3623 = vpack.c.bf16 %v3599, %v3595
        %v3624 = vpack.c.bf16 %v3600, %v3596
        %v3625 = vpack.c.bf16 %v3601, %v3597
        %v3626 = vpack.c.bf16 %v3606, %v3602
        %v3627 = vpack.c.bf16 %v3607, %v3603
        %v3628 = vpack.c.bf16 %v3608, %v3604
        %v3629 = vpack.c.bf16 %v3609, %v3605
        %v3630 = vpack.c.bf16 %v3614, %v3610
        %v3631 = vpack.c.bf16 %v3615, %v3611
        %v3632 = vpack.c.bf16 %v3616, %v3612
        %v3633 = vpack.c.bf16 %v3617, %v3613
        %v3634 = vld [vmem:[#allocation8] sm:$0xff]
        %v3635 = vld [vmem:[#allocation8 + $0x8] sm:$0xff]
        %v3636 = vld [vmem:[#allocation8 + $0x10] sm:$0xff]
        %v3637 = vld [vmem:[#allocation8 + $0x18] sm:$0xff]
        %v3638 = vld [vmem:[#allocation8 + $0x20] sm:$0xff]
        %v3639 = vld [vmem:[#allocation8 + $0x28] sm:$0xff]
        %v3640 = vld [vmem:[#allocation8 + $0x30] sm:$0xff]
        %v3641 = vld [vmem:[#allocation8 + $0x38] sm:$0xff]
        %v3642 = vld [vmem:[#allocation8 + $0x40] sm:$0xff]
        %v3643 = vld [vmem:[#allocation8 + $0x48] sm:$0xff]
        %v3644 = vld [vmem:[#allocation8 + $0x50] sm:$0xff]
        %v3645 = vld [vmem:[#allocation8 + $0x58] sm:$0xff]
        %v3646 = vld [vmem:[#allocation8 + $0x60] sm:$0xff]
        %v3647 = vld [vmem:[#allocation8 + $0x68] sm:$0xff]
        %v3648 = vld [vmem:[#allocation8 + $0x70] sm:$0xff]
        %v3649 = vld [vmem:[#allocation8 + $0x78] sm:$0xff]
        %v3650 = vld [vmem:[#allocation8 + $0x80] sm:$0xff]
        %v3651 = vld [vmem:[#allocation8 + $0x88] sm:$0xff]
        %v3652 = vld [vmem:[#allocation8 + $0x90] sm:$0xff]
        %v3653 = vld [vmem:[#allocation8 + $0x98] sm:$0xff]
        %v3654 = vld [vmem:[#allocation8 + $0xa0] sm:$0xff]
        %v3655 = vld [vmem:[#allocation8 + $0xa8] sm:$0xff]
        %v3656 = vld [vmem:[#allocation8 + $0xb0] sm:$0xff]
        %v3657 = vld [vmem:[#allocation8 + $0xb8] sm:$0xff]
        %v3658 = vld [vmem:[#allocation8 + $0xc0] sm:$0xff]
        %v3659 = vld [vmem:[#allocation8 + $0xc8] sm:$0xff]
        %v3660 = vld [vmem:[#allocation8 + $0xd0] sm:$0xff]
        %v3661 = vld [vmem:[#allocation8 + $0xd8] sm:$0xff]
        %v3662 = vld [vmem:[#allocation8 + $0xe0] sm:$0xff]
        %v3663 = vld [vmem:[#allocation8 + $0xe8] sm:$0xff]
        %v3664 = vld [vmem:[#allocation8 + $0xf0] sm:$0xff]
        %v3665 = vld [vmem:[#allocation8 + $0xf8] sm:$0xff]
        %v3666 = vld [vmem:[#allocation8 + $0x100] sm:$0xff]
        %v3667 = vld [vmem:[#allocation8 + $0x108] sm:$0xff]
        %v3668 = vld [vmem:[#allocation8 + $0x110] sm:$0xff]
        %v3669 = vld [vmem:[#allocation8 + $0x118] sm:$0xff]
        %v3670 = vld [vmem:[#allocation8 + $0x120] sm:$0xff]
        %v3671 = vld [vmem:[#allocation8 + $0x128] sm:$0xff]
        %v3672 = vld [vmem:[#allocation8 + $0x130] sm:$0xff]
        %v3673 = vld [vmem:[#allocation8 + $0x138] sm:$0xff]
        %v3674 = vld [vmem:[#allocation8 + $0x140] sm:$0xff]
        %v3675 = vld [vmem:[#allocation8 + $0x148] sm:$0xff]
        %v3676 = vld [vmem:[#allocation8 + $0x150] sm:$0xff]
        %v3677 = vld [vmem:[#allocation8 + $0x158] sm:$0xff]
        %v3678 = vld [vmem:[#allocation8 + $0x160] sm:$0xff]
        %v3679 = vld [vmem:[#allocation8 + $0x168] sm:$0xff]
        %v3680 = vld [vmem:[#allocation8 + $0x170] sm:$0xff]
        %v3681 = vld [vmem:[#allocation8 + $0x178] sm:$0xff]
        %v3682 = vld [vmem:[#allocation8 + $0x180] sm:$0xff]
        %v3683 = vld [vmem:[#allocation8 + $0x188] sm:$0xff]
        %v3684 = vld [vmem:[#allocation8 + $0x190] sm:$0xff]
        %v3685 = vld [vmem:[#allocation8 + $0x198] sm:$0xff]
        %v3686 = vld [vmem:[#allocation8 + $0x1a0] sm:$0xff]
        %v3687 = vld [vmem:[#allocation8 + $0x1a8] sm:$0xff]
        %v3688 = vld [vmem:[#allocation8 + $0x1b0] sm:$0xff]
        %v3689 = vld [vmem:[#allocation8 + $0x1b8] sm:$0xff]
        %v3690 = vld [vmem:[#allocation8 + $0x1c0] sm:$0xff]
        %v3691 = vld [vmem:[#allocation8 + $0x1c8] sm:$0xff]
        %v3692 = vld [vmem:[#allocation8 + $0x1d0] sm:$0xff]
        %v3693 = vld [vmem:[#allocation8 + $0x1d8] sm:$0xff]
        %v3694 = vld [vmem:[#allocation8 + $0x1e0] sm:$0xff]
        %v3695 = vld [vmem:[#allocation8 + $0x1e8] sm:$0xff]
        %v3696 = vld [vmem:[#allocation8 + $0x1f0] sm:$0xff]
        %v3697 = vld [vmem:[#allocation8 + $0x1f8] sm:$0xff]
        %v3698 = vld [vmem:[%s11] sm:$0x3]
        %v3700 = vlaneseq
        %v3701 = vshrl.u32 %v3700, 7
        %v3702 = vsub.s32 0, %v3701
        %v3703 = vrot.slane %v3698, %v3702
        %v3704 = vlaneseq
        %v3705 = vshrl.u32 %v3704, 7
        %v3706 = vsub.s32 1, %v3705
        %v3707 = vrot.slane %v3698, %v3706
        %v3774 = vunpack.c.l.b16 %v3634
        %v3775 = vunpack.c.h.b16 %v3634
        %v3776 = vunpack.c.l.b16 %v3635
        %v3777 = vunpack.c.h.b16 %v3635
        %v3778 = vunpack.c.l.b16 %v3636
        %v3779 = vunpack.c.h.b16 %v3636
        %v3780 = vunpack.c.l.b16 %v3637
        %v3781 = vunpack.c.h.b16 %v3637
        %v3782 = vunpack.c.l.b16 %v3638
        %v3783 = vunpack.c.h.b16 %v3638
        %v3784 = vunpack.c.l.b16 %v3639
        %v3785 = vunpack.c.h.b16 %v3639
        %v3786 = vunpack.c.l.b16 %v3640
        %v3787 = vunpack.c.h.b16 %v3640
        %v3788 = vunpack.c.l.b16 %v3641
        %v3789 = vunpack.c.h.b16 %v3641
        %v3790 = vunpack.c.l.b16 %v3642
        %v3791 = vunpack.c.h.b16 %v3642
        %v3792 = vunpack.c.l.b16 %v3643
        %v3793 = vunpack.c.h.b16 %v3643
        %v3794 = vunpack.c.l.b16 %v3644
        %v3795 = vunpack.c.h.b16 %v3644
        %v3796 = vunpack.c.l.b16 %v3645
        %v3797 = vunpack.c.h.b16 %v3645
        %v3798 = vunpack.c.l.b16 %v3646
        %v3799 = vunpack.c.h.b16 %v3646
        %v3800 = vunpack.c.l.b16 %v3647
        %v3801 = vunpack.c.h.b16 %v3647
        %v3802 = vunpack.c.l.b16 %v3648
        %v3803 = vunpack.c.h.b16 %v3648
        %v3804 = vunpack.c.l.b16 %v3649
        %v3805 = vunpack.c.h.b16 %v3649
        %v3806 = vunpack.c.l.b16 %v3650
        %v3807 = vunpack.c.h.b16 %v3650
        %v3808 = vunpack.c.l.b16 %v3651
        %v3809 = vunpack.c.h.b16 %v3651
        %v3810 = vunpack.c.l.b16 %v3652
        %v3811 = vunpack.c.h.b16 %v3652
        %v3812 = vunpack.c.l.b16 %v3653
        %v3813 = vunpack.c.h.b16 %v3653
        %v3814 = vunpack.c.l.b16 %v3654
        %v3815 = vunpack.c.h.b16 %v3654
        %v3816 = vunpack.c.l.b16 %v3655
        %v3817 = vunpack.c.h.b16 %v3655
        %v3818 = vunpack.c.l.b16 %v3656
        %v3819 = vunpack.c.h.b16 %v3656
        %v3820 = vunpack.c.l.b16 %v3657
        %v3821 = vunpack.c.h.b16 %v3657
        %v3822 = vunpack.c.l.b16 %v3658
        %v3823 = vunpack.c.h.b16 %v3658
        %v3824 = vunpack.c.l.b16 %v3659
        %v3825 = vunpack.c.h.b16 %v3659
        %v3826 = vunpack.c.l.b16 %v3660
        %v3827 = vunpack.c.h.b16 %v3660
        %v3828 = vunpack.c.l.b16 %v3661
        %v3829 = vunpack.c.h.b16 %v3661
        %v3830 = vunpack.c.l.b16 %v3662
        %v3831 = vunpack.c.h.b16 %v3662
        %v3832 = vunpack.c.l.b16 %v3663
        %v3833 = vunpack.c.h.b16 %v3663
        %v3834 = vunpack.c.l.b16 %v3664
        %v3835 = vunpack.c.h.b16 %v3664
        %v3836 = vunpack.c.l.b16 %v3665
        %v3837 = vunpack.c.h.b16 %v3665
        %v3838 = vunpack.c.l.b16 %v3666
        %v3839 = vunpack.c.h.b16 %v3666
        %v3840 = vunpack.c.l.b16 %v3667
        %v3841 = vunpack.c.h.b16 %v3667
        %v3842 = vunpack.c.l.b16 %v3668
        %v3843 = vunpack.c.h.b16 %v3668
        %v3844 = vunpack.c.l.b16 %v3669
        %v3845 = vunpack.c.h.b16 %v3669
        %v3846 = vunpack.c.l.b16 %v3670
        %v3847 = vunpack.c.h.b16 %v3670
        %v3848 = vunpack.c.l.b16 %v3671
        %v3849 = vunpack.c.h.b16 %v3671
        %v3850 = vunpack.c.l.b16 %v3672
        %v3851 = vunpack.c.h.b16 %v3672
        %v3852 = vunpack.c.l.b16 %v3673
        %v3853 = vunpack.c.h.b16 %v3673
        %v3854 = vunpack.c.l.b16 %v3674
        %v3855 = vunpack.c.h.b16 %v3674
        %v3856 = vunpack.c.l.b16 %v3675
        %v3857 = vunpack.c.h.b16 %v3675
        %v3858 = vunpack.c.l.b16 %v3676
        %v3859 = vunpack.c.h.b16 %v3676
        %v3860 = vunpack.c.l.b16 %v3677
        %v3861 = vunpack.c.h.b16 %v3677
        %v3862 = vunpack.c.l.b16 %v3678
        %v3863 = vunpack.c.h.b16 %v3678
        %v3864 = vunpack.c.l.b16 %v3679
        %v3865 = vunpack.c.h.b16 %v3679
        %v3866 = vunpack.c.l.b16 %v3680
        %v3867 = vunpack.c.h.b16 %v3680
        %v3868 = vunpack.c.l.b16 %v3681
        %v3869 = vunpack.c.h.b16 %v3681
        %v3870 = vunpack.c.l.b16 %v3682
        %v3871 = vunpack.c.h.b16 %v3682
        %v3872 = vunpack.c.l.b16 %v3683
        %v3873 = vunpack.c.h.b16 %v3683
        %v3874 = vunpack.c.l.b16 %v3684
        %v3875 = vunpack.c.h.b16 %v3684
        %v3876 = vunpack.c.l.b16 %v3685
        %v3877 = vunpack.c.h.b16 %v3685
        %v3878 = vunpack.c.l.b16 %v3686
        %v3879 = vunpack.c.h.b16 %v3686
        %v3880 = vunpack.c.l.b16 %v3687
        %v3881 = vunpack.c.h.b16 %v3687
        %v3882 = vunpack.c.l.b16 %v3688
        %v3883 = vunpack.c.h.b16 %v3688
        %v3884 = vunpack.c.l.b16 %v3689
        %v3885 = vunpack.c.h.b16 %v3689
        %v3886 = vunpack.c.l.b16 %v3690
        %v3887 = vunpack.c.h.b16 %v3690
        %v3888 = vunpack.c.l.b16 %v3691
        %v3889 = vunpack.c.h.b16 %v3691
        %v3890 = vunpack.c.l.b16 %v3692
        %v3891 = vunpack.c.h.b16 %v3692
        %v3892 = vunpack.c.l.b16 %v3693
        %v3893 = vunpack.c.h.b16 %v3693
        %v3894 = vunpack.c.l.b16 %v3694
        %v3895 = vunpack.c.h.b16 %v3694
        %v3896 = vunpack.c.l.b16 %v3695
        %v3897 = vunpack.c.h.b16 %v3695
        %v3898 = vunpack.c.l.b16 %v3696
        %v3899 = vunpack.c.h.b16 %v3696
        %v3900 = vunpack.c.l.b16 %v3697
        %v3901 = vunpack.c.h.b16 %v3697
        %v3902 = vpack.c.b16 %v3776, %v3774
        %v3903 = vpack.c.b16 %v3777, %v3775
        %v3904 = vpack.c.b16 %v3780, %v3778
        %v3905 = vpack.c.b16 %v3781, %v3779
        %v3906 = vpack.c.b16 %v3784, %v3782
        %v3907 = vpack.c.b16 %v3785, %v3783
        %v3908 = vpack.c.b16 %v3788, %v3786
        %v3909 = vpack.c.b16 %v3789, %v3787
        %v3910 = vpack.c.b16 %v3792, %v3790
        %v3911 = vpack.c.b16 %v3793, %v3791
        %v3912 = vpack.c.b16 %v3796, %v3794
        %v3913 = vpack.c.b16 %v3797, %v3795
        %v3914 = vpack.c.b16 %v3800, %v3798
        %v3915 = vpack.c.b16 %v3801, %v3799
        %v3916 = vpack.c.b16 %v3804, %v3802
        %v3917 = vpack.c.b16 %v3805, %v3803
        %v3918 = vpack.c.b16 %v3808, %v3806
        %v3919 = vpack.c.b16 %v3809, %v3807
        %v3920 = vpack.c.b16 %v3812, %v3810
        %v3921 = vpack.c.b16 %v3813, %v3811
        %v3922 = vpack.c.b16 %v3816, %v3814
        %v3923 = vpack.c.b16 %v3817, %v3815
        %v3924 = vpack.c.b16 %v3820, %v3818
        %v3925 = vpack.c.b16 %v3821, %v3819
        %v3926 = vpack.c.b16 %v3824, %v3822
        %v3927 = vpack.c.b16 %v3825, %v3823
        %v3928 = vpack.c.b16 %v3828, %v3826
        %v3929 = vpack.c.b16 %v3829, %v3827
        %v3930 = vpack.c.b16 %v3832, %v3830
        %v3931 = vpack.c.b16 %v3833, %v3831
        %v3932 = vpack.c.b16 %v3836, %v3834
        %v3933 = vpack.c.b16 %v3837, %v3835
        %v3934 = vpack.c.b16 %v3840, %v3838
        %v3935 = vpack.c.b16 %v3841, %v3839
        %v3936 = vpack.c.b16 %v3844, %v3842
        %v3937 = vpack.c.b16 %v3845, %v3843
        %v3938 = vpack.c.b16 %v3848, %v3846
        %v3939 = vpack.c.b16 %v3849, %v3847
        %v3940 = vpack.c.b16 %v3852, %v3850
        %v3941 = vpack.c.b16 %v3853, %v3851
        %v3942 = vpack.c.b16 %v3856, %v3854
        %v3943 = vpack.c.b16 %v3857, %v3855
        %v3944 = vpack.c.b16 %v3860, %v3858
        %v3945 = vpack.c.b16 %v3861, %v3859
        %v3946 = vpack.c.b16 %v3864, %v3862
        %v3947 = vpack.c.b16 %v3865, %v3863
        %v3948 = vpack.c.b16 %v3868, %v3866
        %v3949 = vpack.c.b16 %v3869, %v3867
        %v3950 = vpack.c.b16 %v3872, %v3870
        %v3951 = vpack.c.b16 %v3873, %v3871
        %v3952 = vpack.c.b16 %v3876, %v3874
        %v3953 = vpack.c.b16 %v3877, %v3875
        %v3954 = vpack.c.b16 %v3880, %v3878
        %v3955 = vpack.c.b16 %v3881, %v3879
        %v3956 = vpack.c.b16 %v3884, %v3882
        %v3957 = vpack.c.b16 %v3885, %v3883
        %v3958 = vpack.c.b16 %v3888, %v3886
        %v3959 = vpack.c.b16 %v3889, %v3887
        %v3960 = vpack.c.b16 %v3892, %v3890
        %v3961 = vpack.c.b16 %v3893, %v3891
        %v3962 = vpack.c.b16 %v3896, %v3894
        %v3963 = vpack.c.b16 %v3897, %v3895
        %v3964 = vpack.c.b16 %v3900, %v3898
        %v3965 = vpack.c.b16 %v3901, %v3899
        %4030 = vmatprep.subr.bf16.mxu0 %v3903
        %4031 = vmatpush1.bf16.msra.mxu0 %v3902
        %4032 = vmatprep.subr.bf16.mxu0 %v3905
        %4033 = vmatpush1.bf16.msra.mxu0 %v3904
        %4034 = vmatprep.subr.bf16.mxu0 %v3907
        %4035 = vmatpush1.bf16.msra.mxu0 %v3906
        %4036 = vmatprep.subr.bf16.mxu0 %v3909
        %4037 = vmatpush1.bf16.msra.mxu0 %v3908
        %4038 = vmatprep.subr.bf16.mxu0 %v3911
        %4039 = vmatpush1.bf16.msra.mxu0 %v3910
        %4040 = vmatprep.subr.bf16.mxu0 %v3913
        %4041 = vmatpush1.bf16.msra.mxu0 %v3912
        %4042 = vmatprep.subr.bf16.mxu0 %v3915
        %4043 = vmatpush1.bf16.msra.mxu0 %v3914
        %4044 = vmatprep.subr.bf16.mxu0 %v3917
        %4045 = vmatpush1.bf16.msra.mxu0 %v3916
        %4046 = vmatprep.subr.bf16.mxu0 %v3919
        %4047 = vmatpush1.bf16.msra.mxu0 %v3918
        %4048 = vmatprep.subr.bf16.mxu0 %v3921
        %4049 = vmatpush1.bf16.msra.mxu0 %v3920
        %4050 = vmatprep.subr.bf16.mxu0 %v3923
        %4051 = vmatpush1.bf16.msra.mxu0 %v3922
        %4052 = vmatprep.subr.bf16.mxu0 %v3925
        %4053 = vmatpush1.bf16.msra.mxu0 %v3924
        %4054 = vmatprep.subr.bf16.mxu0 %v3927
        %4055 = vmatpush1.bf16.msra.mxu0 %v3926
        %4056 = vmatprep.subr.bf16.mxu0 %v3929
        %4057 = vmatpush1.bf16.msra.mxu0 %v3928
        %4058 = vmatprep.subr.bf16.mxu0 %v3931
        %4059 = vmatpush1.bf16.msra.mxu0 %v3930
        %4060 = vmatprep.subr.bf16.mxu0 %v3933
        %4061 = vmatpush1.bf16.msra.mxu0 %v3932
        %4062 = vmatprep.mubr.bf16.mxu0 %v3619
        %4063 = vmatmul.mubr.bf16.gmra.mrb[0].mxu0 %v3618
        %v4064 = vpop.f32.mrb[0].mxu0
        %v4065 = vadd.f32 %v3703, %v4064
        %v4066 = vpop.f32.mrb[0].mxu0
        %v4067 = vadd.f32 %v3707, %v4066
        %v4068 = vpop.f32.mrb[0].mxu0
        %v4069 = vadd.f32 %v3703, %v4068
        %v4070 = vpop.f32.mrb[0].mxu0
        %v4071 = vadd.f32 %v3707, %v4070
        %4072 = vmatprep.mubr.bf16.mxu0 %v3623
        %4073 = vmatmul.mubr.bf16.gmra.mrb[0].mxu0 %v3622
        %v4074 = vpop.f32.mrb[0].mxu0
        %v4075 = vadd.f32 %v3703, %v4074
        %v4076 = vpop.f32.mrb[0].mxu0
        %v4077 = vadd.f32 %v3707, %v4076
        %v4078 = vpop.f32.mrb[0].mxu0
        %v4079 = vadd.f32 %v3703, %v4078
        %v4080 = vpop.f32.mrb[0].mxu0
        %v4081 = vadd.f32 %v3707, %v4080
        %4082 = vmatprep.mubr.bf16.mxu0 %v3627
        %4083 = vmatmul.mubr.bf16.gmra.mrb[0].mxu0 %v3626
        %v4084 = vpop.f32.mrb[0].mxu0
        %v4085 = vadd.f32 %v3703, %v4084
        %v4086 = vpop.f32.mrb[0].mxu0
        %v4087 = vadd.f32 %v3707, %v4086
        %v4088 = vpop.f32.mrb[0].mxu0
        %v4089 = vadd.f32 %v3703, %v4088
        %v4090 = vpop.f32.mrb[0].mxu0
        %v4091 = vadd.f32 %v3707, %v4090
        %4092 = vmatprep.mubr.bf16.mxu0 %v3631
        %4093 = vmatmul.mubr.bf16.gmra.mrb[0].mxu0 %v3630
        %v4094 = vpop.f32.mrb[0].mxu0
        %v4095 = vadd.f32 %v3703, %v4094
        %v4096 = vpop.f32.mrb[0].mxu0
        %v4097 = vadd.f32 %v3707, %v4096
        %v4098 = vpop.f32.mrb[0].mxu0
        %v4099 = vadd.f32 %v3703, %v4098
        %v4100 = vpop.f32.mrb[0].mxu0
        %v4101 = vadd.f32 %v3707, %v4100
        %4102 = vdwg.mxu0
        %4103 = vmatprep.subr.bf16.mxu0 %v3935
        %4104 = vmatpush1.bf16.msra.mxu0 %v3934
        %4105 = vmatprep.subr.bf16.mxu0 %v3937
        %4106 = vmatpush1.bf16.msra.mxu0 %v3936
        %4107 = vmatprep.subr.bf16.mxu0 %v3939
        %4108 = vmatpush1.bf16.msra.mxu0 %v3938
        %4109 = vmatprep.subr.bf16.mxu0 %v3941
        %4110 = vmatpush1.bf16.msra.mxu0 %v3940
        %4111 = vmatprep.subr.bf16.mxu0 %v3943
        %4112 = vmatpush1.bf16.msra.mxu0 %v3942
        %4113 = vmatprep.subr.bf16.mxu0 %v3945
        %4114 = vmatpush1.bf16.msra.mxu0 %v3944
        %4115 = vmatprep.subr.bf16.mxu0 %v3947
        %4116 = vmatpush1.bf16.msra.mxu0 %v3946
        %4117 = vmatprep.subr.bf16.mxu0 %v3949
        %4118 = vmatpush1.bf16.msra.mxu0 %v3948
        %4119 = vmatprep.subr.bf16.mxu0 %v3951
        %4120 = vmatpush1.bf16.msra.mxu0 %v3950
        %4121 = vmatprep.subr.bf16.mxu0 %v3953
        %4122 = vmatpush1.bf16.msra.mxu0 %v3952
        %4123 = vmatprep.subr.bf16.mxu0 %v3955
        %4124 = vmatpush1.bf16.msra.mxu0 %v3954
        %4125 = vmatprep.subr.bf16.mxu0 %v3957
        %4126 = vmatpush1.bf16.msra.mxu0 %v3956
        %4127 = vmatprep.subr.bf16.mxu0 %v3959
        %4128 = vmatpush1.bf16.msra.mxu0 %v3958
        %4129 = vmatprep.subr.bf16.mxu0 %v3961
        %4130 = vmatpush1.bf16.msra.mxu0 %v3960
        %4131 = vmatprep.subr.bf16.mxu0 %v3963
        %4132 = vmatpush1.bf16.msra.mxu0 %v3962
        %4133 = vmatprep.subr.bf16.mxu0 %v3965
        %4134 = vmatpush1.bf16.msra.mxu0 %v3964
        %4135 = vmatprep.mubr.bf16.mxu0 %v3621
        %4136 = vmatmul.mubr.bf16.gmra.mrb[0].mxu0 %v3620
        %v4137 = vpop.f32.mrb[0].mxu0
        %v4138 = vadd.f32 %v4065, %v4137
        %v4139 = vpop.f32.mrb[0].mxu0
        %v4140 = vadd.f32 %v4067, %v4139
        %v4141 = vpop.f32.mrb[0].mxu0
        %v4142 = vadd.f32 %v4069, %v4141
        %v4143 = vpop.f32.mrb[0].mxu0
        %v4144 = vadd.f32 %v4071, %v4143
        %4145 = vmatprep.mubr.bf16.mxu0 %v3625
        %4146 = vmatmul.mubr.bf16.gmra.mrb[0].mxu0 %v3624
        %v4147 = vpop.f32.mrb[0].mxu0
        %v4148 = vadd.f32 %v4075, %v4147
        %v4149 = vpop.f32.mrb[0].mxu0
        %v4150 = vadd.f32 %v4077, %v4149
        %v4151 = vpop.f32.mrb[0].mxu0
        %v4152 = vadd.f32 %v4079, %v4151
        %v4153 = vpop.f32.mrb[0].mxu0
        %v4154 = vadd.f32 %v4081, %v4153
        %4155 = vmatprep.mubr.bf16.mxu0 %v3629
        %4156 = vmatmul.mubr.bf16.gmra.mrb[0].mxu0 %v3628
        %v4157 = vpop.f32.mrb[0].mxu0
        %v4158 = vadd.f32 %v4085, %v4157
        %v4159 = vpop.f32.mrb[0].mxu0
        %v4160 = vadd.f32 %v4087, %v4159
        %v4161 = vpop.f32.mrb[0].mxu0
        %v4162 = vadd.f32 %v4089, %v4161
        %v4163 = vpop.f32.mrb[0].mxu0
        %v4164 = vadd.f32 %v4091, %v4163
        %4165 = vmatprep.mubr.bf16.mxu0 %v3633
        %4166 = vmatmul.mubr.bf16.gmra.mrb[0].mxu0 %v3632
        %v4167 = vpop.f32.mrb[0].mxu0
        %v4168 = vadd.f32 %v4095, %v4167
        %v4169 = vpop.f32.mrb[0].mxu0
        %v4170 = vadd.f32 %v4097, %v4169
        %v4171 = vpop.f32.mrb[0].mxu0
        %v4172 = vadd.f32 %v4099, %v4171
        %v4173 = vpop.f32.mrb[0].mxu0
        %v4174 = vadd.f32 %v4101, %v4173
        %4175 = vdwg.mxu0
        %v4176 = vadd.f32 %v4138, %v479
        %v4177 = vadd.f32 %v4140, %v480
        %v4178 = vadd.f32 %v4142, %v481
        %v4179 = vadd.f32 %v4144, %v482
        %v4180 = vadd.f32 %v4148, %v483
        %v4181 = vadd.f32 %v4150, %v484
        %v4182 = vadd.f32 %v4152, %v485
        %v4183 = vadd.f32 %v4154, %v486
        %v4184 = vadd.f32 %v4158, %v487
        %v4185 = vadd.f32 %v4160, %v488
        %v4186 = vadd.f32 %v4162, %v489
        %v4187 = vadd.f32 %v4164, %v490
        %v4188 = vadd.f32 %v4168, %v491
        %v4189 = vadd.f32 %v4170, %v492
        %v4190 = vadd.f32 %v4172, %v493
        %v4191 = vadd.f32 %v4174, %v494
        %4192 = vst [vmem:[%s476] sm:$0xff] %v4176
        %4193 = vst [vmem:[%s476 + $0x8] sm:$0xff] %v4177
        %4194 = vst [vmem:[%s476 + $0x10] sm:$0xff] %v4178
        %4195 = vst [vmem:[%s476 + $0x18] sm:$0xff] %v4179
        %4196 = vst [vmem:[%s476 + $0x20] sm:$0xff] %v4180
        %4197 = vst [vmem:[%s476 + $0x28] sm:$0xff] %v4181
        %4198 = vst [vmem:[%s476 + $0x30] sm:$0xff] %v4182
        %4199 = vst [vmem:[%s476 + $0x38] sm:$0xff] %v4183
        %4200 = vst [vmem:[%s476 + $0x40] sm:$0xff] %v4184
        %4201 = vst [vmem:[%s476 + $0x48] sm:$0xff] %v4185
        %4202 = vst [vmem:[%s476 + $0x50] sm:$0xff] %v4186
        %4203 = vst [vmem:[%s476 + $0x58] sm:$0xff] %v4187
        %4204 = vst [vmem:[%s476 + $0x60] sm:$0xff] %v4188
        %4205 = vst [vmem:[%s476 + $0x68] sm:$0xff] %v4189
        %4206 = vst [vmem:[%s476 + $0x70] sm:$0xff] %v4190
        %4207 = vst [vmem:[%s476 + $0x78] sm:$0xff] %v4191
        %s4208 = sand.u32 %s296, 1
        %s4209 = scalar_lea.sflag [#allocation4], %s4208
        %s4210 = sand.u32 %s296, 1
        %s4211 = smul.addr %s4210, 128
        %s4212 = scalar_lea.vmem [#allocation10], %s4211
        // Predicated region
        $region85: #{tpu_custom_call.1} parent=67 // pred_check
          %p4213 = pneg %p306
        $region86: #{tpu_custom_call.1} parent=67 // pred_check_branch
          %4215 = sbr.rel (%p4213) target = $region88
        $region87: #{tpu_custom_call.1} parent=67 // pred_region
          %s4216 = smul.u32 4, %s31
          %s4218 = ssub.s32 2048, 2048
          %4219 = vsyncadd %s4209, %s4218
          %s4220 = smul.addr %s4216, 4
          %s4221 = smul.addr %s4220, 128
          %s4222 = scalar_lea.hbm %s12, %s4221
          %s4223 = sshll.u32 %s4212, 4
          %s4224 = int_to_ptr.vmem [resolvable:$true] %s4223
          %4229 = dma.vmem_to_hbm [thread:$0]  %s4224, 2048, %s4222, %s4209, 256, 256, 16
        $region88: #{tpu_custom_call.1} parent=67 // pred_fallthru
          _
      $region68: #{tpu_custom_call.1} parent=5 // pred_fallthru
        _
      %p4230 = scmp.le.s32.totalorder 2, %s26
      // Predicated region
      $region89: #{tpu_custom_call.1} parent=5 // pred_check
        %p4231 = pneg %p4230
      $region90: #{tpu_custom_call.1} parent=5 // pred_check_branch
        %4233 = sbr.rel (%p4231) target = $region92
      $region91: #{tpu_custom_call.1} parent=5 // pred_region
        %s4234 = ssub.s32 %s26, 2
        // Predicated region
        $region93: #{tpu_custom_call.1} parent=91 // pred_check
          %p4235 = pneg %p312
        $region94: #{tpu_custom_call.1} parent=91 // pred_check_branch
          %4237 = sbr.rel (%p4235) target = $region96
        $region95: #{tpu_custom_call.1} parent=91 // pred_region
          %s4238 = sand.u32 %s297, 1
          %s4239 = scalar_lea.sflag [#allocation4], %s4238
          %s4240 = sand.u32 %s297, 1
          %s4241 = smul.addr %s4240, 128
          %s4242 = scalar_lea.vmem [#allocation10], %s4241
          %4243 = dma.done %s4239, 2048
        $region96: #{tpu_custom_call.1} parent=91 // pred_fallthru
          _
      $region92: #{tpu_custom_call.1} parent=5 // pred_fallthru
        _
    $region6: #{tpu_custom_call.1} parent=1 // loop_footer
      %s30 = sadd.s32 1, %s26
    $region7: #{tpu_custom_call.1} parent=1 // loop_footer_branch
      %25 = sbr.rel target = $region3
    $region8: #{tpu_custom_call.1} parent=1 // loop_exit
      _
    %4244 = vsyncpa [#allocation3], 1
    %s4245 = scalar_lea.sflag [#allocation3], 1
    %4246 = vsyncpa %s4245, 1
    %4247 = vsyncpa [#allocation6], 1
    %4248 = vsyncpa [#allocation9], 1
    %4249 = vsyncpa [#allocation4], 1
    %s4250 = scalar_lea.sflag [#allocation4], 1
    %4251 = vsyncpa %s4250, 1

</llo_original>
